<compile_context>
chip_gen: v7x
topology: tpu7x:2x2x1
jax: 0.10.0
libtpu: 0.0.40
codegen_flags: <defaults>
</compile_context>

<pallas_src>
import jax
import jax.numpy as jnp
import numpy as np
from jax.experimental import pallas as pl
from jax.experimental.pallas import tpu as pltpu

DEPTH = 3
IN_FEATURES = 16      # small stand-in for the module default 74
HIDDEN = 32           # small stand-in for the module default 128
OUT_FEATURES = 1
NL = 8                # nodes in left graph
NR = 16               # nodes in right graph
NTOT = NL + NR
BATCH = 8             # graph pairs total per call
NUM_CHUNKS = min(2, BATCH)   # 2 = #TensorCores on v7x; only ~0.35us extra on v5e/v6e
PAIRS = BATCH // NUM_CHUNKS  # graph pairs fused per grid step
PNL = PAIRS * NL             # fused left-node rows per chunk
PNR = PAIRS * NR             # fused right-node rows per chunk
CHUNK_N = PNL + PNR          # total rows per chunk
EPS = 1e-12

assert BATCH % NUM_CHUNKS == 0
assert IN_FEATURES <= HIDDEN          # depth-0 features are zero-padded to HIDDEN


# ---------------- matmul helpers (MXU, f32 accumulate) ----------------
def _dot(a, b):        # a @ b
    return jax.lax.dot_general(a, b, (((1,), (0,)), ((), ())),
                               preferred_element_type=jnp.float32)


def _dot_tB(a, b):     # a @ b.T  (contract trailing axes, no explicit transpose)
    return jax.lax.dot_general(a, b, (((1,), (1,)), ((), ())),
                               preferred_element_type=jnp.float32)


# ------------- Pallas kernel: GMNEq forward for PAIRS fused graph pairs -------------
def gmneq_kernel(x_ref, adjt_ref, mask_ref, maskt_ref, sign_ref,
                 wt0_ref, wb0_ref, b0_ref,
                 wt1_ref, wb1_ref, b1_ref,
                 wt2_ref, wb2_ref, b2_ref,
                 wf1_ref, wf2_ref,
                 out_ref, mu_scr):
    x = x_ref[0]            # (CHUNK_N, HIDDEN)  [all lefts ; all rights], zero-padded feats
    adj_t = adjt_ref[0]     # (CHUNK_N, CHUNK_N) block-diag over all graphs, pre-transposed
    mask = mask_ref[...]    # (PNL, PNR) 1 where left/right node belong to the same pair
    mask_t = maskt_ref[...]  # (PNR, PNL) = mask.T (precomputed in wrapper)
    sign = sign_ref[...]    # (PAIRS, CHUNK_N) +1 on own left rows, -1 on own right rows
    layers = ((wt0_ref, wb0_ref, b0_ref),
              (wt1_ref, wb1_ref, b1_ref),
              (wt2_ref, wb2_ref, b2_ref))

    for idx in range(DEPTH):
        # ---- Attention (cross-graph, per pair via block masking), L2-normalized rows ----
        sq = jnp.sum(x * x, axis=-1, keepdims=True)
        xn = x * jax.lax.rsqrt(jnp.maximum(sq, EPS))     # eps-clamped normalize (EUP rsqrt)
        hl = xn[:PNL]                                    # (PNL, H)  8-row-aligned slice
        hr = xn[PNL:]                                    # (PNR, H)

        a = _dot_tB(hl, hr)          # (PNL, PNR) cosine sims, |a| <= 1
        a_t = _dot_tB(hr, hl)        # (PNR, PNL) == a.T via a second cheap MXU push

        # Per-pair softmaxes through masking: cross-pair entries are zeroed AFTER exp,
        # so the masked column sums are exactly the per-pair denominators.
        # No max-stabilizer needed (logits bounded in [-1, 1]); approx recip on EUP slot.
        ea = jnp.exp(a) * mask
        ea_t = jnp.exp(a_t) * mask_t
        s0 = ea * pl.reciprocal(jnp.sum(ea, axis=0, keepdims=True), approx=True)
        s1t = ea_t * pl.reciprocal(jnp.sum(ea_t, axis=0, keepdims=True), approx=True)

        # mu written straight into a VMEM scratch (row order matches x) — no axis-0 concat
        mu_scr[pl.ds(0, PNL), :] = hl - _dot(s0, hr)     # mu_rl for every pair
        mu_scr[pl.ds(PNL, PNR), :] = hr - _dot(s1t, hl)  # mu_lr for every pair

        # ---- Message passing for ALL graphs: one block-diag A^T @ X matmul ----
        agg = _dot(adj_t, x)                             # (CHUNK_N, H)

        # ---- Shared Linear(concat([agg, mu])) + ReLU as a split matmul, all pairs ----
        wt_r, wb_r, b_r = layers[idx]
        x = jnp.maximum(_dot(agg, wt_r[...]) + _dot(mu_scr[...], wb_r[...]) + b_r[...],
                        0.0)                             # (CHUNK_N, H)

    # ---- per-pair sum_nodes(left) - sum_nodes(right) as one matmul, then MLP head ----
    diff = _dot(sign, x)                                 # (PAIRS, HIDDEN)
    h = jnp.tanh(_dot(diff, wf1_ref[...]))               # Linear(no bias) -> Tanh
    out_ref[0] = _dot(h, wf2_ref[...])                   # (PAIRS, OUT) — single store/step


def gmneq_forward(x_chunks, adjt_chunks, mask, mask_t, sign, p):
    """x_chunks: (C, CHUNK_N, HIDDEN); adjt_chunks: (C, CHUNK_N, CHUNK_N)."""
    C = x_chunks.shape[0]

    def chunk_spec(shape):        # batched operand: one chunk of PAIRS pairs per grid step
        nd = len(shape)
        return pl.BlockSpec((1,) + tuple(shape), lambda c, nd=nd: (c,) + (0,) * nd)

    def shared(arr):              # weights / constants shared across the grid
        nd = arr.ndim
        return pl.BlockSpec(arr.shape, lambda c, nd=nd: (0,) * nd)

    weights = (p["wt0"], p["wb0"], p["b0"],
               p["wt1"], p["wb1"], p["b1"],
               p["wt2"], p["wb2"], p["b2"],
               p["wf1"], p["wf2"])

    grid_spec = pltpu.PrefetchScalarGridSpec(
        num_scalar_prefetch=0,
        grid=(C,),
        in_specs=[chunk_spec((CHUNK_N, HIDDEN)),
                  chunk_spec((CHUNK_N, CHUNK_N)),
                  shared(mask), shared(mask_t), shared(sign)]
                 + [shared(w) for w in weights],
        out_specs=pl.BlockSpec((1, PAIRS, OUT_FEATURES), lambda c: (c, 0, 0)),
        scratch_shapes=[pltpu.VMEM((CHUNK_N, HIDDEN), jnp.float32)],
    )

    out = pl.pallas_call(
        gmneq_kernel,
        out_shape=jax.ShapeDtypeStruct((C, PAIRS, OUT_FEATURES), jnp.float32),
        grid_spec=grid_spec,
        compiler_params=pltpu.CompilerParams(dimension_semantics=("parallel",)),
    )(x_chunks, adjt_chunks, mask, mask_t, sign, *weights)
    return out.reshape(C * PAIRS, OUT_FEATURES)


# ---------------- pure-JAX reference (mirrors PyTorch semantics, per pair) ----------------
def gmneq_reference(xl, xr, al, ar, p):
    layers = ((p["w0"], p["b0"]), (p["w1"], p["b1"]), (p["w2"], p["b2"]))
    for idx in range(DEPTH):
        hl = xl / jnp.sqrt(jnp.maximum(jnp.sum(xl * xl, -1, keepdims=True), EPS))
        hr = xr / jnp.sqrt(jnp.maximum(jnp.sum(xr * xr, -1, keepdims=True), EPS))
        a = hl @ hr.T
        s1 = jax.nn.softmax(a, axis=1)
        s0 = jax.nn.softmax(a, axis=0)
        mu_lr = hr - s1.T @ hl
        mu_rl = hl - s0 @ hr
        xl_agg = al.T @ xl
        xr_agg = ar.T @ xr
        w, b = layers[idx]
        xl = jnp.maximum(jnp.concatenate([xl_agg, mu_rl], -1) @ w + b, 0.0)
        xr = jnp.maximum(jnp.concatenate([xr_agg, mu_lr], -1) @ w + b, 0.0)
    sl = jnp.sum(xl, 0, keepdims=True)
    sr = jnp.sum(xr, 0, keepdims=True)
    return jnp.tanh((sl - sr) @ p["wf1"]) @ p["wf2"]


# ---------------- deterministic parameter / input construction ----------------
def _linear_init(key, fan_in, fan_out):
    kw, kb = jax.random.split(key)
    bound = 1.0 / np.sqrt(fan_in)
    w = jax.random.uniform(kw, (fan_in, fan_out), jnp.float32, -bound, bound)
    b = jax.random.uniform(kb, (1, fan_out), jnp.float32, -bound, bound)
    return w, b


def make_params(key):
    ks = jax.random.split(key, 5)
    w0, b0 = _linear_init(ks[0], 2 * IN_FEATURES, HIDDEN)
    w1, b1 = _linear_init(ks[1], 2 * HIDDEN, HIDDEN)
    w2, b2 = _linear_init(ks[2], 2 * HIDDEN, HIDDEN)
    bound = 1.0 / np.sqrt(HIDDEN)
    wf1 = jax.random.uniform(ks[3], (HIDDEN, HIDDEN), jnp.float32, -bound, bound)
    wf2 = jax.random.uniform(ks[4], (HIDDEN, OUT_FEATURES), jnp.float32, -bound, bound)
    return dict(w0=w0, b0=b0, w1=w1, b1=b1, w2=w2, b2=b2, wf1=wf1, wf2=wf2)


def split_and_pad_params(p):
    """Pre-split each layer weight into the agg / mu halves and zero-pad the depth-0
    halves from IN_FEATURES to HIDDEN rows (matches the zero-padded input columns)."""
    out = dict(p)
    for idx, din in ((0, IN_FEATURES), (1, HIDDEN), (2, HIDDEN)):
        w = p[f"w{idx}"]
        wt, wb = w[:din], w[din:]
        if din < HIDDEN:
            pad = jnp.zeros((HIDDEN - din, HIDDEN), jnp.float32)
            wt = jnp.concatenate([wt, pad], axis=0)
            wb = jnp.concatenate([wb, pad], axis=0)
        out[f"wt{idx}"] = wt
        out[f"wb{idx}"] = wb
    return out


if __name__ == "__main__":
    key = jax.random.PRNGKey(0)
    k_data, k_p = jax.random.split(key)
    params = make_params(k_p)
    kparams = split_and_pad_params(params)

    # Build BATCH independent graph pairs, fused PAIRS-per-chunk, NUM_CHUNKS chunks.
    # TODO(synk): DGL graph objects have no Pallas equivalent; represented as dense
    #             block-diagonal, pre-transposed adjacency matrices built in the wrapper.
    x_chunks = np.zeros((NUM_CHUNKS, CHUNK_N, HIDDEN), np.float32)
    adjt_chunks = np.zeros((NUM_CHUNKS, CHUNK_N, CHUNK_N), np.float32)
    refs = []
    for b, kb in enumerate(jax.random.split(k_data, BATCH)):
        c, pidx = divmod(b, PAIRS)
        k_xl, k_xr, k_al, k_ar = jax.random.split(kb, 4)
        xl = jax.random.normal(k_xl, (NL, IN_FEATURES), jnp.float32)
        xr = jax.random.normal(k_xr, (NR, IN_FEATURES), jnp.float32)
        al = (jax.random.uniform(k_al, (NL, NL)) < 0.4).astype(jnp.float32)
        al = jnp.maximum(al, jnp.eye(NL, dtype=jnp.float32))
        ar = (jax.random.uniform(k_ar, (NR, NR)) < 0.4).astype(jnp.float32)
        ar = jnp.maximum(ar, jnp.eye(NR, dtype=jnp.float32))

        # stacked rows: [all left graphs (pair order) ; all right graphs (pair order)],
        # features zero-padded from IN_FEATURES to HIDDEN (exactly neutral everywhere).
        x_chunks[c, pidx * NL:(pidx + 1) * NL, :IN_FEATURES] = np.asarray(xl)
        x_chunks[c, PNL + pidx * NR:PNL + (pidx + 1) * NR, :IN_FEATURES] = np.asarray(xr)
        adjt_chunks[c, pidx * NL:(pidx + 1) * NL, pidx * NL:(pidx + 1) * NL] = np.asarray(al.T)
        r0 = PNL + pidx * NR
        adjt_chunks[c, r0:r0 + NR, r0:r0 + NR] = np.asarray(ar.T)

        refs.append(gmneq_reference(xl, xr, al, ar, params))

    # pair-block mask for the fused attention and the per-pair sum/difference matrix
    left_pair = np.repeat(np.arange(PAIRS), NL)           # (PNL,)
    right_pair = np.repeat(np.arange(PAIRS), NR)          # (PNR,)
    mask = (left_pair[:, None] == right_pair[None, :]).astype(np.float32)   # (PNL, PNR)
    mask_t = np.ascontiguousarray(mask.T)                                   # (PNR, PNL)

    sign = np.zeros((PAIRS, CHUNK_N), np.float32)
    for pidx in range(PAIRS):
        sign[pidx, pidx * NL:(pidx + 1) * NL] = 1.0
        sign[pidx, PNL + pidx * NR:PNL + (pidx + 1) * NR] = -1.0

    out = gmneq_forward(jnp.asarray(x_chunks), jnp.asarray(adjt_chunks),
                        jnp.asarray(mask), jnp.asarray(mask_t), jnp.asarray(sign),
                        kparams)
    out = jax.block_until_ready(out)                     # (BATCH, OUT)

    ref = jax.block_until_ready(jnp.concatenate(refs, axis=0))   # (BATCH, OUT)
    np.testing.assert_allclose(np.asarray(out), np.asarray(ref), rtol=2e-2, atol=2e-3)

    print("KERNEL_OK")
</pallas_src>

<mosaic_0001>
module attributes {stable_mosaic.version = 11 : i64} {
  func.func @gmneq_kernel(%arg0: i32, %arg1: memref<1x96x32xf32, #tpu.memory_space<vmem>>, %arg2: memref<1x96x96xf32, #tpu.memory_space<vmem>>, %arg3: memref<32x64xf32, #tpu.memory_space<vmem>>, %arg4: memref<64x32xf32, #tpu.memory_space<vmem>>, %arg5: memref<4x96xf32, #tpu.memory_space<vmem>>, %arg6: memref<32x32xf32, #tpu.memory_space<vmem>>, %arg7: memref<32x32xf32, #tpu.memory_space<vmem>>, %arg8: memref<1x32xf32, #tpu.memory_space<vmem>>, %arg9: memref<32x32xf32, #tpu.memory_space<vmem>>, %arg10: memref<32x32xf32, #tpu.memory_space<vmem>>, %arg11: memref<1x32xf32, #tpu.memory_space<vmem>>, %arg12: memref<32x32xf32, #tpu.memory_space<vmem>>, %arg13: memref<32x32xf32, #tpu.memory_space<vmem>>, %arg14: memref<1x32xf32, #tpu.memory_space<vmem>>, %arg15: memref<32x32xf32, #tpu.memory_space<vmem>>, %arg16: memref<32x1xf32, #tpu.memory_space<vmem>>, %arg17: memref<1x4x1xf32, #tpu.memory_space<vmem>>, %arg18: memref<96x32xf32, #tpu.memory_space<vmem>>) attributes {dimension_semantics = [#tpu.dimension_semantics<parallel>], iteration_bounds = array<i64: 2>, scalar_prefetch = 0 : i64, scratch_operands = 1 : i64, tpu.core_type = #tpu.core_type<tc>, window_params = [{transform_indices = @transform_0, window_bounds = array<i64: 1, 96, 32>}, {transform_indices = @transform_1, window_bounds = array<i64: 1, 96, 96>}, {pipeline_mode = #tpu.pipeline_mode<synchronous>, transform_indices = @transform_2, window_bounds = array<i64: 32, 64>}, {pipeline_mode = #tpu.pipeline_mode<synchronous>, transform_indices = @transform_3, window_bounds = array<i64: 64, 32>}, {pipeline_mode = #tpu.pipeline_mode<synchronous>, transform_indices = @transform_4, window_bounds = array<i64: 4, 96>}, {pipeline_mode = #tpu.pipeline_mode<synchronous>, transform_indices = @transform_5, window_bounds = array<i64: 32, 32>}, {pipeline_mode = #tpu.pipeline_mode<synchronous>, transform_indices = @transform_6, window_bounds = array<i64: 32, 32>}, {pipeline_mode = #tpu.pipeline_mode<synchronous>, transform_indices = @transform_7, window_bounds = array<i64: 1, 32>}, {pipeline_mode = #tpu.pipeline_mode<synchronous>, transform_indices = @transform_8, window_bounds = array<i64: 32, 32>}, {pipeline_mode = #tpu.pipeline_mode<synchronous>, transform_indices = @transform_9, window_bounds = array<i64: 32, 32>}, {pipeline_mode = #tpu.pipeline_mode<synchronous>, transform_indices = @transform_10, window_bounds = array<i64: 1, 32>}, {pipeline_mode = #tpu.pipeline_mode<synchronous>, transform_indices = @transform_11, window_bounds = array<i64: 32, 32>}, {pipeline_mode = #tpu.pipeline_mode<synchronous>, transform_indices = @transform_12, window_bounds = array<i64: 32, 32>}, {pipeline_mode = #tpu.pipeline_mode<synchronous>, transform_indices = @transform_13, window_bounds = array<i64: 1, 32>}, {pipeline_mode = #tpu.pipeline_mode<synchronous>, transform_indices = @transform_14, window_bounds = array<i64: 32, 32>}, {pipeline_mode = #tpu.pipeline_mode<synchronous>, transform_indices = @transform_15, window_bounds = array<i64: 32, 1>}, {transform_indices = @transform_16, window_bounds = array<i64: 1, 4, 1>}]} {
    %c0 = arith.constant 0 : index
    %c0_0 = arith.constant 0 : index
    %c0_1 = arith.constant 0 : index
    %0 = vector.load %arg1[%c0, %c0_0, %c0_1] : memref<1x96x32xf32, #tpu.memory_space<vmem>>, vector<1x96x32xf32>
    %1 = vector.shape_cast %0 : vector<1x96x32xf32> to vector<96x32xf32>
    %c0_2 = arith.constant 0 : index
    %c0_3 = arith.constant 0 : index
    %c0_4 = arith.constant 0 : index
    %2 = vector.load %arg2[%c0_2, %c0_3, %c0_4] : memref<1x96x96xf32, #tpu.memory_space<vmem>>, vector<1x96x96xf32>
    %3 = vector.shape_cast %2 : vector<1x96x96xf32> to vector<96x96xf32>
    %c0_5 = arith.constant 0 : index
    %c0_6 = arith.constant 0 : index
    %4 = vector.load %arg3[%c0_5, %c0_6] : memref<32x64xf32, #tpu.memory_space<vmem>>, vector<32x64xf32>
    %c0_7 = arith.constant 0 : index
    %c0_8 = arith.constant 0 : index
    %5 = vector.load %arg4[%c0_7, %c0_8] : memref<64x32xf32, #tpu.memory_space<vmem>>, vector<64x32xf32>
    %c0_9 = arith.constant 0 : index
    %c0_10 = arith.constant 0 : index
    %6 = vector.load %arg5[%c0_9, %c0_10] : memref<4x96xf32, #tpu.memory_space<vmem>>, vector<4x96xf32>
    %7 = arith.mulf %1, %1 : vector<96x32xf32>
    %cst = arith.constant dense<0.000000e+00> : vector<96xf32>
    %8 = vector.multi_reduction <add>, %7, %cst [1] : vector<96x32xf32> to vector<96xf32>
    %9 = vector.shape_cast %8 : vector<96xf32> to vector<96x1xf32>
    %cst_11 = arith.constant 9.99999996E-13 : f32
    %10 = vector.broadcast %cst_11 : f32 to vector<96x1xf32>
    %11 = arith.maximumf %9, %10 : vector<96x1xf32>
    %12 = math.rsqrt %11 : vector<96x1xf32>
    %13 = vector.broadcast %12 : vector<96x1xf32> to vector<96x32xf32>
    %14 = arith.mulf %1, %13 : vector<96x32xf32>
    %15 = vector.extract_strided_slice %14 {offsets = [0, 0], sizes = [32, 32], strides = [1, 1]} : vector<96x32xf32> to vector<32x32xf32>
    %16 = vector.extract_strided_slice %14 {offsets = [32, 0], sizes = [64, 32], strides = [1, 1]} : vector<96x32xf32> to vector<64x32xf32>
    %cst_12 = arith.constant dense<0.000000e+00> : vector<32x64xf32>
    %17 = tpu.matmul %15, %16, %cst_12 {dimension_numbers = #tpu.dot_dimension_numbers<[1], [1], [0], [0], [0, 0, 1, 0], [], []>} : vector<32x32xf32>, vector<64x32xf32>, vector<32x64xf32> -> vector<32x64xf32>
    %cst_13 = arith.constant dense<0.000000e+00> : vector<64x32xf32>
    %18 = tpu.matmul %16, %15, %cst_13 {dimension_numbers = #tpu.dot_dimension_numbers<[1], [1], [0], [0], [0, 0, 1, 0], [], []>} : vector<64x32xf32>, vector<32x32xf32>, vector<64x32xf32> -> vector<64x32xf32>
    %19 = math.exp %17 : vector<32x64xf32>
    %20 = arith.mulf %19, %4 : vector<32x64xf32>
    %21 = math.exp %18 : vector<64x32xf32>
    %22 = arith.mulf %21, %5 : vector<64x32xf32>
    %cst_14 = arith.constant dense<0.000000e+00> : vector<64xf32>
    %23 = vector.multi_reduction <add>, %20, %cst_14 [0] : vector<32x64xf32> to vector<64xf32>
    %24 = vector.shape_cast %23 : vector<64xf32> to vector<1x64xf32>
    %25 = tpu.reciprocal %24 {approx = true} : vector<1x64xf32> -> vector<1x64xf32>
    %26 = vector.broadcast %25 : vector<1x64xf32> to vector<32x64xf32>
    %27 = arith.mulf %20, %26 : vector<32x64xf32>
    %cst_15 = arith.constant dense<0.000000e+00> : vector<32xf32>
    %28 = vector.multi_reduction <add>, %22, %cst_15 [0] : vector<64x32xf32> to vector<32xf32>
    %29 = vector.shape_cast %28 : vector<32xf32> to vector<1x32xf32>
    %30 = tpu.reciprocal %29 {approx = true} : vector<1x32xf32> -> vector<1x32xf32>
    %31 = vector.broadcast %30 : vector<1x32xf32> to vector<64x32xf32>
    %32 = arith.mulf %22, %31 : vector<64x32xf32>
    %cst_16 = arith.constant dense<0.000000e+00> : vector<32x32xf32>
    %33 = tpu.matmul %27, %16, %cst_16 {dimension_numbers = #tpu.dot_dimension_numbers<[1], [0], [0], [1], [0, 0, 1, 1], [], []>} : vector<32x64xf32>, vector<64x32xf32>, vector<32x32xf32> -> vector<32x32xf32>
    %34 = arith.subf %15, %33 : vector<32x32xf32>
    %c0_17 = arith.constant 0 : index
    %c0_18 = arith.constant 0 : index
    %35 = vector.load %arg18[%c0_17, %c0_18] : memref<96x32xf32, #tpu.memory_space<vmem>>, vector<32x32xf32>
    tpu.vector_store %arg18[%c0_17, %c0_18], %34 {strides = array<i32>} : memref<96x32xf32, #tpu.memory_space<vmem>>, vector<32x32xf32>,
    %cst_19 = arith.constant dense<0.000000e+00> : vector<64x32xf32>
    %36 = tpu.matmul %32, %15, %cst_19 {dimension_numbers = #tpu.dot_dimension_numbers<[1], [0], [0], [1], [0, 0, 1, 1], [], []>} : vector<64x32xf32>, vector<32x32xf32>, vector<64x32xf32> -> vector<64x32xf32>
    %37 = arith.subf %16, %36 : vector<64x32xf32>
    %c32 = arith.constant 32 : index
    %c0_20 = arith.constant 0 : index
    %38 = vector.load %arg18[%c32, %c0_20] : memref<96x32xf32, #tpu.memory_space<vmem>>, vector<64x32xf32>
    tpu.vector_store %arg18[%c32, %c0_20], %37 {strides = array<i32>} : memref<96x32xf32, #tpu.memory_space<vmem>>, vector<64x32xf32>,
    %cst_21 = arith.constant dense<0.000000e+00> : vector<96x32xf32>
    %39 = tpu.matmul %3, %1, %cst_21 {dimension_numbers = #tpu.dot_dimension_numbers<[1], [0], [0], [1], [0, 0, 1, 1], [], []>} : vector<96x96xf32>, vector<96x32xf32>, vector<96x32xf32> -> vector<96x32xf32>
    %c0_22 = arith.constant 0 : index
    %c0_23 = arith.constant 0 : index
    %40 = vector.load %arg6[%c0_22, %c0_23] : memref<32x32xf32, #tpu.memory_space<vmem>>, vector<32x32xf32>
    %cst_24 = arith.constant dense<0.000000e+00> : vector<96x32xf32>
    %41 = tpu.matmul %39, %40, %cst_24 {dimension_numbers = #tpu.dot_dimension_numbers<[1], [0], [0], [1], [0, 0, 1, 1], [], []>} : vector<96x32xf32>, vector<32x32xf32>, vector<96x32xf32> -> vector<96x32xf32>
    %c0_25 = arith.constant 0 : index
    %c0_26 = arith.constant 0 : index
    %42 = vector.load %arg18[%c0_25, %c0_26] : memref<96x32xf32, #tpu.memory_space<vmem>>, vector<96x32xf32>
    %c0_27 = arith.constant 0 : index
    %c0_28 = arith.constant 0 : index
    %43 = vector.load %arg7[%c0_27, %c0_28] : memref<32x32xf32, #tpu.memory_space<vmem>>, vector<32x32xf32>
    %cst_29 = arith.constant dense<0.000000e+00> : vector<96x32xf32>
    %44 = tpu.matmul %42, %43, %cst_29 {dimension_numbers = #tpu.dot_dimension_numbers<[1], [0], [0], [1], [0, 0, 1, 1], [], []>} : vector<96x32xf32>, vector<32x32xf32>, vector<96x32xf32> -> vector<96x32xf32>
    %45 = arith.addf %41, %44 : vector<96x32xf32>
    %c0_30 = arith.constant 0 : index
    %c0_31 = arith.constant 0 : index
    %46 = vector.load %arg8[%c0_30, %c0_31] : memref<1x32xf32, #tpu.memory_space<vmem>>, vector<1x32xf32>
    %47 = vector.broadcast %46 : vector<1x32xf32> to vector<96x32xf32>
    %48 = arith.addf %45, %47 : vector<96x32xf32>
    %cst_32 = arith.constant 0.000000e+00 : f32
    %49 = vector.broadcast %cst_32 : f32 to vector<96x32xf32>
    %50 = arith.maximumf %48, %49 : vector<96x32xf32>
    %51 = arith.mulf %50, %50 : vector<96x32xf32>
    %cst_33 = arith.constant dense<0.000000e+00> : vector<96xf32>
    %52 = vector.multi_reduction <add>, %51, %cst_33 [1] : vector<96x32xf32> to vector<96xf32>
    %53 = vector.shape_cast %52 : vector<96xf32> to vector<96x1xf32>
    %cst_34 = arith.constant 9.99999996E-13 : f32
    %54 = vector.broadcast %cst_34 : f32 to vector<96x1xf32>
    %55 = arith.maximumf %53, %54 : vector<96x1xf32>
    %56 = math.rsqrt %55 : vector<96x1xf32>
    %57 = vector.broadcast %56 : vector<96x1xf32> to vector<96x32xf32>
    %58 = arith.mulf %50, %57 : vector<96x32xf32>
    %59 = vector.extract_strided_slice %58 {offsets = [0, 0], sizes = [32, 32], strides = [1, 1]} : vector<96x32xf32> to vector<32x32xf32>
    %60 = vector.extract_strided_slice %58 {offsets = [32, 0], sizes = [64, 32], strides = [1, 1]} : vector<96x32xf32> to vector<64x32xf32>
    %cst_35 = arith.constant dense<0.000000e+00> : vector<32x64xf32>
    %61 = tpu.matmul %59, %60, %cst_35 {dimension_numbers = #tpu.dot_dimension_numbers<[1], [1], [0], [0], [0, 0, 1, 0], [], []>} : vector<32x32xf32>, vector<64x32xf32>, vector<32x64xf32> -> vector<32x64xf32>
    %cst_36 = arith.constant dense<0.000000e+00> : vector<64x32xf32>
    %62 = tpu.matmul %60, %59, %cst_36 {dimension_numbers = #tpu.dot_dimension_numbers<[1], [1], [0], [0], [0, 0, 1, 0], [], []>} : vector<64x32xf32>, vector<32x32xf32>, vector<64x32xf32> -> vector<64x32xf32>
    %63 = math.exp %61 : vector<32x64xf32>
    %64 = arith.mulf %63, %4 : vector<32x64xf32>
    %65 = math.exp %62 : vector<64x32xf32>
    %66 = arith.mulf %65, %5 : vector<64x32xf32>
    %cst_37 = arith.constant dense<0.000000e+00> : vector<64xf32>
    %67 = vector.multi_reduction <add>, %64, %cst_37 [0] : vector<32x64xf32> to vector<64xf32>
    %68 = vector.shape_cast %67 : vector<64xf32> to vector<1x64xf32>
    %69 = tpu.reciprocal %68 {approx = true} : vector<1x64xf32> -> vector<1x64xf32>
    %70 = vector.broadcast %69 : vector<1x64xf32> to vector<32x64xf32>
    %71 = arith.mulf %64, %70 : vector<32x64xf32>
    %cst_38 = arith.constant dense<0.000000e+00> : vector<32xf32>
    %72 = vector.multi_reduction <add>, %66, %cst_38 [0] : vector<64x32xf32> to vector<32xf32>
    %73 = vector.shape_cast %72 : vector<32xf32> to vector<1x32xf32>
    %74 = tpu.reciprocal %73 {approx = true} : vector<1x32xf32> -> vector<1x32xf32>
    %75 = vector.broadcast %74 : vector<1x32xf32> to vector<64x32xf32>
    %76 = arith.mulf %66, %75 : vector<64x32xf32>
    %cst_39 = arith.constant dense<0.000000e+00> : vector<32x32xf32>
    %77 = tpu.matmul %71, %60, %cst_39 {dimension_numbers = #tpu.dot_dimension_numbers<[1], [0], [0], [1], [0, 0, 1, 1], [], []>} : vector<32x64xf32>, vector<64x32xf32>, vector<32x32xf32> -> vector<32x32xf32>
    %78 = arith.subf %59, %77 : vector<32x32xf32>
    %c0_40 = arith.constant 0 : index
    %c0_41 = arith.constant 0 : index
    %79 = vector.load %arg18[%c0_40, %c0_41] : memref<96x32xf32, #tpu.memory_space<vmem>>, vector<32x32xf32>
    tpu.vector_store %arg18[%c0_40, %c0_41], %78 {strides = array<i32>} : memref<96x32xf32, #tpu.memory_space<vmem>>, vector<32x32xf32>,
    %cst_42 = arith.constant dense<0.000000e+00> : vector<64x32xf32>
    %80 = tpu.matmul %76, %59, %cst_42 {dimension_numbers = #tpu.dot_dimension_numbers<[1], [0], [0], [1], [0, 0, 1, 1], [], []>} : vector<64x32xf32>, vector<32x32xf32>, vector<64x32xf32> -> vector<64x32xf32>
    %81 = arith.subf %60, %80 : vector<64x32xf32>
    %c32_43 = arith.constant 32 : index
    %c0_44 = arith.constant 0 : index
    %82 = vector.load %arg18[%c32_43, %c0_44] : memref<96x32xf32, #tpu.memory_space<vmem>>, vector<64x32xf32>
    tpu.vector_store %arg18[%c32_43, %c0_44], %81 {strides = array<i32>} : memref<96x32xf32, #tpu.memory_space<vmem>>, vector<64x32xf32>,
    %cst_45 = arith.constant dense<0.000000e+00> : vector<96x32xf32>
    %83 = tpu.matmul %3, %50, %cst_45 {dimension_numbers = #tpu.dot_dimension_numbers<[1], [0], [0], [1], [0, 0, 1, 1], [], []>} : vector<96x96xf32>, vector<96x32xf32>, vector<96x32xf32> -> vector<96x32xf32>
    %c0_46 = arith.constant 0 : index
    %c0_47 = arith.constant 0 : index
    %84 = vector.load %arg9[%c0_46, %c0_47] : memref<32x32xf32, #tpu.memory_space<vmem>>, vector<32x32xf32>
    %cst_48 = arith.constant dense<0.000000e+00> : vector<96x32xf32>
    %85 = tpu.matmul %83, %84, %cst_48 {dimension_numbers = #tpu.dot_dimension_numbers<[1], [0], [0], [1], [0, 0, 1, 1], [], []>} : vector<96x32xf32>, vector<32x32xf32>, vector<96x32xf32> -> vector<96x32xf32>
    %c0_49 = arith.constant 0 : index
    %c0_50 = arith.constant 0 : index
    %86 = vector.load %arg18[%c0_49, %c0_50] : memref<96x32xf32, #tpu.memory_space<vmem>>, vector<96x32xf32>
    %c0_51 = arith.constant 0 : index
    %c0_52 = arith.constant 0 : index
    %87 = vector.load %arg10[%c0_51, %c0_52] : memref<32x32xf32, #tpu.memory_space<vmem>>, vector<32x32xf32>
    %cst_53 = arith.constant dense<0.000000e+00> : vector<96x32xf32>
    %88 = tpu.matmul %86, %87, %cst_53 {dimension_numbers = #tpu.dot_dimension_numbers<[1], [0], [0], [1], [0, 0, 1, 1], [], []>} : vector<96x32xf32>, vector<32x32xf32>, vector<96x32xf32> -> vector<96x32xf32>
    %89 = arith.addf %85, %88 : vector<96x32xf32>
    %c0_54 = arith.constant 0 : index
    %c0_55 = arith.constant 0 : index
    %90 = vector.load %arg11[%c0_54, %c0_55] : memref<1x32xf32, #tpu.memory_space<vmem>>, vector<1x32xf32>
    %91 = vector.broadcast %90 : vector<1x32xf32> to vector<96x32xf32>
    %92 = arith.addf %89, %91 : vector<96x32xf32>
    %cst_56 = arith.constant 0.000000e+00 : f32
    %93 = vector.broadcast %cst_56 : f32 to vector<96x32xf32>
    %94 = arith.maximumf %92, %93 : vector<96x32xf32>
    %95 = arith.mulf %94, %94 : vector<96x32xf32>
    %cst_57 = arith.constant dense<0.000000e+00> : vector<96xf32>
    %96 = vector.multi_reduction <add>, %95, %cst_57 [1] : vector<96x32xf32> to vector<96xf32>
    %97 = vector.shape_cast %96 : vector<96xf32> to vector<96x1xf32>
    %cst_58 = arith.constant 9.99999996E-13 : f32
    %98 = vector.broadcast %cst_58 : f32 to vector<96x1xf32>
    %99 = arith.maximumf %97, %98 : vector<96x1xf32>
    %100 = math.rsqrt %99 : vector<96x1xf32>
    %101 = vector.broadcast %100 : vector<96x1xf32> to vector<96x32xf32>
    %102 = arith.mulf %94, %101 : vector<96x32xf32>
    %103 = vector.extract_strided_slice %102 {offsets = [0, 0], sizes = [32, 32], strides = [1, 1]} : vector<96x32xf32> to vector<32x32xf32>
    %104 = vector.extract_strided_slice %102 {offsets = [32, 0], sizes = [64, 32], strides = [1, 1]} : vector<96x32xf32> to vector<64x32xf32>
    %cst_59 = arith.constant dense<0.000000e+00> : vector<32x64xf32>
    %105 = tpu.matmul %103, %104, %cst_59 {dimension_numbers = #tpu.dot_dimension_numbers<[1], [1], [0], [0], [0, 0, 1, 0], [], []>} : vector<32x32xf32>, vector<64x32xf32>, vector<32x64xf32> -> vector<32x64xf32>
    %cst_60 = arith.constant dense<0.000000e+00> : vector<64x32xf32>
    %106 = tpu.matmul %104, %103, %cst_60 {dimension_numbers = #tpu.dot_dimension_numbers<[1], [1], [0], [0], [0, 0, 1, 0], [], []>} : vector<64x32xf32>, vector<32x32xf32>, vector<64x32xf32> -> vector<64x32xf32>
    %107 = math.exp %105 : vector<32x64xf32>
    %108 = arith.mulf %107, %4 : vector<32x64xf32>
    %109 = math.exp %106 : vector<64x32xf32>
    %110 = arith.mulf %109, %5 : vector<64x32xf32>
    %cst_61 = arith.constant dense<0.000000e+00> : vector<64xf32>
    %111 = vector.multi_reduction <add>, %108, %cst_61 [0] : vector<32x64xf32> to vector<64xf32>
    %112 = vector.shape_cast %111 : vector<64xf32> to vector<1x64xf32>
    %113 = tpu.reciprocal %112 {approx = true} : vector<1x64xf32> -> vector<1x64xf32>
    %114 = vector.broadcast %113 : vector<1x64xf32> to vector<32x64xf32>
    %115 = arith.mulf %108, %114 : vector<32x64xf32>
    %cst_62 = arith.constant dense<0.000000e+00> : vector<32xf32>
    %116 = vector.multi_reduction <add>, %110, %cst_62 [0] : vector<64x32xf32> to vector<32xf32>
    %117 = vector.shape_cast %116 : vector<32xf32> to vector<1x32xf32>
    %118 = tpu.reciprocal %117 {approx = true} : vector<1x32xf32> -> vector<1x32xf32>
    %119 = vector.broadcast %118 : vector<1x32xf32> to vector<64x32xf32>
    %120 = arith.mulf %110, %119 : vector<64x32xf32>
    %cst_63 = arith.constant dense<0.000000e+00> : vector<32x32xf32>
    %121 = tpu.matmul %115, %104, %cst_63 {dimension_numbers = #tpu.dot_dimension_numbers<[1], [0], [0], [1], [0, 0, 1, 1], [], []>} : vector<32x64xf32>, vector<64x32xf32>, vector<32x32xf32> -> vector<32x32xf32>
    %122 = arith.subf %103, %121 : vector<32x32xf32>
    %c0_64 = arith.constant 0 : index
    %c0_65 = arith.constant 0 : index
    %123 = vector.load %arg18[%c0_64, %c0_65] : memref<96x32xf32, #tpu.memory_space<vmem>>, vector<32x32xf32>
    tpu.vector_store %arg18[%c0_64, %c0_65], %122 {strides = array<i32>} : memref<96x32xf32, #tpu.memory_space<vmem>>, vector<32x32xf32>,
    %cst_66 = arith.constant dense<0.000000e+00> : vector<64x32xf32>
    %124 = tpu.matmul %120, %103, %cst_66 {dimension_numbers = #tpu.dot_dimension_numbers<[1], [0], [0], [1], [0, 0, 1, 1], [], []>} : vector<64x32xf32>, vector<32x32xf32>, vector<64x32xf32> -> vector<64x32xf32>
    %125 = arith.subf %104, %124 : vector<64x32xf32>
    %c32_67 = arith.constant 32 : index
    %c0_68 = arith.constant 0 : index
    %126 = vector.load %arg18[%c32_67, %c0_68] : memref<96x32xf32, #tpu.memory_space<vmem>>, vector<64x32xf32>
    tpu.vector_store %arg18[%c32_67, %c0_68], %125 {strides = array<i32>} : memref<96x32xf32, #tpu.memory_space<vmem>>, vector<64x32xf32>,
    %cst_69 = arith.constant dense<0.000000e+00> : vector<96x32xf32>
    %127 = tpu.matmul %3, %94, %cst_69 {dimension_numbers = #tpu.dot_dimension_numbers<[1], [0], [0], [1], [0, 0, 1, 1], [], []>} : vector<96x96xf32>, vector<96x32xf32>, vector<96x32xf32> -> vector<96x32xf32>
    %c0_70 = arith.constant 0 : index
    %c0_71 = arith.constant 0 : index
    %128 = vector.load %arg12[%c0_70, %c0_71] : memref<32x32xf32, #tpu.memory_space<vmem>>, vector<32x32xf32>
    %cst_72 = arith.constant dense<0.000000e+00> : vector<96x32xf32>
    %129 = tpu.matmul %127, %128, %cst_72 {dimension_numbers = #tpu.dot_dimension_numbers<[1], [0], [0], [1], [0, 0, 1, 1], [], []>} : vector<96x32xf32>, vector<32x32xf32>, vector<96x32xf32> -> vector<96x32xf32>
    %c0_73 = arith.constant 0 : index
    %c0_74 = arith.constant 0 : index
    %130 = vector.load %arg18[%c0_73, %c0_74] : memref<96x32xf32, #tpu.memory_space<vmem>>, vector<96x32xf32>
    %c0_75 = arith.constant 0 : index
    %c0_76 = arith.constant 0 : index
    %131 = vector.load %arg13[%c0_75, %c0_76] : memref<32x32xf32, #tpu.memory_space<vmem>>, vector<32x32xf32>
    %cst_77 = arith.constant dense<0.000000e+00> : vector<96x32xf32>
    %132 = tpu.matmul %130, %131, %cst_77 {dimension_numbers = #tpu.dot_dimension_numbers<[1], [0], [0], [1], [0, 0, 1, 1], [], []>} : vector<96x32xf32>, vector<32x32xf32>, vector<96x32xf32> -> vector<96x32xf32>
    %133 = arith.addf %129, %132 : vector<96x32xf32>
    %c0_78 = arith.constant 0 : index
    %c0_79 = arith.constant 0 : index
    %134 = vector.load %arg14[%c0_78, %c0_79] : memref<1x32xf32, #tpu.memory_space<vmem>>, vector<1x32xf32>
    %135 = vector.broadcast %134 : vector<1x32xf32> to vector<96x32xf32>
    %136 = arith.addf %133, %135 : vector<96x32xf32>
    %cst_80 = arith.constant 0.000000e+00 : f32
    %137 = vector.broadcast %cst_80 : f32 to vector<96x32xf32>
    %138 = arith.maximumf %136, %137 : vector<96x32xf32>
    %cst_81 = arith.constant dense<0.000000e+00> : vector<4x32xf32>
    %139 = tpu.matmul %6, %138, %cst_81 {dimension_numbers = #tpu.dot_dimension_numbers<[1], [0], [0], [1], [0, 0, 1, 1], [], []>} : vector<4x96xf32>, vector<96x32xf32>, vector<4x32xf32> -> vector<4x32xf32>
    %c0_82 = arith.constant 0 : index
    %c0_83 = arith.constant 0 : index
    %140 = vector.load %arg15[%c0_82, %c0_83] : memref<32x32xf32, #tpu.memory_space<vmem>>, vector<32x32xf32>
    %cst_84 = arith.constant dense<0.000000e+00> : vector<4x32xf32>
    %141 = tpu.matmul %139, %140, %cst_84 {dimension_numbers = #tpu.dot_dimension_numbers<[1], [0], [0], [1], [0, 0, 1, 1], [], []>} : vector<4x32xf32>, vector<32x32xf32>, vector<4x32xf32> -> vector<4x32xf32>
    %142 = math.tanh %141 : vector<4x32xf32>
    %c0_85 = arith.constant 0 : index
    %c0_86 = arith.constant 0 : index
    %143 = vector.load %arg16[%c0_85, %c0_86] : memref<32x1xf32, #tpu.memory_space<vmem>>, vector<32x1xf32>
    %cst_87 = arith.constant dense<0.000000e+00> : vector<4x1xf32>
    %144 = tpu.matmul %142, %143, %cst_87 {dimension_numbers = #tpu.dot_dimension_numbers<[1], [0], [0], [1], [0, 0, 1, 1], [], []>} : vector<4x32xf32>, vector<32x1xf32>, vector<4x1xf32> -> vector<4x1xf32>
    %c0_88 = arith.constant 0 : index
    %c0_89 = arith.constant 0 : index
    %c0_90 = arith.constant 0 : index
    %145 = vector.load %arg17[%c0_88, %c0_89, %c0_90] : memref<1x4x1xf32, #tpu.memory_space<vmem>>, vector<1x4x1xf32>
    %146 = vector.shape_cast %145 : vector<1x4x1xf32> to vector<4x1xf32>
    %147 = vector.shape_cast %144 : vector<4x1xf32> to vector<1x4x1xf32>
    tpu.vector_store %arg17[%c0_88, %c0_89, %c0_90], %147 {strides = array<i32>} : memref<1x4x1xf32, #tpu.memory_space<vmem>>, vector<1x4x1xf32>,
    return
  }
  func.func @transform_0(%arg0: i32) -> (i32, i32, i32) {
    %c0_i32 = arith.constant 0 : i32
    %c0_i32_0 = arith.constant 0 : i32
    %c0_i32_1 = arith.constant 0 : i32
    return %arg0, %c0_i32, %c0_i32_0 : i32, i32, i32
  }
  func.func @transform_1(%arg0: i32) -> (i32, i32, i32) {
    %c0_i32 = arith.constant 0 : i32
    %c0_i32_0 = arith.constant 0 : i32
    %c0_i32_1 = arith.constant 0 : i32
    return %arg0, %c0_i32, %c0_i32_0 : i32, i32, i32
  }
  func.func @transform_2(%arg0: i32) -> (i32, i32) {
    %c0_i32 = arith.constant 0 : i32
    %c0_i32_0 = arith.constant 0 : i32
    %c0_i32_1 = arith.constant 0 : i32
    return %c0_i32, %c0_i32_0 : i32, i32
  }
  func.func @transform_3(%arg0: i32) -> (i32, i32) {
    %c0_i32 = arith.constant 0 : i32
    %c0_i32_0 = arith.constant 0 : i32
    %c0_i32_1 = arith.constant 0 : i32
    return %c0_i32, %c0_i32_0 : i32, i32
  }
  func.func @transform_4(%arg0: i32) -> (i32, i32) {
    %c0_i32 = arith.constant 0 : i32
    %c0_i32_0 = arith.constant 0 : i32
    %c0_i32_1 = arith.constant 0 : i32
    return %c0_i32, %c0_i32_0 : i32, i32
  }
  func.func @transform_5(%arg0: i32) -> (i32, i32) {
    %c0_i32 = arith.constant 0 : i32
    %c0_i32_0 = arith.constant 0 : i32
    %c0_i32_1 = arith.constant 0 : i32
    return %c0_i32, %c0_i32_0 : i32, i32
  }
  func.func @transform_6(%arg0: i32) -> (i32, i32) {
    %c0_i32 = arith.constant 0 : i32
    %c0_i32_0 = arith.constant 0 : i32
    %c0_i32_1 = arith.constant 0 : i32
    return %c0_i32, %c0_i32_0 : i32, i32
  }
  func.func @transform_7(%arg0: i32) -> (i32, i32) {
    %c0_i32 = arith.constant 0 : i32
    %c0_i32_0 = arith.constant 0 : i32
    %c0_i32_1 = arith.constant 0 : i32
    return %c0_i32, %c0_i32_0 : i32, i32
  }
  func.func @transform_8(%arg0: i32) -> (i32, i32) {
    %c0_i32 = arith.constant 0 : i32
    %c0_i32_0 = arith.constant 0 : i32
    %c0_i32_1 = arith.constant 0 : i32
    return %c0_i32, %c0_i32_0 : i32, i32
  }
  func.func @transform_9(%arg0: i32) -> (i32, i32) {
    %c0_i32 = arith.constant 0 : i32
    %c0_i32_0 = arith.constant 0 : i32
    %c0_i32_1 = arith.constant 0 : i32
    return %c0_i32, %c0_i32_0 : i32, i32
  }
  func.func @transform_10(%arg0: i32) -> (i32, i32) {
    %c0_i32 = arith.constant 0 : i32
    %c0_i32_0 = arith.constant 0 : i32
    %c0_i32_1 = arith.constant 0 : i32
    return %c0_i32, %c0_i32_0 : i32, i32
  }
  func.func @transform_11(%arg0: i32) -> (i32, i32) {
    %c0_i32 = arith.constant 0 : i32
    %c0_i32_0 = arith.constant 0 : i32
    %c0_i32_1 = arith.constant 0 : i32
    return %c0_i32, %c0_i32_0 : i32, i32
  }
  func.func @transform_12(%arg0: i32) -> (i32, i32) {
    %c0_i32 = arith.constant 0 : i32
    %c0_i32_0 = arith.constant 0 : i32
    %c0_i32_1 = arith.constant 0 : i32
    return %c0_i32, %c0_i32_0 : i32, i32
  }
  func.func @transform_13(%arg0: i32) -> (i32, i32) {
    %c0_i32 = arith.constant 0 : i32
    %c0_i32_0 = arith.constant 0 : i32
    %c0_i32_1 = arith.constant 0 : i32
    return %c0_i32, %c0_i32_0 : i32, i32
  }
  func.func @transform_14(%arg0: i32) -> (i32, i32) {
    %c0_i32 = arith.constant 0 : i32
    %c0_i32_0 = arith.constant 0 : i32
    %c0_i32_1 = arith.constant 0 : i32
    return %c0_i32, %c0_i32_0 : i32, i32
  }
  func.func @transform_15(%arg0: i32) -> (i32, i32) {
    %c0_i32 = arith.constant 0 : i32
    %c0_i32_0 = arith.constant 0 : i32
    %c0_i32_1 = arith.constant 0 : i32
    return %c0_i32, %c0_i32_0 : i32, i32
  }
  func.func @transform_16(%arg0: i32) -> (i32, i32, i32) {
    %c0_i32 = arith.constant 0 : i32
    %c0_i32_0 = arith.constant 0 : i32
    %c0_i32_1 = arith.constant 0 : i32
    return %arg0, %c0_i32, %c0_i32_0 : i32, i32, i32
  }
}

</mosaic_0001>

<llo_original>
// kernel: tpu_custom_call.1
$region0: #{tpu_custom_call.1}
  #allocation0 [shape = 'u32[]', space=smem, size = 0x4, offset = 0x4, fixed_abs, tag = 'smem constant byte address 0x4 - core index']
  #allocation1 [shape = 'u32[144,128]{1,0:T(1,128)}', space=vmem, size = 0x12000, scoped, tag = 'internal scratch']
  #allocation2 [shape = 'f32[96,32]{1,0:T(8,128)}', space=vmem, size = 0xc000, scoped, tag = 'scratch operand']
  %s0 = inlined_call_operand.vmem [shape: f32[2,96,32], index: 0, kind: input, shape index: {}]
  %s1 = inlined_call_operand.vmem [shape: f32[2,96,96], index: 1, kind: input, shape index: {}]
  %s2 = inlined_call_operand.vmem [shape: f32[32,64], index: 2, kind: input, shape index: {}]
  %s3 = inlined_call_operand.vmem [shape: f32[64,32], index: 3, kind: input, shape index: {}]
  %s4 = inlined_call_operand.vmem [shape: f32[4,96], index: 4, kind: input, shape index: {}]
  %s5 = inlined_call_operand.vmem [shape: f32[32,32], index: 5, kind: input, shape index: {}]
  %s6 = inlined_call_operand.vmem [shape: f32[32,32], index: 6, kind: input, shape index: {}]
  %s7 = inlined_call_operand.vmem [shape: f32[1,32], index: 7, kind: input, shape index: {}]
  %s8 = inlined_call_operand.vmem [shape: f32[32,32], index: 8, kind: input, shape index: {}]
  %s9 = inlined_call_operand.vmem [shape: f32[32,32], index: 9, kind: input, shape index: {}]
  %s10 = inlined_call_operand.vmem [shape: f32[1,32], index: 10, kind: input, shape index: {}]
  %s11 = inlined_call_operand.vmem [shape: f32[32,32], index: 11, kind: input, shape index: {}]
  %s12 = inlined_call_operand.hbm [shape: f32[32,32], index: 12, kind: input, shape index: {}]
  %s13 = inlined_call_operand.vmem [shape: f32[1,32], index: 13, kind: input, shape index: {}]
  %s14 = inlined_call_operand.hbm [shape: f32[32,32], index: 14, kind: input, shape index: {}]
  %s15 = inlined_call_operand.vmem [shape: f32[32,1], index: 15, kind: input, shape index: {}]
  %s16 = inlined_call_operand.vmem [shape: f32[2,4,1], index: 16, kind: output, shape index: {}]
  %s17 = sld [smem:[#allocation0]]
  $region105: #{tpu_custom_call.1} parent=0
    _
  %s19 = ssub.s32 1, %s17
  %s20 = scalar_select 0, %s19, %s17
  $region1: #{tpu_custom_call.1} parent=0
    #allocation3 [shape = 'u8[16384]{0}', space=vmem, size = 0x4000, scoped, tag = 'input window, operand 12, single buffered']
    #allocation4 [shape = 's32[2]{0}', space=sflag, size = 0x8, scoped, tag = 'scoped memory for tpu_custom_call.1']
    #allocation5 [shape = 'u8[16384]{0}', space=vmem, size = 0x4000, scoped, tag = 'input window, operand 14, single buffered']
    #allocation6 [shape = 's32[1]{0}', space=sflag, size = 0x4, scoped, tag = 'scoped memory for tpu_custom_call.1']
    %21 = vsyncpa [#allocation4], 0
    %22 = vsyncpa [#allocation6], 0
    loop: start=0, step=1, limit=4
    $region2: #{tpu_custom_call.1} parent=1 // loop_pre_header
      _
    $region3: #{tpu_custom_call.1} parent=1 // loop_header
      %s24 = sphi 0, %s28
      %p25 = scmp.ge.s32.totalorder %s24, 4
      %s34 = sphi 0, %s36
      %s37 = sphi 0, %s34
      %s38 = sphi 0, %s37
      %s54 = sphi 0, %s38
      %s60 = sphi 0, %s62
      %s63 = sphi 0, %s60
      %s64 = sphi 0, %s63
      %s80 = sphi 0, %s64
      %s84 = sphi 0, %s84
      %s86 = sphi 0, %s84
      %s87 = sphi 0, %s86
      %s101 = sphi 0, %s87
      %s105 = sphi 0, %s105
      %s107 = sphi 0, %s105
      %s108 = sphi 0, %s107
      %s122 = sphi 0, %s108
      %s126 = sphi 0, %s126
      %s128 = sphi 0, %s126
      %s129 = sphi 0, %s128
      %s143 = sphi 0, %s129
      %s147 = sphi 0, %s147
      %s149 = sphi 0, %s147
      %s150 = sphi 0, %s149
      %s164 = sphi 0, %s150
      %s168 = sphi 0, %s168
      %s170 = sphi 0, %s168
      %s171 = sphi 0, %s170
      %s185 = sphi 0, %s171
      %s189 = sphi 0, %s189
      %s191 = sphi 0, %s189
      %s192 = sphi 0, %s191
      %s206 = sphi 0, %s192
      %s210 = sphi 0, %s210
      %s212 = sphi 0, %s210
      %s213 = sphi 0, %s212
      %s227 = sphi 0, %s213
      %s231 = sphi 0, %s231
      %s233 = sphi 0, %s231
      %s234 = sphi 0, %s233
      %s248 = sphi 0, %s234
      %s252 = sphi 0, %s252
      %s254 = sphi 0, %s252
      %s255 = sphi 0, %s254
      %s269 = sphi 0, %s255
      %s273 = sphi 0, %s273
      %s275 = sphi 0, %s273
      %s276 = sphi 0, %s275
      %s290 = sphi 0, %s276
      %s294 = sphi 0, %s294
      %s296 = sphi 0, %s294
      %s297 = sphi 0, %s296
      %s311 = sphi 0, %s297
      %s315 = sphi 0, %s315
      %s317 = sphi 0, %s315
      %s318 = sphi 0, %s317
      %s332 = sphi 0, %s318
      %s336 = sphi 0, %s336
      %s338 = sphi 0, %s336
      %s339 = sphi 0, %s338
      %s353 = sphi 0, %s339
      %s357 = sphi 0, %s357
      %s359 = sphi 0, %s357
      %s360 = sphi 0, %s359
      %s374 = sphi 0, %s360
      %s380 = sphi 0, %s382
      %s383 = sphi 0, %s380
      %s384 = sphi 0, %s383
      %s400 = sphi 0, %s384
    $region4: #{tpu_custom_call.1} parent=1 // loop_header_branch
      %27 = sbr.rel (%p25) target = $region8
    $region5: #{tpu_custom_call.1} parent=1 // loop_body
      %s29 = ssub.s32 %s24, 1
      %s30 = ssub.s32 %s24, 2
      %s31 = sadd.s32 %s24, 1
      %s32 = ssub.s32 %s24, %s31
      %p33 = scmp.eq.s32.totalorder %s32, 0
      %s35 = sadd.s32 %s34, 1
      %s36 = scalar_select %p33, %s34, %s35
      %p39 = pneg %p33
      %p40 = scmp.eq.s32.totalorder %s24, 1
      %p41 = por %p39, %p40
      %p42 = scmp.ne.s32.totalorder %s34, %s37
      %p43 = scmp.eq.s32.totalorder %s24, 0
      %p44 = por %p42, %p43
      %p45 = scmp.ne.s32.totalorder %s34, %s37
      %p46 = scmp.eq.s32.totalorder %s29, 1
      %p47 = por %p45, %p46
      %p48 = scmp.ne.s32.totalorder %s37, %s38
      %p49 = scmp.eq.s32.totalorder %s29, 0
      %p50 = por %p48, %p49
      %p51 = scmp.ne.s32.totalorder %s37, %s38
      %p52 = scmp.eq.s32.totalorder %s30, 1
      %p53 = por %p51, %p52
      %p55 = scmp.ne.s32.totalorder %s38, %s54
      %p56 = scmp.eq.s32.totalorder %s30, 0
      %p57 = por %p55, %p56
      %s58 = ssub.s32 %s24, %s31
      %p59 = scmp.eq.s32.totalorder %s58, 0
      %s61 = sadd.s32 %s60, 1
      %s62 = scalar_select %p59, %s60, %s61
      %p65 = pneg %p59
      %p66 = scmp.eq.s32.totalorder %s24, 1
      %p67 = por %p65, %p66
      %p68 = scmp.ne.s32.totalorder %s60, %s63
      %p69 = scmp.eq.s32.totalorder %s24, 0
      %p70 = por %p68, %p69
      %p71 = scmp.ne.s32.totalorder %s60, %s63
      %p72 = scmp.eq.s32.totalorder %s29, 1
      %p73 = por %p71, %p72
      %p74 = scmp.ne.s32.totalorder %s63, %s64
      %p75 = scmp.eq.s32.totalorder %s29, 0
      %p76 = por %p74, %p75
      %p77 = scmp.ne.s32.totalorder %s63, %s64
      %p78 = scmp.eq.s32.totalorder %s30, 1
      %p79 = por %p77, %p78
      %p81 = scmp.ne.s32.totalorder %s64, %s80
      %p82 = scmp.eq.s32.totalorder %s30, 0
      %p83 = por %p81, %p82
      %s85 = sadd.s32 %s84, 1
      %p88 = scmp.eq.s32.totalorder %s24, 1
      %p89 = scmp.ne.s32.totalorder %s84, %s86
      %p90 = scmp.eq.s32.totalorder %s24, 0
      %p91 = por %p89, %p90
      %p92 = scmp.ne.s32.totalorder %s84, %s86
      %p93 = scmp.eq.s32.totalorder %s29, 1
      %p94 = por %p92, %p93
      %p95 = scmp.ne.s32.totalorder %s86, %s87
      %p96 = scmp.eq.s32.totalorder %s29, 0
      %p97 = por %p95, %p96
      %p98 = scmp.ne.s32.totalorder %s86, %s87
      %p99 = scmp.eq.s32.totalorder %s30, 1
      %p100 = por %p98, %p99
      %p102 = scmp.ne.s32.totalorder %s87, %s101
      %p103 = scmp.eq.s32.totalorder %s30, 0
      %p104 = por %p102, %p103
      %s106 = sadd.s32 %s105, 1
      %p109 = scmp.eq.s32.totalorder %s24, 1
      %p110 = scmp.ne.s32.totalorder %s105, %s107
      %p111 = scmp.eq.s32.totalorder %s24, 0
      %p112 = por %p110, %p111
      %p113 = scmp.ne.s32.totalorder %s105, %s107
      %p114 = scmp.eq.s32.totalorder %s29, 1
      %p115 = por %p113, %p114
      %p116 = scmp.ne.s32.totalorder %s107, %s108
      %p117 = scmp.eq.s32.totalorder %s29, 0
      %p118 = por %p116, %p117
      %p119 = scmp.ne.s32.totalorder %s107, %s108
      %p120 = scmp.eq.s32.totalorder %s30, 1
      %p121 = por %p119, %p120
      %p123 = scmp.ne.s32.totalorder %s108, %s122
      %p124 = scmp.eq.s32.totalorder %s30, 0
      %p125 = por %p123, %p124
      %s127 = sadd.s32 %s126, 1
      %p130 = scmp.eq.s32.totalorder %s24, 1
      %p131 = scmp.ne.s32.totalorder %s126, %s128
      %p132 = scmp.eq.s32.totalorder %s24, 0
      %p133 = por %p131, %p132
      %p134 = scmp.ne.s32.totalorder %s126, %s128
      %p135 = scmp.eq.s32.totalorder %s29, 1
      %p136 = por %p134, %p135
      %p137 = scmp.ne.s32.totalorder %s128, %s129
      %p138 = scmp.eq.s32.totalorder %s29, 0
      %p139 = por %p137, %p138
      %p140 = scmp.ne.s32.totalorder %s128, %s129
      %p141 = scmp.eq.s32.totalorder %s30, 1
      %p142 = por %p140, %p141
      %p144 = scmp.ne.s32.totalorder %s129, %s143
      %p145 = scmp.eq.s32.totalorder %s30, 0
      %p146 = por %p144, %p145
      %s148 = sadd.s32 %s147, 1
      %p151 = scmp.eq.s32.totalorder %s24, 1
      %p152 = scmp.ne.s32.totalorder %s147, %s149
      %p153 = scmp.eq.s32.totalorder %s24, 0
      %p154 = por %p152, %p153
      %p155 = scmp.ne.s32.totalorder %s147, %s149
      %p156 = scmp.eq.s32.totalorder %s29, 1
      %p157 = por %p155, %p156
      %p158 = scmp.ne.s32.totalorder %s149, %s150
      %p159 = scmp.eq.s32.totalorder %s29, 0
      %p160 = por %p158, %p159
      %p161 = scmp.ne.s32.totalorder %s149, %s150
      %p162 = scmp.eq.s32.totalorder %s30, 1
      %p163 = por %p161, %p162
      %p165 = scmp.ne.s32.totalorder %s150, %s164
      %p166 = scmp.eq.s32.totalorder %s30, 0
      %p167 = por %p165, %p166
      %s169 = sadd.s32 %s168, 1
      %p172 = scmp.eq.s32.totalorder %s24, 1
      %p173 = scmp.ne.s32.totalorder %s168, %s170
      %p174 = scmp.eq.s32.totalorder %s24, 0
      %p175 = por %p173, %p174
      %p176 = scmp.ne.s32.totalorder %s168, %s170
      %p177 = scmp.eq.s32.totalorder %s29, 1
      %p178 = por %p176, %p177
      %p179 = scmp.ne.s32.totalorder %s170, %s171
      %p180 = scmp.eq.s32.totalorder %s29, 0
      %p181 = por %p179, %p180
      %p182 = scmp.ne.s32.totalorder %s170, %s171
      %p183 = scmp.eq.s32.totalorder %s30, 1
      %p184 = por %p182, %p183
      %p186 = scmp.ne.s32.totalorder %s171, %s185
      %p187 = scmp.eq.s32.totalorder %s30, 0
      %p188 = por %p186, %p187
      %s190 = sadd.s32 %s189, 1
      %p193 = scmp.eq.s32.totalorder %s24, 1
      %p194 = scmp.ne.s32.totalorder %s189, %s191
      %p195 = scmp.eq.s32.totalorder %s24, 0
      %p196 = por %p194, %p195
      %p197 = scmp.ne.s32.totalorder %s189, %s191
      %p198 = scmp.eq.s32.totalorder %s29, 1
      %p199 = por %p197, %p198
      %p200 = scmp.ne.s32.totalorder %s191, %s192
      %p201 = scmp.eq.s32.totalorder %s29, 0
      %p202 = por %p200, %p201
      %p203 = scmp.ne.s32.totalorder %s191, %s192
      %p204 = scmp.eq.s32.totalorder %s30, 1
      %p205 = por %p203, %p204
      %p207 = scmp.ne.s32.totalorder %s192, %s206
      %p208 = scmp.eq.s32.totalorder %s30, 0
      %p209 = por %p207, %p208
      %s211 = sadd.s32 %s210, 1
      %p214 = scmp.eq.s32.totalorder %s24, 1
      %p215 = scmp.ne.s32.totalorder %s210, %s212
      %p216 = scmp.eq.s32.totalorder %s24, 0
      %p217 = por %p215, %p216
      %p218 = scmp.ne.s32.totalorder %s210, %s212
      %p219 = scmp.eq.s32.totalorder %s29, 1
      %p220 = por %p218, %p219
      %p221 = scmp.ne.s32.totalorder %s212, %s213
      %p222 = scmp.eq.s32.totalorder %s29, 0
      %p223 = por %p221, %p222
      %p224 = scmp.ne.s32.totalorder %s212, %s213
      %p225 = scmp.eq.s32.totalorder %s30, 1
      %p226 = por %p224, %p225
      %p228 = scmp.ne.s32.totalorder %s213, %s227
      %p229 = scmp.eq.s32.totalorder %s30, 0
      %p230 = por %p228, %p229
      %s232 = sadd.s32 %s231, 1
      %p235 = scmp.eq.s32.totalorder %s24, 1
      %p236 = scmp.ne.s32.totalorder %s231, %s233
      %p237 = scmp.eq.s32.totalorder %s24, 0
      %p238 = por %p236, %p237
      %p239 = scmp.ne.s32.totalorder %s231, %s233
      %p240 = scmp.eq.s32.totalorder %s29, 1
      %p241 = por %p239, %p240
      %p242 = scmp.ne.s32.totalorder %s233, %s234
      %p243 = scmp.eq.s32.totalorder %s29, 0
      %p244 = por %p242, %p243
      %p245 = scmp.ne.s32.totalorder %s233, %s234
      %p246 = scmp.eq.s32.totalorder %s30, 1
      %p247 = por %p245, %p246
      %p249 = scmp.ne.s32.totalorder %s234, %s248
      %p250 = scmp.eq.s32.totalorder %s30, 0
      %p251 = por %p249, %p250
      %s253 = sadd.s32 %s252, 1
      %p256 = scmp.eq.s32.totalorder %s24, 1
      %p257 = scmp.ne.s32.totalorder %s252, %s254
      %p258 = scmp.eq.s32.totalorder %s24, 0
      %p259 = por %p257, %p258
      %p260 = scmp.ne.s32.totalorder %s252, %s254
      %p261 = scmp.eq.s32.totalorder %s29, 1
      %p262 = por %p260, %p261
      %p263 = scmp.ne.s32.totalorder %s254, %s255
      %p264 = scmp.eq.s32.totalorder %s29, 0
      %p265 = por %p263, %p264
      %p266 = scmp.ne.s32.totalorder %s254, %s255
      %p267 = scmp.eq.s32.totalorder %s30, 1
      %p268 = por %p266, %p267
      %p270 = scmp.ne.s32.totalorder %s255, %s269
      %p271 = scmp.eq.s32.totalorder %s30, 0
      %p272 = por %p270, %p271
      %s274 = sadd.s32 %s273, 1
      %p277 = scmp.eq.s32.totalorder %s24, 1
      %p278 = scmp.ne.s32.totalorder %s273, %s275
      %p279 = scmp.eq.s32.totalorder %s24, 0
      %p280 = por %p278, %p279
      %p281 = scmp.ne.s32.totalorder %s273, %s275
      %p282 = scmp.eq.s32.totalorder %s29, 1
      %p283 = por %p281, %p282
      %p284 = scmp.ne.s32.totalorder %s275, %s276
      %p285 = scmp.eq.s32.totalorder %s29, 0
      %p286 = por %p284, %p285
      %p287 = scmp.ne.s32.totalorder %s275, %s276
      %p288 = scmp.eq.s32.totalorder %s30, 1
      %p289 = por %p287, %p288
      %p291 = scmp.ne.s32.totalorder %s276, %s290
      %p292 = scmp.eq.s32.totalorder %s30, 0
      %p293 = por %p291, %p292
      %s295 = sadd.s32 %s294, 1
      %p298 = scmp.eq.s32.totalorder %s24, 1
      %p299 = scmp.ne.s32.totalorder %s294, %s296
      %p300 = scmp.eq.s32.totalorder %s24, 0
      %p301 = por %p299, %p300
      %p302 = scmp.ne.s32.totalorder %s294, %s296
      %p303 = scmp.eq.s32.totalorder %s29, 1
      %p304 = por %p302, %p303
      %p305 = scmp.ne.s32.totalorder %s296, %s297
      %p306 = scmp.eq.s32.totalorder %s29, 0
      %p307 = por %p305, %p306
      %p308 = scmp.ne.s32.totalorder %s296, %s297
      %p309 = scmp.eq.s32.totalorder %s30, 1
      %p310 = por %p308, %p309
      %p312 = scmp.ne.s32.totalorder %s297, %s311
      %p313 = scmp.eq.s32.totalorder %s30, 0
      %p314 = por %p312, %p313
      %s316 = sadd.s32 %s315, 1
      %p319 = scmp.eq.s32.totalorder %s24, 1
      %p320 = scmp.ne.s32.totalorder %s315, %s317
      %p321 = scmp.eq.s32.totalorder %s24, 0
      %p322 = por %p320, %p321
      %p323 = scmp.ne.s32.totalorder %s315, %s317
      %p324 = scmp.eq.s32.totalorder %s29, 1
      %p325 = por %p323, %p324
      %p326 = scmp.ne.s32.totalorder %s317, %s318
      %p327 = scmp.eq.s32.totalorder %s29, 0
      %p328 = por %p326, %p327
      %p329 = scmp.ne.s32.totalorder %s317, %s318
      %p330 = scmp.eq.s32.totalorder %s30, 1
      %p331 = por %p329, %p330
      %p333 = scmp.ne.s32.totalorder %s318, %s332
      %p334 = scmp.eq.s32.totalorder %s30, 0
      %p335 = por %p333, %p334
      %s337 = sadd.s32 %s336, 1
      %p340 = scmp.eq.s32.totalorder %s24, 1
      %p341 = scmp.ne.s32.totalorder %s336, %s338
      %p342 = scmp.eq.s32.totalorder %s24, 0
      %p343 = por %p341, %p342
      %p344 = scmp.ne.s32.totalorder %s336, %s338
      %p345 = scmp.eq.s32.totalorder %s29, 1
      %p346 = por %p344, %p345
      %p347 = scmp.ne.s32.totalorder %s338, %s339
      %p348 = scmp.eq.s32.totalorder %s29, 0
      %p349 = por %p347, %p348
      %p350 = scmp.ne.s32.totalorder %s338, %s339
      %p351 = scmp.eq.s32.totalorder %s30, 1
      %p352 = por %p350, %p351
      %p354 = scmp.ne.s32.totalorder %s339, %s353
      %p355 = scmp.eq.s32.totalorder %s30, 0
      %p356 = por %p354, %p355
      %s358 = sadd.s32 %s357, 1
      %p361 = scmp.eq.s32.totalorder %s24, 1
      %p362 = scmp.ne.s32.totalorder %s357, %s359
      %p363 = scmp.eq.s32.totalorder %s24, 0
      %p364 = por %p362, %p363
      %p365 = scmp.ne.s32.totalorder %s357, %s359
      %p366 = scmp.eq.s32.totalorder %s29, 1
      %p367 = por %p365, %p366
      %p368 = scmp.ne.s32.totalorder %s359, %s360
      %p369 = scmp.eq.s32.totalorder %s29, 0
      %p370 = por %p368, %p369
      %p371 = scmp.ne.s32.totalorder %s359, %s360
      %p372 = scmp.eq.s32.totalorder %s30, 1
      %p373 = por %p371, %p372
      %p375 = scmp.ne.s32.totalorder %s360, %s374
      %p376 = scmp.eq.s32.totalorder %s30, 0
      %p377 = por %p375, %p376
      %s378 = ssub.s32 %s24, %s31
      %p379 = scmp.eq.s32.totalorder %s378, 0
      %s381 = sadd.s32 %s380, 1
      %s382 = scalar_select %p379, %s380, %s381
      %p385 = pneg %p379
      %p386 = scmp.eq.s32.totalorder %s24, 1
      %p387 = por %p385, %p386
      %p388 = scmp.ne.s32.totalorder %s380, %s383
      %p389 = scmp.eq.s32.totalorder %s24, 0
      %p390 = por %p388, %p389
      %p391 = scmp.ne.s32.totalorder %s380, %s383
      %p392 = scmp.eq.s32.totalorder %s29, 1
      %p393 = por %p391, %p392
      %p394 = scmp.ne.s32.totalorder %s383, %s384
      %p395 = scmp.eq.s32.totalorder %s29, 0
      %p396 = por %p394, %p395
      %p397 = scmp.ne.s32.totalorder %s383, %s384
      %p398 = scmp.eq.s32.totalorder %s30, 1
      %p399 = por %p397, %p398
      %p401 = scmp.ne.s32.totalorder %s384, %s400
      %p402 = scmp.eq.s32.totalorder %s30, 0
      %p403 = por %p401, %p402
      %p404 = scmp.le.s32.totalorder 1, %s24
      %p405 = scmp.lt.s32.totalorder %s24, 3
      %p406 = pnand %p404, %p405
      %p407 = pneg %p406
      // Predicated region
      $region9: #{tpu_custom_call.1} parent=5 // pred_check
        _
      $region10: #{tpu_custom_call.1} parent=5 // pred_check_branch
        %409 = sbr.rel (%p406) target = $region12
      $region11: #{tpu_custom_call.1} parent=5 // pred_region
        %s410 = ssub.s32 %s24, 1
        // Predicated region
        $region13: #{tpu_custom_call.1} parent=11 // pred_check
          %p411 = pneg %p97
        $region14: #{tpu_custom_call.1} parent=11 // pred_check_branch
          %413 = sbr.rel (%p411) target = $region16
        $region15: #{tpu_custom_call.1} parent=11 // pred_region
          _
        $region16: #{tpu_custom_call.1} parent=11 // pred_fallthru
          _
        // Predicated region
        $region17: #{tpu_custom_call.1} parent=11 // pred_check
          %p414 = pneg %p118
        $region18: #{tpu_custom_call.1} parent=11 // pred_check_branch
          %416 = sbr.rel (%p414) target = $region20
        $region19: #{tpu_custom_call.1} parent=11 // pred_region
          _
        $region20: #{tpu_custom_call.1} parent=11 // pred_fallthru
          _
        // Predicated region
        $region21: #{tpu_custom_call.1} parent=11 // pred_check
          %p417 = pneg %p139
        $region22: #{tpu_custom_call.1} parent=11 // pred_check_branch
          %419 = sbr.rel (%p417) target = $region24
        $region23: #{tpu_custom_call.1} parent=11 // pred_region
          _
        $region24: #{tpu_custom_call.1} parent=11 // pred_fallthru
          _
        // Predicated region
        $region25: #{tpu_custom_call.1} parent=11 // pred_check
          %p420 = pneg %p160
        $region26: #{tpu_custom_call.1} parent=11 // pred_check_branch
          %422 = sbr.rel (%p420) target = $region28
        $region27: #{tpu_custom_call.1} parent=11 // pred_region
          _
        $region28: #{tpu_custom_call.1} parent=11 // pred_fallthru
          _
        // Predicated region
        $region29: #{tpu_custom_call.1} parent=11 // pred_check
          %p423 = pneg %p181
        $region30: #{tpu_custom_call.1} parent=11 // pred_check_branch
          %425 = sbr.rel (%p423) target = $region32
        $region31: #{tpu_custom_call.1} parent=11 // pred_region
          _
        $region32: #{tpu_custom_call.1} parent=11 // pred_fallthru
          _
        // Predicated region
        $region33: #{tpu_custom_call.1} parent=11 // pred_check
          %p426 = pneg %p202
        $region34: #{tpu_custom_call.1} parent=11 // pred_check_branch
          %428 = sbr.rel (%p426) target = $region36
        $region35: #{tpu_custom_call.1} parent=11 // pred_region
          _
        $region36: #{tpu_custom_call.1} parent=11 // pred_fallthru
          _
        // Predicated region
        $region37: #{tpu_custom_call.1} parent=11 // pred_check
          %p429 = pneg %p223
        $region38: #{tpu_custom_call.1} parent=11 // pred_check_branch
          %431 = sbr.rel (%p429) target = $region40
        $region39: #{tpu_custom_call.1} parent=11 // pred_region
          _
        $region40: #{tpu_custom_call.1} parent=11 // pred_fallthru
          _
        // Predicated region
        $region41: #{tpu_custom_call.1} parent=11 // pred_check
          %p432 = pneg %p244
        $region42: #{tpu_custom_call.1} parent=11 // pred_check_branch
          %434 = sbr.rel (%p432) target = $region44
        $region43: #{tpu_custom_call.1} parent=11 // pred_region
          _
        $region44: #{tpu_custom_call.1} parent=11 // pred_fallthru
          _
        // Predicated region
        $region45: #{tpu_custom_call.1} parent=11 // pred_check
          %p435 = pneg %p265
        $region46: #{tpu_custom_call.1} parent=11 // pred_check_branch
          %437 = sbr.rel (%p435) target = $region48
        $region47: #{tpu_custom_call.1} parent=11 // pred_region
          _
        $region48: #{tpu_custom_call.1} parent=11 // pred_fallthru
          _
        // Predicated region
        $region49: #{tpu_custom_call.1} parent=11 // pred_check
          %p438 = pneg %p286
        $region50: #{tpu_custom_call.1} parent=11 // pred_check_branch
          %440 = sbr.rel (%p438) target = $region52
        $region51: #{tpu_custom_call.1} parent=11 // pred_region
          _
        $region52: #{tpu_custom_call.1} parent=11 // pred_fallthru
          _
        // Predicated region
        $region53: #{tpu_custom_call.1} parent=11 // pred_check
          %p441 = pneg %p307
        $region54: #{tpu_custom_call.1} parent=11 // pred_check_branch
          %443 = sbr.rel (%p441) target = $region56
        $region55: #{tpu_custom_call.1} parent=11 // pred_region
          %s445 = ssub.s32 512, 512
          %446 = vsyncadd [#allocation4], %s445
          %s447 = sshll.u32 [#allocation3], 4
          %s448 = int_to_ptr.vmem [resolvable:$true] %s447
          %453 = dma.hbm_to_vmem [thread:$0]  %s12, 512, %s448, [#allocation4], 128, 128, 8
        $region56: #{tpu_custom_call.1} parent=11 // pred_fallthru
          _
        // Predicated region
        $region57: #{tpu_custom_call.1} parent=11 // pred_check
          %p454 = pneg %p328
        $region58: #{tpu_custom_call.1} parent=11 // pred_check_branch
          %456 = sbr.rel (%p454) target = $region60
        $region59: #{tpu_custom_call.1} parent=11 // pred_region
          _
        $region60: #{tpu_custom_call.1} parent=11 // pred_fallthru
          _
        // Predicated region
        $region61: #{tpu_custom_call.1} parent=11 // pred_check
          %p457 = pneg %p349
        $region62: #{tpu_custom_call.1} parent=11 // pred_check_branch
          %459 = sbr.rel (%p457) target = $region64
        $region63: #{tpu_custom_call.1} parent=11 // pred_region
          %s461 = ssub.s32 512, 512
          %462 = vsyncadd [#allocation6], %s461
          %s463 = sshll.u32 [#allocation5], 4
          %s464 = int_to_ptr.vmem [resolvable:$true] %s463
          %469 = dma.hbm_to_vmem [thread:$0]  %s14, 512, %s464, [#allocation6], 128, 128, 8
        $region64: #{tpu_custom_call.1} parent=11 // pred_fallthru
          _
        // Predicated region
        $region65: #{tpu_custom_call.1} parent=11 // pred_check
          %p470 = pneg %p370
        $region66: #{tpu_custom_call.1} parent=11 // pred_check_branch
          %472 = sbr.rel (%p470) target = $region68
        $region67: #{tpu_custom_call.1} parent=11 // pred_region
          _
        $region68: #{tpu_custom_call.1} parent=11 // pred_fallthru
          _
      $region12: #{tpu_custom_call.1} parent=5 // pred_fallthru
        _
      %p473 = scmp.lt.s32.totalorder %s24, 2
      // Predicated region
      $region69: #{tpu_custom_call.1} parent=5 // pred_check
        %p474 = pneg %p473
      $region70: #{tpu_custom_call.1} parent=5 // pred_check_branch
        %476 = sbr.rel (%p474) target = $region72
      $region71: #{tpu_custom_call.1} parent=5 // pred_region
        // Predicated region
        $region73: #{tpu_custom_call.1} parent=71 // pred_check
          %p477 = pneg %p44
        $region74: #{tpu_custom_call.1} parent=71 // pred_check_branch
          %479 = sbr.rel (%p477) target = $region76
        $region75: #{tpu_custom_call.1} parent=71 // pred_region
          %p480 = scmp.lt.s32.totalorder %s24, 1
          %s481 = scalar_select %p480, %s24, 1
          %s482 = smul.addr %s481, 12
          %s483 = smul.addr %s482, 8
          %s484 = scalar_lea.vmem %s0, %s483
        $region76: #{tpu_custom_call.1} parent=71 // pred_fallthru
          _
        // Predicated region
        $region77: #{tpu_custom_call.1} parent=71 // pred_check
          %p485 = pneg %p70
        $region78: #{tpu_custom_call.1} parent=71 // pred_check_branch
          %487 = sbr.rel (%p485) target = $region80
        $region79: #{tpu_custom_call.1} parent=71 // pred_region
          %p488 = scmp.lt.s32.totalorder %s24, 1
          %s489 = scalar_select %p488, %s24, 1
          %s490 = smul.addr %s489, 12
          %s491 = smul.addr %s490, 8
          %s492 = scalar_lea.vmem %s1, %s491
        $region80: #{tpu_custom_call.1} parent=71 // pred_fallthru
          _
      $region72: #{tpu_custom_call.1} parent=5 // pred_fallthru
        _
      %p493 = scmp.le.s32.totalorder 1, %s24
      %p494 = scmp.lt.s32.totalorder %s24, 3
      %p495 = pnand %p493, %p494
      %p496 = pneg %p495
      // Predicated region
      $region81: #{tpu_custom_call.1} parent=5 // pred_check
        _
      $region82: #{tpu_custom_call.1} parent=5 // pred_check_branch
        %498 = sbr.rel (%p495) target = $region84
      $region83: #{tpu_custom_call.1} parent=5 // pred_region
        %s499 = ssub.s32 %s24, 1
        // Predicated region
        $region85: #{tpu_custom_call.1} parent=83 // pred_check
          %p500 = pneg %p307
        $region86: #{tpu_custom_call.1} parent=83 // pred_check_branch
          %502 = sbr.rel (%p500) target = $region88
        $region87: #{tpu_custom_call.1} parent=83 // pred_region
          %503 = dma.done [#allocation4], 512
        $region88: #{tpu_custom_call.1} parent=83 // pred_fallthru
          _
        // Predicated region
        $region89: #{tpu_custom_call.1} parent=83 // pred_check
          %p504 = pneg %p349
        $region90: #{tpu_custom_call.1} parent=83 // pred_check_branch
          %506 = sbr.rel (%p504) target = $region92
        $region91: #{tpu_custom_call.1} parent=83 // pred_region
          %507 = dma.done [#allocation6], 512
        $region92: #{tpu_custom_call.1} parent=83 // pred_fallthru
          _
        %p508 = scmp.lt.s32.totalorder %s29, 1
        %s509 = scalar_select %p508, %s29, 1
        %s510 = smul.addr %s509, 12
        %s511 = smul.addr %s510, 8
        %s512 = scalar_lea.vmem %s0, %s511
        %p513 = pneg %p50
        %p514 = pneg %p47
        %p515 = scmp.lt.s32.totalorder %s29, 1
        %s516 = scalar_select %p515, %s29, 1
        %s517 = smul.addr %s516, 12
        %s518 = smul.addr %s517, 8
        %s519 = scalar_lea.vmem %s1, %s518
        %p520 = pneg %p76
        %p521 = pneg %p73
        %p522 = pneg %p97
        %p523 = pneg %p94
        %p524 = pneg %p118
        %p525 = pneg %p115
        %p526 = pneg %p139
        %p527 = pneg %p136
        %p528 = pneg %p160
        %p529 = pneg %p157
        %p530 = pneg %p181
        %p531 = pneg %p178
        %p532 = pneg %p202
        %p533 = pneg %p199
        %p534 = pneg %p223
        %p535 = pneg %p220
        %p536 = pneg %p244
        %p537 = pneg %p241
        %p538 = pneg %p265
        %p539 = pneg %p262
        %p540 = pneg %p286
        %p541 = pneg %p283
        %p542 = pneg %p307
        %p543 = pneg %p304
        %p544 = pneg %p328
        %p545 = pneg %p325
        %p546 = pneg %p349
        %p547 = pneg %p346
        %p548 = pneg %p370
        %p549 = pneg %p367
        %p550 = pneg %p396
        %p551 = pneg %p393
        %p552 = scmp.lt.s32.totalorder %s29, 1
        %s553 = scalar_select %p552, %s29, 1
        %s554 = smul.addr %s553, 4
        %s555 = scalar_lea.vmem %s16, %s554
        %p556 = scmp.lt.s32.totalorder %s29, 1
        %s557 = scalar_select %p556, %s29, 1
        %s558 = smul.addr %s557, 12
        %s559 = smul.addr %s558, 8
        %s560 = scalar_lea.vmem %s0, %s559
        %p561 = scmp.lt.s32.totalorder %s29, 1
        %s562 = scalar_select %p561, %s29, 1
        %s563 = smul.addr %s562, 12
        %s564 = smul.addr %s563, 8
        %s565 = scalar_lea.vmem %s1, %s564
        %p566 = scmp.lt.s32.totalorder %s29, 1
        %s567 = scalar_select %p566, %s29, 1
        %s568 = smul.addr %s567, 4
        %s569 = scalar_lea.vmem %s16, %s568
        %v570 = vld [vmem:[%s560] sm:$0xff]
        %v571 = vld [vmem:[%s560 + $0x8] sm:$0xff]
        %v572 = vld [vmem:[%s560 + $0x10] sm:$0xff]
        %v573 = vld [vmem:[%s560 + $0x18] sm:$0xff]
        %v574 = vld [vmem:[%s560 + $0x20] sm:$0xff]
        %v575 = vld [vmem:[%s560 + $0x28] sm:$0xff]
        %v576 = vld [vmem:[%s560 + $0x30] sm:$0xff]
        %v577 = vld [vmem:[%s560 + $0x38] sm:$0xff]
        %v578 = vld [vmem:[%s560 + $0x40] sm:$0xff]
        %v579 = vld [vmem:[%s560 + $0x48] sm:$0xff]
        %v580 = vld [vmem:[%s560 + $0x50] sm:$0xff]
        %v581 = vld [vmem:[%s560 + $0x58] sm:$0xff]
        %v582 = vld [vmem:[%s565] sm:$0xff]
        %v583 = vld [vmem:[%s565 + $0x8] sm:$0xff]
        %v584 = vld [vmem:[%s565 + $0x10] sm:$0xff]
        %v585 = vld [vmem:[%s565 + $0x18] sm:$0xff]
        %v586 = vld [vmem:[%s565 + $0x20] sm:$0xff]
        %v587 = vld [vmem:[%s565 + $0x28] sm:$0xff]
        %v588 = vld [vmem:[%s565 + $0x30] sm:$0xff]
        %v589 = vld [vmem:[%s565 + $0x38] sm:$0xff]
        %v590 = vld [vmem:[%s565 + $0x40] sm:$0xff]
        %v591 = vld [vmem:[%s565 + $0x48] sm:$0xff]
        %v592 = vld [vmem:[%s565 + $0x50] sm:$0xff]
        %v593 = vld [vmem:[%s565 + $0x58] sm:$0xff]
        %v594 = vld [vmem:[%s2] sm:$0xff]
        %v595 = vld [vmem:[%s2 + $0x8] sm:$0xff]
        %v596 = vld [vmem:[%s2 + $0x10] sm:$0xff]
        %v597 = vld [vmem:[%s2 + $0x18] sm:$0xff]
        %v598 = vld [vmem:[%s3] sm:$0xff]
        %v599 = vld [vmem:[%s3 + $0x8] sm:$0xff]
        %v600 = vld [vmem:[%s3 + $0x10] sm:$0xff]
        %v601 = vld [vmem:[%s3 + $0x18] sm:$0xff]
        %v602 = vld [vmem:[%s3 + $0x20] sm:$0xff]
        %v603 = vld [vmem:[%s3 + $0x28] sm:$0xff]
        %v604 = vld [vmem:[%s3 + $0x30] sm:$0xff]
        %v605 = vld [vmem:[%s3 + $0x38] sm:$0xff]
        %v606 = vld [vmem:[%s4] sm:$0xf]
        %v607 = vmul.f32 %v570, %v570
        %v608 = vmul.f32 %v571, %v571
        %v609 = vmul.f32 %v572, %v572
        %v610 = vmul.f32 %v573, %v573
        %v611 = vmul.f32 %v574, %v574
        %v612 = vmul.f32 %v575, %v575
        %v613 = vmul.f32 %v576, %v576
        %v614 = vmul.f32 %v577, %v577
        %v615 = vmul.f32 %v578, %v578
        %v616 = vmul.f32 %v579, %v579
        %v617 = vmul.f32 %v580, %v580
        %v618 = vmul.f32 %v581, %v581
        %vm619 = vcmask 261120
        %v620 = vsel %vm619, %v607, 0.0
        %621 = vadd.xlane.f32.xlu0 %v620
        %v622 = vpop.xlane.xlu0 %621
        %v623 = vsel %vm619, %v608, 0.0
        %624 = vadd.xlane.f32.xlu0 %v623
        %v625 = vpop.xlane.xlu0 %624
        %v626 = vsel %vm619, %v609, 0.0
        %627 = vadd.xlane.f32.xlu0 %v626
        %v628 = vpop.xlane.xlu0 %627
        %v629 = vsel %vm619, %v610, 0.0
        %630 = vadd.xlane.f32.xlu0 %v629
        %v631 = vpop.xlane.xlu0 %630
        %v632 = vsel %vm619, %v611, 0.0
        %633 = vadd.xlane.f32.xlu0 %v632
        %v634 = vpop.xlane.xlu0 %633
        %v635 = vsel %vm619, %v612, 0.0
        %636 = vadd.xlane.f32.xlu0 %v635
        %v637 = vpop.xlane.xlu0 %636
        %v638 = vsel %vm619, %v613, 0.0
        %639 = vadd.xlane.f32.xlu0 %v638
        %v640 = vpop.xlane.xlu0 %639
        %v641 = vsel %vm619, %v614, 0.0
        %642 = vadd.xlane.f32.xlu0 %v641
        %v643 = vpop.xlane.xlu0 %642
        %v644 = vsel %vm619, %v615, 0.0
        %645 = vadd.xlane.f32.xlu0 %v644
        %v646 = vpop.xlane.xlu0 %645
        %v647 = vsel %vm619, %v616, 0.0
        %648 = vadd.xlane.f32.xlu0 %v647
        %v649 = vpop.xlane.xlu0 %648
        %v650 = vsel %vm619, %v617, 0.0
        %651 = vadd.xlane.f32.xlu0 %v650
        %v652 = vpop.xlane.xlu0 %651
        %v653 = vsel %vm619, %v618, 0.0
        %654 = vadd.xlane.f32.xlu0 %v653
        %v655 = vpop.xlane.xlu0 %654
        %v656 = vmax.f32 %v622, 1e-12
        %v657 = vmax.f32 %v625, 1e-12
        %v658 = vmax.f32 %v628, 1e-12
        %v659 = vmax.f32 %v631, 1e-12
        %v660 = vmax.f32 %v634, 1e-12
        %v661 = vmax.f32 %v637, 1e-12
        %v662 = vmax.f32 %v640, 1e-12
        %v663 = vmax.f32 %v643, 1e-12
        %v664 = vmax.f32 %v646, 1e-12
        %v665 = vmax.f32 %v649, 1e-12
        %v666 = vmax.f32 %v652, 1e-12
        %v667 = vmax.f32 %v655, 1e-12
        %v668 = vrsqrt.pop %v656
        %v669 = vrsqrt.pop %v657
        %v670 = vrsqrt.pop %v658
        %v671 = vrsqrt.pop %v659
        %v672 = vrsqrt.pop %v660
        %v673 = vrsqrt.pop %v661
        %v674 = vrsqrt.pop %v662
        %v675 = vrsqrt.pop %v663
        %v676 = vrsqrt.pop %v664
        %v677 = vrsqrt.pop %v665
        %v678 = vrsqrt.pop %v666
        %v679 = vrsqrt.pop %v667
        %v680 = vmul.f32 %v570, %v668
        %v681 = vmul.f32 %v571, %v669
        %v682 = vmul.f32 %v572, %v670
        %v683 = vmul.f32 %v573, %v671
        %v684 = vmul.f32 %v574, %v672
        %v685 = vmul.f32 %v575, %v673
        %v686 = vmul.f32 %v576, %v674
        %v687 = vmul.f32 %v577, %v675
        %v688 = vmul.f32 %v578, %v676
        %v689 = vmul.f32 %v579, %v677
        %v690 = vmul.f32 %v580, %v678
        %v691 = vmul.f32 %v581, %v679
        %v693 = vsel %vm619, %v680, 0
        %v696 = vsel %vm619, %v681, 0
        %v699 = vsel %vm619, %v682, 0
        %v702 = vsel %vm619, %v683, 0
        %v705 = vsel %vm619, %v684, 0
        %v708 = vsel %vm619, %v685, 0
        %v711 = vsel %vm619, %v686, 0
        %v714 = vsel %vm619, %v687, 0
        %v717 = vsel %vm619, %v688, 0
        %v720 = vsel %vm619, %v689, 0
        %v723 = vsel %vm619, %v690, 0
        %v726 = vsel %vm619, %v691, 0
        %728 = vmatprep.subr.mxu0 0.0
        %729 = vmatpush1.xpose.msra.mxu0 %v705
        %730 = vmatprep.subr.mxu0 0.0
        %731 = vmatpush1.xpose.msra.mxu0 %v708
        %732 = vmatprep.subr.mxu0 0.0
        %733 = vmatpush1.xpose.msra.mxu0 %v711
        %734 = vmatprep.subr.mxu0 0.0
        %735 = vmatpush1.xpose.msra.mxu0 %v714
        %736 = vmatprep.subr.mxu0 0.0
        %737 = vmatpush1.xpose.msra.mxu0 %v717
        %738 = vmatprep.subr.mxu0 0.0
        %739 = vmatpush1.xpose.msra.mxu0 %v720
        %740 = vmatprep.subr.mxu0 0.0
        %741 = vmatpush1.xpose.msra.mxu0 %v723
        %742 = vmatprep.subr.mxu0 0.0
        %743 = vmatpush1.xpose.msra.mxu0 %v726
        %744 = vmatprep.subr.mxu0 0.0
        %745 = vmatpush1.xpose.msra.mxu0 0.0
        %746 = vmatprep.subr.mxu0 0.0
        %747 = vmatpush1.xpose.msra.mxu0 0.0
        %748 = vmatprep.subr.mxu0 0.0
        %749 = vmatpush1.xpose.msra.mxu0 0.0
        %750 = vmatprep.subr.mxu0 0.0
        %751 = vmatpush1.xpose.msra.mxu0 0.0
        %752 = vmatprep.subr.mxu0 0.0
        %753 = vmatpush1.xpose.msra.mxu0 0.0
        %754 = vmatprep.subr.mxu0 0.0
        %755 = vmatpush1.xpose.msra.mxu0 0.0
        %756 = vmatprep.subr.mxu0 0.0
        %757 = vmatpush1.xpose.msra.mxu0 0.0
        %758 = vmatprep.subr.mxu0 0.0
        %759 = vmatpush1.xpose.msra.mxu0 0.0
        %760 = vmatprep.subr.mxu0 0.0
        %761 = vmatpush1.xpose.msra.mxu0 0.0
        %762 = vmatprep.subr.mxu0 0.0
        %763 = vmatpush1.xpose.msra.mxu0 0.0
        %764 = vmatprep.subr.mxu0 0.0
        %765 = vmatpush1.xpose.msra.mxu0 0.0
        %766 = vmatprep.subr.mxu0 0.0
        %767 = vmatpush1.xpose.msra.mxu0 0.0
        %768 = vmatprep.subr.mxu0 0.0
        %769 = vmatpush1.xpose.msra.mxu0 0.0
        %770 = vmatprep.subr.mxu0 0.0
        %771 = vmatpush1.xpose.msra.mxu0 0.0
        %772 = vmatprep.subr.mxu0 0.0
        %773 = vmatpush1.xpose.msra.mxu0 0.0
        %774 = vmatprep.subr.mxu0 0.0
        %775 = vmatpush1.xpose.msra.mxu0 0.0
        %776 = vmatprep.subr.mxu0 0.0
        %777 = vmatpush1.xpose.msra.mxu0 0.0
        %778 = vmatprep.subr.mxu0 0.0
        %779 = vmatpush1.xpose.msra.mxu0 0.0
        %780 = vmatprep.subr.mxu0 0.0
        %781 = vmatpush1.xpose.msra.mxu0 0.0
        %782 = vmatprep.subr.mxu0 0.0
        %783 = vmatpush1.xpose.msra.mxu0 0.0
        %784 = vmatprep.subr.mxu0 0.0
        %785 = vmatpush1.xpose.msra.mxu0 0.0
        %786 = vmatprep.subr.mxu0 0.0
        %787 = vmatpush1.xpose.msra.mxu0 0.0
        %788 = vmatprep.subr.mxu0 0.0
        %789 = vmatpush1.xpose.msra.mxu0 0.0
        %790 = vmatprep.subr.mxu0 0.0
        %791 = vmatpush1.xpose.msra.mxu0 0.0
        %792 = vmatprep.mubr.f32.mxu0 0.0
        %793 = vmatmul.mubr.f32.gmra.mrb[0].mxu0 %v693
        %v794 = vpop.f32.mrb[0].mxu0
        %v795 = vadd.f32 0.0, %v794
        %v796 = vpop.f32.mrb[0].mxu0
        %797 = vmatprep.mubr.f32.mxu0 0.0
        %798 = vmatmul.mubr.f32.gmra.mrb[0].mxu0 %v696
        %v799 = vpop.f32.mrb[0].mxu0
        %v800 = vadd.f32 0.0, %v799
        %v801 = vpop.f32.mrb[0].mxu0
        %802 = vmatprep.mubr.f32.mxu0 0.0
        %803 = vmatmul.mubr.f32.gmra.mrb[0].mxu0 %v699
        %v804 = vpop.f32.mrb[0].mxu0
        %v805 = vadd.f32 0.0, %v804
        %v806 = vpop.f32.mrb[0].mxu0
        %807 = vmatprep.mubr.f32.mxu0 0.0
        %808 = vmatmul.mubr.f32.gmra.mrb[0].mxu0 %v702
        %v809 = vpop.f32.mrb[0].mxu0
        %v810 = vadd.f32 0.0, %v809
        %v811 = vpop.f32.mrb[0].mxu0
        %812 = vdwg.mxu0
        %813 = vmatprep.subr.mxu0 0.0
        %814 = vmatpush1.xpose.msra.mxu0 %v693
        %815 = vmatprep.subr.mxu0 0.0
        %816 = vmatpush1.xpose.msra.mxu0 %v696
        %817 = vmatprep.subr.mxu0 0.0
        %818 = vmatpush1.xpose.msra.mxu0 %v699
        %819 = vmatprep.subr.mxu0 0.0
        %820 = vmatpush1.xpose.msra.mxu0 %v702
        %821 = vmatprep.subr.mxu0 0.0
        %822 = vmatpush1.xpose.msra.mxu0 0.0
        %823 = vmatprep.subr.mxu0 0.0
        %824 = vmatpush1.xpose.msra.mxu0 0.0
        %825 = vmatprep.subr.mxu0 0.0
        %826 = vmatpush1.xpose.msra.mxu0 0.0
        %827 = vmatprep.subr.mxu0 0.0
        %828 = vmatpush1.xpose.msra.mxu0 0.0
        %829 = vmatprep.subr.mxu0 0.0
        %830 = vmatpush1.xpose.msra.mxu0 0.0
        %831 = vmatprep.subr.mxu0 0.0
        %832 = vmatpush1.xpose.msra.mxu0 0.0
        %833 = vmatprep.subr.mxu0 0.0
        %834 = vmatpush1.xpose.msra.mxu0 0.0
        %835 = vmatprep.subr.mxu0 0.0
        %836 = vmatpush1.xpose.msra.mxu0 0.0
        %837 = vmatprep.subr.mxu0 0.0
        %838 = vmatpush1.xpose.msra.mxu0 0.0
        %839 = vmatprep.subr.mxu0 0.0
        %840 = vmatpush1.xpose.msra.mxu0 0.0
        %841 = vmatprep.subr.mxu0 0.0
        %842 = vmatpush1.xpose.msra.mxu0 0.0
        %843 = vmatprep.subr.mxu0 0.0
        %844 = vmatpush1.xpose.msra.mxu0 0.0
        %845 = vmatprep.subr.mxu0 0.0
        %846 = vmatpush1.xpose.msra.mxu0 0.0
        %847 = vmatprep.subr.mxu0 0.0
        %848 = vmatpush1.xpose.msra.mxu0 0.0
        %849 = vmatprep.subr.mxu0 0.0
        %850 = vmatpush1.xpose.msra.mxu0 0.0
        %851 = vmatprep.subr.mxu0 0.0
        %852 = vmatpush1.xpose.msra.mxu0 0.0
        %853 = vmatprep.subr.mxu0 0.0
        %854 = vmatpush1.xpose.msra.mxu0 0.0
        %855 = vmatprep.subr.mxu0 0.0
        %856 = vmatpush1.xpose.msra.mxu0 0.0
        %857 = vmatprep.subr.mxu0 0.0
        %858 = vmatpush1.xpose.msra.mxu0 0.0
        %859 = vmatprep.subr.mxu0 0.0
        %860 = vmatpush1.xpose.msra.mxu0 0.0
        %861 = vmatprep.subr.mxu0 0.0
        %862 = vmatpush1.xpose.msra.mxu0 0.0
        %863 = vmatprep.subr.mxu0 0.0
        %864 = vmatpush1.xpose.msra.mxu0 0.0
        %865 = vmatprep.subr.mxu0 0.0
        %866 = vmatpush1.xpose.msra.mxu0 0.0
        %867 = vmatprep.subr.mxu0 0.0
        %868 = vmatpush1.xpose.msra.mxu0 0.0
        %869 = vmatprep.subr.mxu0 0.0
        %870 = vmatpush1.xpose.msra.mxu0 0.0
        %871 = vmatprep.subr.mxu0 0.0
        %872 = vmatpush1.xpose.msra.mxu0 0.0
        %873 = vmatprep.subr.mxu0 0.0
        %874 = vmatpush1.xpose.msra.mxu0 0.0
        %875 = vmatprep.subr.mxu0 0.0
        %876 = vmatpush1.xpose.msra.mxu0 0.0
        %877 = vmatprep.mubr.f32.mxu0 0.0
        %878 = vmatmul.mubr.f32.gmra.mrb[0].mxu0 %v705
        %v879 = vpop.f32.mrb[0].mxu0
        %v880 = vadd.f32 0.0, %v879
        %v881 = vpop.f32.mrb[0].mxu0
        %882 = vmatprep.mubr.f32.mxu0 0.0
        %883 = vmatmul.mubr.f32.gmra.mrb[0].mxu0 %v708
        %v884 = vpop.f32.mrb[0].mxu0
        %v885 = vadd.f32 0.0, %v884
        %v886 = vpop.f32.mrb[0].mxu0
        %887 = vmatprep.mubr.f32.mxu0 0.0
        %888 = vmatmul.mubr.f32.gmra.mrb[0].mxu0 %v711
        %v889 = vpop.f32.mrb[0].mxu0
        %v890 = vadd.f32 0.0, %v889
        %v891 = vpop.f32.mrb[0].mxu0
        %892 = vmatprep.mubr.f32.mxu0 0.0
        %893 = vmatmul.mubr.f32.gmra.mrb[0].mxu0 %v714
        %v894 = vpop.f32.mrb[0].mxu0
        %v895 = vadd.f32 0.0, %v894
        %v896 = vpop.f32.mrb[0].mxu0
        %897 = vmatprep.mubr.f32.mxu0 0.0
        %898 = vmatmul.mubr.f32.gmra.mrb[0].mxu0 %v717
        %v899 = vpop.f32.mrb[0].mxu0
        %v900 = vadd.f32 0.0, %v899
        %v901 = vpop.f32.mrb[0].mxu0
        %902 = vmatprep.mubr.f32.mxu0 0.0
        %903 = vmatmul.mubr.f32.gmra.mrb[0].mxu0 %v720
        %v904 = vpop.f32.mrb[0].mxu0
        %v905 = vadd.f32 0.0, %v904
        %v906 = vpop.f32.mrb[0].mxu0
        %907 = vmatprep.mubr.f32.mxu0 0.0
        %908 = vmatmul.mubr.f32.gmra.mrb[0].mxu0 %v723
        %v909 = vpop.f32.mrb[0].mxu0
        %v910 = vadd.f32 0.0, %v909
        %v911 = vpop.f32.mrb[0].mxu0
        %912 = vmatprep.mubr.f32.mxu0 0.0
        %913 = vmatmul.mubr.f32.gmra.mrb[0].mxu0 %v726
        %v914 = vpop.f32.mrb[0].mxu0
        %v915 = vadd.f32 0.0, %v914
        %v916 = vpop.f32.mrb[0].mxu0
        %917 = vdwg.mxu0
        %v918 = vmul.f32 %v795, 1.442695
        %v919 = vpow.pop %v918
        %v920 = vmul.f32 %v800, 1.442695
        %v921 = vpow.pop %v920
        %v922 = vmul.f32 %v805, 1.442695
        %v923 = vpow.pop %v922
        %v924 = vmul.f32 %v810, 1.442695
        %v925 = vpow.pop %v924
        %v926 = vmul.f32 %v919, %v594
        %v927 = vmul.f32 %v921, %v595
        %v928 = vmul.f32 %v923, %v596
        %v929 = vmul.f32 %v925, %v597
        %v930 = vmul.f32 %v880, 1.442695
        %v931 = vpow.pop %v930
        %v932 = vmul.f32 %v885, 1.442695
        %v933 = vpow.pop %v932
        %v934 = vmul.f32 %v890, 1.442695
        %v935 = vpow.pop %v934
        %v936 = vmul.f32 %v895, 1.442695
        %v937 = vpow.pop %v936
        %v938 = vmul.f32 %v900, 1.442695
        %v939 = vpow.pop %v938
        %v940 = vmul.f32 %v905, 1.442695
        %v941 = vpow.pop %v940
        %v942 = vmul.f32 %v910, 1.442695
        %v943 = vpow.pop %v942
        %v944 = vmul.f32 %v915, 1.442695
        %v945 = vpow.pop %v944
        %v946 = vmul.f32 %v931, %v598
        %v947 = vmul.f32 %v933, %v599
        %v948 = vmul.f32 %v935, %v600
        %v949 = vmul.f32 %v937, %v601
        %v950 = vmul.f32 %v939, %v602
        %v951 = vmul.f32 %v941, %v603
        %v952 = vmul.f32 %v943, %v604
        %v953 = vmul.f32 %v945, %v605
        %vm954 = vcmask 523264
        %v955 = vsel %vm954, %v926, 0.0
        %v956 = vsel %vm954, %v927, 0.0
        %v957 = vadd.f32 %v955, %v956
        %v958 = vsel %vm954, %v928, 0.0
        %v959 = vadd.f32 %v957, %v958
        %v960 = vsel %vm954, %v929, 0.0
        %v961 = vadd.f32 %v959, %v960
        %v962 = vrot.slane %v961, 4
        %v963 = vadd.f32 %v961, %v962
        %v964 = vrot.slane %v963, 2
        %v965 = vadd.f32 %v963, %v964
        %v966 = vrot.slane %v965, 1
        %v967 = vadd.f32 %v965, %v966
        %v968 = vrcp.pop %v967
        %v969 = vmul.f32 %v926, %v968
        %v970 = vmul.f32 %v927, %v968
        %v971 = vmul.f32 %v928, %v968
        %v972 = vmul.f32 %v929, %v968
        %v973 = vsel %vm619, %v946, 0.0
        %v974 = vsel %vm619, %v947, 0.0
        %v975 = vadd.f32 %v973, %v974
        %v976 = vsel %vm619, %v948, 0.0
        %v977 = vadd.f32 %v975, %v976
        %v978 = vsel %vm619, %v949, 0.0
        %v979 = vadd.f32 %v977, %v978
        %v980 = vsel %vm619, %v950, 0.0
        %v981 = vadd.f32 %v979, %v980
        %v982 = vsel %vm619, %v951, 0.0
        %v983 = vadd.f32 %v981, %v982
        %v984 = vsel %vm619, %v952, 0.0
        %v985 = vadd.f32 %v983, %v984
        %v986 = vsel %vm619, %v953, 0.0
        %v987 = vadd.f32 %v985, %v986
        %v988 = vrot.slane %v987, 4
        %v989 = vadd.f32 %v987, %v988
        %v990 = vrot.slane %v989, 2
        %v991 = vadd.f32 %v989, %v990
        %v992 = vrot.slane %v991, 1
        %v993 = vadd.f32 %v991, %v992
        %v994 = vrcp.pop %v993
        %v995 = vmul.f32 %v946, %v994
        %v996 = vmul.f32 %v947, %v994
        %v997 = vmul.f32 %v948, %v994
        %v998 = vmul.f32 %v949, %v994
        %v999 = vmul.f32 %v950, %v994
        %v1000 = vmul.f32 %v951, %v994
        %v1001 = vmul.f32 %v952, %v994
        %v1002 = vmul.f32 %v953, %v994
        %v1004 = vsel %vm954, %v969, 0
        %v1007 = vsel %vm954, %v970, 0
        %v1010 = vsel %vm954, %v971, 0
        %v1013 = vsel %vm954, %v972, 0
        %1015 = vmatprep.subr.mxu0 0.0
        %1016 = vmatpush1.msra.mxu0 %v684
        %1017 = vmatprep.subr.mxu0 0.0
        %1018 = vmatpush1.msra.mxu0 %v685
        %1019 = vmatprep.subr.mxu0 0.0
        %1020 = vmatpush1.msra.mxu0 %v686
        %1021 = vmatprep.subr.mxu0 0.0
        %1022 = vmatpush1.msra.mxu0 %v687
        %1023 = vmatprep.subr.mxu0 0.0
        %1024 = vmatpush1.msra.mxu0 %v688
        %1025 = vmatprep.subr.mxu0 0.0
        %1026 = vmatpush1.msra.mxu0 %v689
        %1027 = vmatprep.subr.mxu0 0.0
        %1028 = vmatpush1.msra.mxu0 %v690
        %1029 = vmatprep.subr.mxu0 0.0
        %1030 = vmatpush1.msra.mxu0 %v691
        %1031 = vmatprep.subr.mxu0 0.0
        %1032 = vmatpush1.msra.mxu0 0.0
        %1033 = vmatprep.subr.mxu0 0.0
        %1034 = vmatpush1.msra.mxu0 0.0
        %1035 = vmatprep.subr.mxu0 0.0
        %1036 = vmatpush1.msra.mxu0 0.0
        %1037 = vmatprep.subr.mxu0 0.0
        %1038 = vmatpush1.msra.mxu0 0.0
        %1039 = vmatprep.subr.mxu0 0.0
        %1040 = vmatpush1.msra.mxu0 0.0
        %1041 = vmatprep.subr.mxu0 0.0
        %1042 = vmatpush1.msra.mxu0 0.0
        %1043 = vmatprep.subr.mxu0 0.0
        %1044 = vmatpush1.msra.mxu0 0.0
        %1045 = vmatprep.subr.mxu0 0.0
        %1046 = vmatpush1.msra.mxu0 0.0
        %1047 = vmatprep.subr.mxu0 0.0
        %1048 = vmatpush1.msra.mxu0 0.0
        %1049 = vmatprep.subr.mxu0 0.0
        %1050 = vmatpush1.msra.mxu0 0.0
        %1051 = vmatprep.subr.mxu0 0.0
        %1052 = vmatpush1.msra.mxu0 0.0
        %1053 = vmatprep.subr.mxu0 0.0
        %1054 = vmatpush1.msra.mxu0 0.0
        %1055 = vmatprep.subr.mxu0 0.0
        %1056 = vmatpush1.msra.mxu0 0.0
        %1057 = vmatprep.subr.mxu0 0.0
        %1058 = vmatpush1.msra.mxu0 0.0
        %1059 = vmatprep.subr.mxu0 0.0
        %1060 = vmatpush1.msra.mxu0 0.0
        %1061 = vmatprep.subr.mxu0 0.0
        %1062 = vmatpush1.msra.mxu0 0.0
        %1063 = vmatprep.subr.mxu0 0.0
        %1064 = vmatpush1.msra.mxu0 0.0
        %1065 = vmatprep.subr.mxu0 0.0
        %1066 = vmatpush1.msra.mxu0 0.0
        %1067 = vmatprep.subr.mxu0 0.0
        %1068 = vmatpush1.msra.mxu0 0.0
        %1069 = vmatprep.subr.mxu0 0.0
        %1070 = vmatpush1.msra.mxu0 0.0
        %1071 = vmatprep.subr.mxu0 0.0
        %1072 = vmatpush1.msra.mxu0 0.0
        %1073 = vmatprep.subr.mxu0 0.0
        %1074 = vmatpush1.msra.mxu0 0.0
        %1075 = vmatprep.subr.mxu0 0.0
        %1076 = vmatpush1.msra.mxu0 0.0
        %1077 = vmatprep.subr.mxu0 0.0
        %1078 = vmatpush1.msra.mxu0 0.0
        %1079 = vmatprep.mubr.f32.mxu0 0.0
        %1080 = vmatmul.mubr.f32.gmra.mrb[0].mxu0 %v1004
        %v1081 = vpop.f32.mrb[0].mxu0
        %v1082 = vadd.f32 0.0, %v1081
        %v1083 = vpop.f32.mrb[0].mxu0
        %1084 = vmatprep.mubr.f32.mxu0 0.0
        %1085 = vmatmul.mubr.f32.gmra.mrb[0].mxu0 %v1007
        %v1086 = vpop.f32.mrb[0].mxu0
        %v1087 = vadd.f32 0.0, %v1086
        %v1088 = vpop.f32.mrb[0].mxu0
        %1089 = vmatprep.mubr.f32.mxu0 0.0
        %1090 = vmatmul.mubr.f32.gmra.mrb[0].mxu0 %v1010
        %v1091 = vpop.f32.mrb[0].mxu0
        %v1092 = vadd.f32 0.0, %v1091
        %v1093 = vpop.f32.mrb[0].mxu0
        %1094 = vmatprep.mubr.f32.mxu0 0.0
        %1095 = vmatmul.mubr.f32.gmra.mrb[0].mxu0 %v1013
        %v1096 = vpop.f32.mrb[0].mxu0
        %v1097 = vadd.f32 0.0, %v1096
        %v1098 = vpop.f32.mrb[0].mxu0
        %1099 = vdwg.mxu0
        %v1100 = vsub.f32 %v680, %v1082
        %v1101 = vsub.f32 %v681, %v1087
        %v1102 = vsub.f32 %v682, %v1092
        %v1103 = vsub.f32 %v683, %v1097
        %1104 = vst.msk [vmem:[#allocation2] sm:$0xff] %vm619, %v1100
        %1105 = vst.msk [vmem:[#allocation2 + $0x8] sm:$0xff] %vm619, %v1101
        %1106 = vst.msk [vmem:[#allocation2 + $0x10] sm:$0xff] %vm619, %v1102
        %1107 = vst.msk [vmem:[#allocation2 + $0x18] sm:$0xff] %vm619, %v1103
        %v1109 = vsel %vm619, %v995, 0
        %v1112 = vsel %vm619, %v996, 0
        %v1115 = vsel %vm619, %v997, 0
        %v1118 = vsel %vm619, %v998, 0
        %v1121 = vsel %vm619, %v999, 0
        %v1124 = vsel %vm619, %v1000, 0
        %v1127 = vsel %vm619, %v1001, 0
        %v1130 = vsel %vm619, %v1002, 0
        %1132 = vmatprep.subr.mxu0 0.0
        %1133 = vmatpush1.msra.mxu0 %v680
        %1134 = vmatprep.subr.mxu0 0.0
        %1135 = vmatpush1.msra.mxu0 %v681
        %1136 = vmatprep.subr.mxu0 0.0
        %1137 = vmatpush1.msra.mxu0 %v682
        %1138 = vmatprep.subr.mxu0 0.0
        %1139 = vmatpush1.msra.mxu0 %v683
        %1140 = vmatprep.subr.mxu0 0.0
        %1141 = vmatpush1.msra.mxu0 0.0
        %1142 = vmatprep.subr.mxu0 0.0
        %1143 = vmatpush1.msra.mxu0 0.0
        %1144 = vmatprep.subr.mxu0 0.0
        %1145 = vmatpush1.msra.mxu0 0.0
        %1146 = vmatprep.subr.mxu0 0.0
        %1147 = vmatpush1.msra.mxu0 0.0
        %1148 = vmatprep.subr.mxu0 0.0
        %1149 = vmatpush1.msra.mxu0 0.0
        %1150 = vmatprep.subr.mxu0 0.0
        %1151 = vmatpush1.msra.mxu0 0.0
        %1152 = vmatprep.subr.mxu0 0.0
        %1153 = vmatpush1.msra.mxu0 0.0
        %1154 = vmatprep.subr.mxu0 0.0
        %1155 = vmatpush1.msra.mxu0 0.0
        %1156 = vmatprep.subr.mxu0 0.0
        %1157 = vmatpush1.msra.mxu0 0.0
        %1158 = vmatprep.subr.mxu0 0.0
        %1159 = vmatpush1.msra.mxu0 0.0
        %1160 = vmatprep.subr.mxu0 0.0
        %1161 = vmatpush1.msra.mxu0 0.0
        %1162 = vmatprep.subr.mxu0 0.0
        %1163 = vmatpush1.msra.mxu0 0.0
        %1164 = vmatprep.subr.mxu0 0.0
        %1165 = vmatpush1.msra.mxu0 0.0
        %1166 = vmatprep.subr.mxu0 0.0
        %1167 = vmatpush1.msra.mxu0 0.0
        %1168 = vmatprep.subr.mxu0 0.0
        %1169 = vmatpush1.msra.mxu0 0.0
        %1170 = vmatprep.subr.mxu0 0.0
        %1171 = vmatpush1.msra.mxu0 0.0
        %1172 = vmatprep.subr.mxu0 0.0
        %1173 = vmatpush1.msra.mxu0 0.0
        %1174 = vmatprep.subr.mxu0 0.0
        %1175 = vmatpush1.msra.mxu0 0.0
        %1176 = vmatprep.subr.mxu0 0.0
        %1177 = vmatpush1.msra.mxu0 0.0
        %1178 = vmatprep.subr.mxu0 0.0
        %1179 = vmatpush1.msra.mxu0 0.0
        %1180 = vmatprep.subr.mxu0 0.0
        %1181 = vmatpush1.msra.mxu0 0.0
        %1182 = vmatprep.subr.mxu0 0.0
        %1183 = vmatpush1.msra.mxu0 0.0
        %1184 = vmatprep.subr.mxu0 0.0
        %1185 = vmatpush1.msra.mxu0 0.0
        %1186 = vmatprep.subr.mxu0 0.0
        %1187 = vmatpush1.msra.mxu0 0.0
        %1188 = vmatprep.subr.mxu0 0.0
        %1189 = vmatpush1.msra.mxu0 0.0
        %1190 = vmatprep.subr.mxu0 0.0
        %1191 = vmatpush1.msra.mxu0 0.0
        %1192 = vmatprep.subr.mxu0 0.0
        %1193 = vmatpush1.msra.mxu0 0.0
        %1194 = vmatprep.subr.mxu0 0.0
        %1195 = vmatpush1.msra.mxu0 0.0
        %1196 = vmatprep.mubr.f32.mxu0 0.0
        %1197 = vmatmul.mubr.f32.gmra.mrb[0].mxu0 %v1109
        %v1198 = vpop.f32.mrb[0].mxu0
        %v1199 = vadd.f32 0.0, %v1198
        %v1200 = vpop.f32.mrb[0].mxu0
        %1201 = vmatprep.mubr.f32.mxu0 0.0
        %1202 = vmatmul.mubr.f32.gmra.mrb[0].mxu0 %v1112
        %v1203 = vpop.f32.mrb[0].mxu0
        %v1204 = vadd.f32 0.0, %v1203
        %v1205 = vpop.f32.mrb[0].mxu0
        %1206 = vmatprep.mubr.f32.mxu0 0.0
        %1207 = vmatmul.mubr.f32.gmra.mrb[0].mxu0 %v1115
        %v1208 = vpop.f32.mrb[0].mxu0
        %v1209 = vadd.f32 0.0, %v1208
        %v1210 = vpop.f32.mrb[0].mxu0
        %1211 = vmatprep.mubr.f32.mxu0 0.0
        %1212 = vmatmul.mubr.f32.gmra.mrb[0].mxu0 %v1118
        %v1213 = vpop.f32.mrb[0].mxu0
        %v1214 = vadd.f32 0.0, %v1213
        %v1215 = vpop.f32.mrb[0].mxu0
        %1216 = vmatprep.mubr.f32.mxu0 0.0
        %1217 = vmatmul.mubr.f32.gmra.mrb[0].mxu0 %v1121
        %v1218 = vpop.f32.mrb[0].mxu0
        %v1219 = vadd.f32 0.0, %v1218
        %v1220 = vpop.f32.mrb[0].mxu0
        %1221 = vmatprep.mubr.f32.mxu0 0.0
        %1222 = vmatmul.mubr.f32.gmra.mrb[0].mxu0 %v1124
        %v1223 = vpop.f32.mrb[0].mxu0
        %v1224 = vadd.f32 0.0, %v1223
        %v1225 = vpop.f32.mrb[0].mxu0
        %1226 = vmatprep.mubr.f32.mxu0 0.0
        %1227 = vmatmul.mubr.f32.gmra.mrb[0].mxu0 %v1127
        %v1228 = vpop.f32.mrb[0].mxu0
        %v1229 = vadd.f32 0.0, %v1228
        %v1230 = vpop.f32.mrb[0].mxu0
        %1231 = vmatprep.mubr.f32.mxu0 0.0
        %1232 = vmatmul.mubr.f32.gmra.mrb[0].mxu0 %v1130
        %v1233 = vpop.f32.mrb[0].mxu0
        %v1234 = vadd.f32 0.0, %v1233
        %v1235 = vpop.f32.mrb[0].mxu0
        %1236 = vdwg.mxu0
        %v1237 = vsub.f32 %v684, %v1199
        %v1238 = vsub.f32 %v685, %v1204
        %v1239 = vsub.f32 %v686, %v1209
        %v1240 = vsub.f32 %v687, %v1214
        %v1241 = vsub.f32 %v688, %v1219
        %v1242 = vsub.f32 %v689, %v1224
        %v1243 = vsub.f32 %v690, %v1229
        %v1244 = vsub.f32 %v691, %v1234
        %1245 = vst.msk [vmem:[#allocation2 + $0x20] sm:$0xff] %vm619, %v1237
        %1246 = vst.msk [vmem:[#allocation2 + $0x28] sm:$0xff] %vm619, %v1238
        %1247 = vst.msk [vmem:[#allocation2 + $0x30] sm:$0xff] %vm619, %v1239
        %1248 = vst.msk [vmem:[#allocation2 + $0x38] sm:$0xff] %vm619, %v1240
        %1249 = vst.msk [vmem:[#allocation2 + $0x40] sm:$0xff] %vm619, %v1241
        %1250 = vst.msk [vmem:[#allocation2 + $0x48] sm:$0xff] %vm619, %v1242
        %1251 = vst.msk [vmem:[#allocation2 + $0x50] sm:$0xff] %vm619, %v1243
        %1252 = vst.msk [vmem:[#allocation2 + $0x58] sm:$0xff] %vm619, %v1244
        %vm1253 = vcmask 785408
        %v1255 = vsel %vm1253, %v582, 0
        %v1258 = vsel %vm1253, %v583, 0
        %v1261 = vsel %vm1253, %v584, 0
        %v1264 = vsel %vm1253, %v585, 0
        %v1267 = vsel %vm1253, %v586, 0
        %v1270 = vsel %vm1253, %v587, 0
        %v1273 = vsel %vm1253, %v588, 0
        %v1276 = vsel %vm1253, %v589, 0
        %v1279 = vsel %vm1253, %v590, 0
        %v1282 = vsel %vm1253, %v591, 0
        %v1285 = vsel %vm1253, %v592, 0
        %v1288 = vsel %vm1253, %v593, 0
        %1290 = vmatprep.subr.mxu0 0.0
        %1291 = vmatpush1.msra.mxu0 %v570
        %1292 = vmatprep.subr.mxu0 0.0
        %1293 = vmatpush1.msra.mxu0 %v571
        %1294 = vmatprep.subr.mxu0 0.0
        %1295 = vmatpush1.msra.mxu0 %v572
        %1296 = vmatprep.subr.mxu0 0.0
        %1297 = vmatpush1.msra.mxu0 %v573
        %1298 = vmatprep.subr.mxu0 0.0
        %1299 = vmatpush1.msra.mxu0 %v574
        %1300 = vmatprep.subr.mxu0 0.0
        %1301 = vmatpush1.msra.mxu0 %v575
        %1302 = vmatprep.subr.mxu0 0.0
        %1303 = vmatpush1.msra.mxu0 %v576
        %1304 = vmatprep.subr.mxu0 0.0
        %1305 = vmatpush1.msra.mxu0 %v577
        %1306 = vmatprep.subr.mxu0 0.0
        %1307 = vmatpush1.msra.mxu0 %v578
        %1308 = vmatprep.subr.mxu0 0.0
        %1309 = vmatpush1.msra.mxu0 %v579
        %1310 = vmatprep.subr.mxu0 0.0
        %1311 = vmatpush1.msra.mxu0 %v580
        %1312 = vmatprep.subr.mxu0 0.0
        %1313 = vmatpush1.msra.mxu0 %v581
        %1314 = vmatprep.subr.mxu0 0.0
        %1315 = vmatpush1.msra.mxu0 0.0
        %1316 = vmatprep.subr.mxu0 0.0
        %1317 = vmatpush1.msra.mxu0 0.0
        %1318 = vmatprep.subr.mxu0 0.0
        %1319 = vmatpush1.msra.mxu0 0.0
        %1320 = vmatprep.subr.mxu0 0.0
        %1321 = vmatpush1.msra.mxu0 0.0
        %1322 = vmatprep.subr.mxu0 0.0
        %1323 = vmatpush1.msra.mxu0 0.0
        %1324 = vmatprep.subr.mxu0 0.0
        %1325 = vmatpush1.msra.mxu0 0.0
        %1326 = vmatprep.subr.mxu0 0.0
        %1327 = vmatpush1.msra.mxu0 0.0
        %1328 = vmatprep.subr.mxu0 0.0
        %1329 = vmatpush1.msra.mxu0 0.0
        %1330 = vmatprep.subr.mxu0 0.0
        %1331 = vmatpush1.msra.mxu0 0.0
        %1332 = vmatprep.subr.mxu0 0.0
        %1333 = vmatpush1.msra.mxu0 0.0
        %1334 = vmatprep.subr.mxu0 0.0
        %1335 = vmatpush1.msra.mxu0 0.0
        %1336 = vmatprep.subr.mxu0 0.0
        %1337 = vmatpush1.msra.mxu0 0.0
        %1338 = vmatprep.subr.mxu0 0.0
        %1339 = vmatpush1.msra.mxu0 0.0
        %1340 = vmatprep.subr.mxu0 0.0
        %1341 = vmatpush1.msra.mxu0 0.0
        %1342 = vmatprep.subr.mxu0 0.0
        %1343 = vmatpush1.msra.mxu0 0.0
        %1344 = vmatprep.subr.mxu0 0.0
        %1345 = vmatpush1.msra.mxu0 0.0
        %1346 = vmatprep.subr.mxu0 0.0
        %1347 = vmatpush1.msra.mxu0 0.0
        %1348 = vmatprep.subr.mxu0 0.0
        %1349 = vmatpush1.msra.mxu0 0.0
        %1350 = vmatprep.subr.mxu0 0.0
        %1351 = vmatpush1.msra.mxu0 0.0
        %1352 = vmatprep.subr.mxu0 0.0
        %1353 = vmatpush1.msra.mxu0 0.0
        %1354 = vmatprep.mubr.f32.mxu0 0.0
        %1355 = vmatmul.mubr.f32.gmra.mrb[0].mxu0 %v1255
        %v1356 = vpop.f32.mrb[0].mxu0
        %v1357 = vadd.f32 0.0, %v1356
        %v1358 = vpop.f32.mrb[0].mxu0
        %1359 = vmatprep.mubr.f32.mxu0 0.0
        %1360 = vmatmul.mubr.f32.gmra.mrb[0].mxu0 %v1258
        %v1361 = vpop.f32.mrb[0].mxu0
        %v1362 = vadd.f32 0.0, %v1361
        %v1363 = vpop.f32.mrb[0].mxu0
        %1364 = vmatprep.mubr.f32.mxu0 0.0
        %1365 = vmatmul.mubr.f32.gmra.mrb[0].mxu0 %v1261
        %v1366 = vpop.f32.mrb[0].mxu0
        %v1367 = vadd.f32 0.0, %v1366
        %v1368 = vpop.f32.mrb[0].mxu0
        %1369 = vmatprep.mubr.f32.mxu0 0.0
        %1370 = vmatmul.mubr.f32.gmra.mrb[0].mxu0 %v1264
        %v1371 = vpop.f32.mrb[0].mxu0
        %v1372 = vadd.f32 0.0, %v1371
        %v1373 = vpop.f32.mrb[0].mxu0
        %1374 = vmatprep.mubr.f32.mxu0 0.0
        %1375 = vmatmul.mubr.f32.gmra.mrb[0].mxu0 %v1267
        %v1376 = vpop.f32.mrb[0].mxu0
        %v1377 = vadd.f32 0.0, %v1376
        %v1378 = vpop.f32.mrb[0].mxu0
        %1379 = vmatprep.mubr.f32.mxu0 0.0
        %1380 = vmatmul.mubr.f32.gmra.mrb[0].mxu0 %v1270
        %v1381 = vpop.f32.mrb[0].mxu0
        %v1382 = vadd.f32 0.0, %v1381
        %v1383 = vpop.f32.mrb[0].mxu0
        %1384 = vmatprep.mubr.f32.mxu0 0.0
        %1385 = vmatmul.mubr.f32.gmra.mrb[0].mxu0 %v1273
        %v1386 = vpop.f32.mrb[0].mxu0
        %v1387 = vadd.f32 0.0, %v1386
        %v1388 = vpop.f32.mrb[0].mxu0
        %1389 = vmatprep.mubr.f32.mxu0 0.0
        %1390 = vmatmul.mubr.f32.gmra.mrb[0].mxu0 %v1276
        %v1391 = vpop.f32.mrb[0].mxu0
        %v1392 = vadd.f32 0.0, %v1391
        %v1393 = vpop.f32.mrb[0].mxu0
        %1394 = vmatprep.mubr.f32.mxu0 0.0
        %1395 = vmatmul.mubr.f32.gmra.mrb[0].mxu0 %v1279
        %v1396 = vpop.f32.mrb[0].mxu0
        %v1397 = vadd.f32 0.0, %v1396
        %v1398 = vpop.f32.mrb[0].mxu0
        %1399 = vmatprep.mubr.f32.mxu0 0.0
        %1400 = vmatmul.mubr.f32.gmra.mrb[0].mxu0 %v1282
        %v1401 = vpop.f32.mrb[0].mxu0
        %v1402 = vadd.f32 0.0, %v1401
        %v1403 = vpop.f32.mrb[0].mxu0
        %1404 = vmatprep.mubr.f32.mxu0 0.0
        %1405 = vmatmul.mubr.f32.gmra.mrb[0].mxu0 %v1285
        %v1406 = vpop.f32.mrb[0].mxu0
        %v1407 = vadd.f32 0.0, %v1406
        %v1408 = vpop.f32.mrb[0].mxu0
        %1409 = vmatprep.mubr.f32.mxu0 0.0
        %1410 = vmatmul.mubr.f32.gmra.mrb[0].mxu0 %v1288
        %v1411 = vpop.f32.mrb[0].mxu0
        %v1412 = vadd.f32 0.0, %v1411
        %v1413 = vpop.f32.mrb[0].mxu0
        %1414 = vdwg.mxu0
        %v1415 = vld [vmem:[%s5] sm:$0xff]
        %v1416 = vld [vmem:[%s5 + $0x8] sm:$0xff]
        %v1417 = vld [vmem:[%s5 + $0x10] sm:$0xff]
        %v1418 = vld [vmem:[%s5 + $0x18] sm:$0xff]
        %v1419 = vld [vmem:[#allocation2] sm:$0xff]
        %v1420 = vld [vmem:[#allocation2 + $0x8] sm:$0xff]
        %v1421 = vld [vmem:[#allocation2 + $0x10] sm:$0xff]
        %v1422 = vld [vmem:[#allocation2 + $0x18] sm:$0xff]
        %v1423 = vld [vmem:[#allocation2 + $0x20] sm:$0xff]
        %v1424 = vld [vmem:[#allocation2 + $0x28] sm:$0xff]
        %v1425 = vld [vmem:[#allocation2 + $0x30] sm:$0xff]
        %v1426 = vld [vmem:[#allocation2 + $0x38] sm:$0xff]
        %v1427 = vld [vmem:[#allocation2 + $0x40] sm:$0xff]
        %v1428 = vld [vmem:[#allocation2 + $0x48] sm:$0xff]
        %v1429 = vld [vmem:[#allocation2 + $0x50] sm:$0xff]
        %v1430 = vld [vmem:[#allocation2 + $0x58] sm:$0xff]
        %v1431 = vld [vmem:[%s6] sm:$0xff]
        %v1432 = vld [vmem:[%s6 + $0x8] sm:$0xff]
        %v1433 = vld [vmem:[%s6 + $0x10] sm:$0xff]
        %v1434 = vld [vmem:[%s6 + $0x18] sm:$0xff]
        %v1436 = vsel %vm619, %v1419, 0
        %v1439 = vsel %vm619, %v1420, 0
        %v1442 = vsel %vm619, %v1421, 0
        %v1445 = vsel %vm619, %v1422, 0
        %v1448 = vsel %vm619, %v1423, 0
        %v1451 = vsel %vm619, %v1424, 0
        %v1454 = vsel %vm619, %v1425, 0
        %v1457 = vsel %vm619, %v1426, 0
        %v1460 = vsel %vm619, %v1427, 0
        %v1463 = vsel %vm619, %v1428, 0
        %v1466 = vsel %vm619, %v1429, 0
        %v1469 = vsel %vm619, %v1430, 0
        %1471 = vmatprep.subr.mxu0 0.0
        %1472 = vmatpush1.msra.mxu0 %v1431
        %1473 = vmatprep.subr.mxu0 0.0
        %1474 = vmatpush1.msra.mxu0 %v1432
        %1475 = vmatprep.subr.mxu0 0.0
        %1476 = vmatpush1.msra.mxu0 %v1433
        %1477 = vmatprep.subr.mxu0 0.0
        %1478 = vmatpush1.msra.mxu0 %v1434
        %1479 = vmatprep.subr.mxu0 0.0
        %1480 = vmatpush1.msra.mxu0 0.0
        %1481 = vmatprep.subr.mxu0 0.0
        %1482 = vmatpush1.msra.mxu0 0.0
        %1483 = vmatprep.subr.mxu0 0.0
        %1484 = vmatpush1.msra.mxu0 0.0
        %1485 = vmatprep.subr.mxu0 0.0
        %1486 = vmatpush1.msra.mxu0 0.0
        %1487 = vmatprep.subr.mxu0 0.0
        %1488 = vmatpush1.msra.mxu0 0.0
        %1489 = vmatprep.subr.mxu0 0.0
        %1490 = vmatpush1.msra.mxu0 0.0
        %1491 = vmatprep.subr.mxu0 0.0
        %1492 = vmatpush1.msra.mxu0 0.0
        %1493 = vmatprep.subr.mxu0 0.0
        %1494 = vmatpush1.msra.mxu0 0.0
        %1495 = vmatprep.subr.mxu0 0.0
        %1496 = vmatpush1.msra.mxu0 0.0
        %1497 = vmatprep.subr.mxu0 0.0
        %1498 = vmatpush1.msra.mxu0 0.0
        %1499 = vmatprep.subr.mxu0 0.0
        %1500 = vmatpush1.msra.mxu0 0.0
        %1501 = vmatprep.subr.mxu0 0.0
        %1502 = vmatpush1.msra.mxu0 0.0
        %1503 = vmatprep.subr.mxu0 0.0
        %1504 = vmatpush1.msra.mxu0 0.0
        %1505 = vmatprep.subr.mxu0 0.0
        %1506 = vmatpush1.msra.mxu0 0.0
        %1507 = vmatprep.subr.mxu0 0.0
        %1508 = vmatpush1.msra.mxu0 0.0
        %1509 = vmatprep.subr.mxu0 0.0
        %1510 = vmatpush1.msra.mxu0 0.0
        %1511 = vmatprep.subr.mxu0 0.0
        %1512 = vmatpush1.msra.mxu0 0.0
        %1513 = vmatprep.subr.mxu0 0.0
        %1514 = vmatpush1.msra.mxu0 0.0
        %1515 = vmatprep.subr.mxu0 0.0
        %1516 = vmatpush1.msra.mxu0 0.0
        %1517 = vmatprep.subr.mxu0 0.0
        %1518 = vmatpush1.msra.mxu0 0.0
        %1519 = vmatprep.subr.mxu0 0.0
        %1520 = vmatpush1.msra.mxu0 0.0
        %1521 = vmatprep.subr.mxu0 0.0
        %1522 = vmatpush1.msra.mxu0 0.0
        %1523 = vmatprep.subr.mxu0 0.0
        %1524 = vmatpush1.msra.mxu0 0.0
        %1525 = vmatprep.subr.mxu0 0.0
        %1526 = vmatpush1.msra.mxu0 0.0
        %1527 = vmatprep.subr.mxu0 0.0
        %1528 = vmatpush1.msra.mxu0 0.0
        %1529 = vmatprep.subr.mxu0 0.0
        %1530 = vmatpush1.msra.mxu0 0.0
        %1531 = vmatprep.subr.mxu0 0.0
        %1532 = vmatpush1.msra.mxu0 0.0
        %1533 = vmatprep.subr.mxu0 0.0
        %1534 = vmatpush1.msra.mxu0 0.0
        %1535 = vmatprep.mubr.f32.mxu0 0.0
        %1536 = vmatmul.mubr.f32.gmra.mrb[0].mxu0 %v1436
        %v1537 = vpop.f32.mrb[0].mxu0
        %v1538 = vadd.f32 0.0, %v1537
        %v1539 = vpop.f32.mrb[0].mxu0
        %1540 = vmatprep.mubr.f32.mxu0 0.0
        %1541 = vmatmul.mubr.f32.gmra.mrb[0].mxu0 %v1439
        %v1542 = vpop.f32.mrb[0].mxu0
        %v1543 = vadd.f32 0.0, %v1542
        %v1544 = vpop.f32.mrb[0].mxu0
        %1545 = vmatprep.mubr.f32.mxu0 0.0
        %1546 = vmatmul.mubr.f32.gmra.mrb[0].mxu0 %v1442
        %v1547 = vpop.f32.mrb[0].mxu0
        %v1548 = vadd.f32 0.0, %v1547
        %v1549 = vpop.f32.mrb[0].mxu0
        %1550 = vmatprep.mubr.f32.mxu0 0.0
        %1551 = vmatmul.mubr.f32.gmra.mrb[0].mxu0 %v1445
        %v1552 = vpop.f32.mrb[0].mxu0
        %v1553 = vadd.f32 0.0, %v1552
        %v1554 = vpop.f32.mrb[0].mxu0
        %1555 = vmatprep.mubr.f32.mxu0 0.0
        %1556 = vmatmul.mubr.f32.gmra.mrb[0].mxu0 %v1448
        %v1557 = vpop.f32.mrb[0].mxu0
        %v1558 = vadd.f32 0.0, %v1557
        %v1559 = vpop.f32.mrb[0].mxu0
        %1560 = vmatprep.mubr.f32.mxu0 0.0
        %1561 = vmatmul.mubr.f32.gmra.mrb[0].mxu0 %v1451
        %v1562 = vpop.f32.mrb[0].mxu0
        %v1563 = vadd.f32 0.0, %v1562
        %v1564 = vpop.f32.mrb[0].mxu0
        %1565 = vmatprep.mubr.f32.mxu0 0.0
        %1566 = vmatmul.mubr.f32.gmra.mrb[0].mxu0 %v1454
        %v1567 = vpop.f32.mrb[0].mxu0
        %v1568 = vadd.f32 0.0, %v1567
        %v1569 = vpop.f32.mrb[0].mxu0
        %1570 = vmatprep.mubr.f32.mxu0 0.0
        %1571 = vmatmul.mubr.f32.gmra.mrb[0].mxu0 %v1457
        %v1572 = vpop.f32.mrb[0].mxu0
        %v1573 = vadd.f32 0.0, %v1572
        %v1574 = vpop.f32.mrb[0].mxu0
        %1575 = vmatprep.mubr.f32.mxu0 0.0
        %1576 = vmatmul.mubr.f32.gmra.mrb[0].mxu0 %v1460
        %v1577 = vpop.f32.mrb[0].mxu0
        %v1578 = vadd.f32 0.0, %v1577
        %v1579 = vpop.f32.mrb[0].mxu0
        %1580 = vmatprep.mubr.f32.mxu0 0.0
        %1581 = vmatmul.mubr.f32.gmra.mrb[0].mxu0 %v1463
        %v1582 = vpop.f32.mrb[0].mxu0
        %v1583 = vadd.f32 0.0, %v1582
        %v1584 = vpop.f32.mrb[0].mxu0
        %1585 = vmatprep.mubr.f32.mxu0 0.0
        %1586 = vmatmul.mubr.f32.gmra.mrb[0].mxu0 %v1466
        %v1587 = vpop.f32.mrb[0].mxu0
        %v1588 = vadd.f32 0.0, %v1587
        %v1589 = vpop.f32.mrb[0].mxu0
        %1590 = vmatprep.mubr.f32.mxu0 0.0
        %1591 = vmatmul.mubr.f32.gmra.mrb[0].mxu0 %v1469
        %v1592 = vpop.f32.mrb[0].mxu0
        %v1593 = vadd.f32 0.0, %v1592
        %v1594 = vpop.f32.mrb[0].mxu0
        %1595 = vdwg.mxu0
        %v1597 = vsel %vm619, %v1357, 0
        %v1600 = vsel %vm619, %v1362, 0
        %v1603 = vsel %vm619, %v1367, 0
        %v1606 = vsel %vm619, %v1372, 0
        %v1609 = vsel %vm619, %v1377, 0
        %v1612 = vsel %vm619, %v1382, 0
        %v1615 = vsel %vm619, %v1387, 0
        %v1618 = vsel %vm619, %v1392, 0
        %v1621 = vsel %vm619, %v1397, 0
        %v1624 = vsel %vm619, %v1402, 0
        %v1627 = vsel %vm619, %v1407, 0
        %v1630 = vsel %vm619, %v1412, 0
        %1632 = vmatprep.subr.mxu0 0.0
        %1633 = vmatpush1.msra.mxu0 %v1415
        %1634 = vmatprep.subr.mxu0 0.0
        %1635 = vmatpush1.msra.mxu0 %v1416
        %1636 = vmatprep.subr.mxu0 0.0
        %1637 = vmatpush1.msra.mxu0 %v1417
        %1638 = vmatprep.subr.mxu0 0.0
        %1639 = vmatpush1.msra.mxu0 %v1418
        %1640 = vmatprep.subr.mxu0 0.0
        %1641 = vmatpush1.msra.mxu0 0.0
        %1642 = vmatprep.subr.mxu0 0.0
        %1643 = vmatpush1.msra.mxu0 0.0
        %1644 = vmatprep.subr.mxu0 0.0
        %1645 = vmatpush1.msra.mxu0 0.0
        %1646 = vmatprep.subr.mxu0 0.0
        %1647 = vmatpush1.msra.mxu0 0.0
        %1648 = vmatprep.subr.mxu0 0.0
        %1649 = vmatpush1.msra.mxu0 0.0
        %1650 = vmatprep.subr.mxu0 0.0
        %1651 = vmatpush1.msra.mxu0 0.0
        %1652 = vmatprep.subr.mxu0 0.0
        %1653 = vmatpush1.msra.mxu0 0.0
        %1654 = vmatprep.subr.mxu0 0.0
        %1655 = vmatpush1.msra.mxu0 0.0
        %1656 = vmatprep.subr.mxu0 0.0
        %1657 = vmatpush1.msra.mxu0 0.0
        %1658 = vmatprep.subr.mxu0 0.0
        %1659 = vmatpush1.msra.mxu0 0.0
        %1660 = vmatprep.subr.mxu0 0.0
        %1661 = vmatpush1.msra.mxu0 0.0
        %1662 = vmatprep.subr.mxu0 0.0
        %1663 = vmatpush1.msra.mxu0 0.0
        %1664 = vmatprep.subr.mxu0 0.0
        %1665 = vmatpush1.msra.mxu0 0.0
        %1666 = vmatprep.subr.mxu0 0.0
        %1667 = vmatpush1.msra.mxu0 0.0
        %1668 = vmatprep.subr.mxu0 0.0
        %1669 = vmatpush1.msra.mxu0 0.0
        %1670 = vmatprep.subr.mxu0 0.0
        %1671 = vmatpush1.msra.mxu0 0.0
        %1672 = vmatprep.subr.mxu0 0.0
        %1673 = vmatpush1.msra.mxu0 0.0
        %1674 = vmatprep.subr.mxu0 0.0
        %1675 = vmatpush1.msra.mxu0 0.0
        %1676 = vmatprep.subr.mxu0 0.0
        %1677 = vmatpush1.msra.mxu0 0.0
        %1678 = vmatprep.subr.mxu0 0.0
        %1679 = vmatpush1.msra.mxu0 0.0
        %1680 = vmatprep.subr.mxu0 0.0
        %1681 = vmatpush1.msra.mxu0 0.0
        %1682 = vmatprep.subr.mxu0 0.0
        %1683 = vmatpush1.msra.mxu0 0.0
        %1684 = vmatprep.subr.mxu0 0.0
        %1685 = vmatpush1.msra.mxu0 0.0
        %1686 = vmatprep.subr.mxu0 0.0
        %1687 = vmatpush1.msra.mxu0 0.0
        %1688 = vmatprep.subr.mxu0 0.0
        %1689 = vmatpush1.msra.mxu0 0.0
        %1690 = vmatprep.subr.mxu0 0.0
        %1691 = vmatpush1.msra.mxu0 0.0
        %1692 = vmatprep.subr.mxu0 0.0
        %1693 = vmatpush1.msra.mxu0 0.0
        %1694 = vmatprep.subr.mxu0 0.0
        %1695 = vmatpush1.msra.mxu0 0.0
        %1696 = vmatprep.mubr.f32.mxu0 0.0
        %1697 = vmatmul.mubr.f32.gmra.mrb[0].mxu0 %v1597
        %v1698 = vpop.f32.mrb[0].mxu0
        %v1699 = vadd.f32 %v1538, %v1698
        %v1700 = vpop.f32.mrb[0].mxu0
        %1701 = vmatprep.mubr.f32.mxu0 0.0
        %1702 = vmatmul.mubr.f32.gmra.mrb[0].mxu0 %v1600
        %v1703 = vpop.f32.mrb[0].mxu0
        %v1704 = vadd.f32 %v1543, %v1703
        %v1705 = vpop.f32.mrb[0].mxu0
        %1706 = vmatprep.mubr.f32.mxu0 0.0
        %1707 = vmatmul.mubr.f32.gmra.mrb[0].mxu0 %v1603
        %v1708 = vpop.f32.mrb[0].mxu0
        %v1709 = vadd.f32 %v1548, %v1708
        %v1710 = vpop.f32.mrb[0].mxu0
        %1711 = vmatprep.mubr.f32.mxu0 0.0
        %1712 = vmatmul.mubr.f32.gmra.mrb[0].mxu0 %v1606
        %v1713 = vpop.f32.mrb[0].mxu0
        %v1714 = vadd.f32 %v1553, %v1713
        %v1715 = vpop.f32.mrb[0].mxu0
        %1716 = vmatprep.mubr.f32.mxu0 0.0
        %1717 = vmatmul.mubr.f32.gmra.mrb[0].mxu0 %v1609
        %v1718 = vpop.f32.mrb[0].mxu0
        %v1719 = vadd.f32 %v1558, %v1718
        %v1720 = vpop.f32.mrb[0].mxu0
        %1721 = vmatprep.mubr.f32.mxu0 0.0
        %1722 = vmatmul.mubr.f32.gmra.mrb[0].mxu0 %v1612
        %v1723 = vpop.f32.mrb[0].mxu0
        %v1724 = vadd.f32 %v1563, %v1723
        %v1725 = vpop.f32.mrb[0].mxu0
        %1726 = vmatprep.mubr.f32.mxu0 0.0
        %1727 = vmatmul.mubr.f32.gmra.mrb[0].mxu0 %v1615
        %v1728 = vpop.f32.mrb[0].mxu0
        %v1729 = vadd.f32 %v1568, %v1728
        %v1730 = vpop.f32.mrb[0].mxu0
        %1731 = vmatprep.mubr.f32.mxu0 0.0
        %1732 = vmatmul.mubr.f32.gmra.mrb[0].mxu0 %v1618
        %v1733 = vpop.f32.mrb[0].mxu0
        %v1734 = vadd.f32 %v1573, %v1733
        %v1735 = vpop.f32.mrb[0].mxu0
        %1736 = vmatprep.mubr.f32.mxu0 0.0
        %1737 = vmatmul.mubr.f32.gmra.mrb[0].mxu0 %v1621
        %v1738 = vpop.f32.mrb[0].mxu0
        %v1739 = vadd.f32 %v1578, %v1738
        %v1740 = vpop.f32.mrb[0].mxu0
        %1741 = vmatprep.mubr.f32.mxu0 0.0
        %1742 = vmatmul.mubr.f32.gmra.mrb[0].mxu0 %v1624
        %v1743 = vpop.f32.mrb[0].mxu0
        %v1744 = vadd.f32 %v1583, %v1743
        %v1745 = vpop.f32.mrb[0].mxu0
        %1746 = vmatprep.mubr.f32.mxu0 0.0
        %1747 = vmatmul.mubr.f32.gmra.mrb[0].mxu0 %v1627
        %v1748 = vpop.f32.mrb[0].mxu0
        %v1749 = vadd.f32 %v1588, %v1748
        %v1750 = vpop.f32.mrb[0].mxu0
        %1751 = vmatprep.mubr.f32.mxu0 0.0
        %1752 = vmatmul.mubr.f32.gmra.mrb[0].mxu0 %v1630
        %v1753 = vpop.f32.mrb[0].mxu0
        %v1754 = vadd.f32 %v1593, %v1753
        %v1755 = vpop.f32.mrb[0].mxu0
        %1756 = vdwg.mxu0
        %v1757 = vld [vmem:[%s7] sm:$0x1]
        %v1759 = vlaneseq
        %v1760 = vshrl.u32 %v1759, 7
        %v1761 = vsub.s32 0, %v1760
        %v1762 = vrot.slane %v1757, %v1761
        %v1764 = vadd.f32 %v1699, %v1762
        %v1765 = vadd.f32 %v1704, %v1762
        %v1766 = vadd.f32 %v1709, %v1762
        %v1767 = vadd.f32 %v1714, %v1762
        %v1768 = vadd.f32 %v1719, %v1762
        %v1769 = vadd.f32 %v1724, %v1762
        %v1770 = vadd.f32 %v1729, %v1762
        %v1771 = vadd.f32 %v1734, %v1762
        %v1772 = vadd.f32 %v1739, %v1762
        %v1773 = vadd.f32 %v1744, %v1762
        %v1774 = vadd.f32 %v1749, %v1762
        %v1775 = vadd.f32 %v1754, %v1762
        %v1776 = vmax.f32 %v1764, 0.0
        %v1777 = vmax.f32 %v1765, 0.0
        %v1778 = vmax.f32 %v1766, 0.0
        %v1779 = vmax.f32 %v1767, 0.0
        %v1780 = vmax.f32 %v1768, 0.0
        %v1781 = vmax.f32 %v1769, 0.0
        %v1782 = vmax.f32 %v1770, 0.0
        %v1783 = vmax.f32 %v1771, 0.0
        %v1784 = vmax.f32 %v1772, 0.0
        %v1785 = vmax.f32 %v1773, 0.0
        %v1786 = vmax.f32 %v1774, 0.0
        %v1787 = vmax.f32 %v1775, 0.0
        %v1788 = vmul.f32 %v1776, %v1776
        %v1789 = vmul.f32 %v1777, %v1777
        %v1790 = vmul.f32 %v1778, %v1778
        %v1791 = vmul.f32 %v1779, %v1779
        %v1792 = vmul.f32 %v1780, %v1780
        %v1793 = vmul.f32 %v1781, %v1781
        %v1794 = vmul.f32 %v1782, %v1782
        %v1795 = vmul.f32 %v1783, %v1783
        %v1796 = vmul.f32 %v1784, %v1784
        %v1797 = vmul.f32 %v1785, %v1785
        %v1798 = vmul.f32 %v1786, %v1786
        %v1799 = vmul.f32 %v1787, %v1787
        %v1800 = vsel %vm619, %v1788, 0.0
        %1801 = vadd.xlane.f32.xlu0 %v1800
        %v1802 = vpop.xlane.xlu0 %1801
        %v1803 = vsel %vm619, %v1789, 0.0
        %1804 = vadd.xlane.f32.xlu0 %v1803
        %v1805 = vpop.xlane.xlu0 %1804
        %v1806 = vsel %vm619, %v1790, 0.0
        %1807 = vadd.xlane.f32.xlu0 %v1806
        %v1808 = vpop.xlane.xlu0 %1807
        %v1809 = vsel %vm619, %v1791, 0.0
        %1810 = vadd.xlane.f32.xlu0 %v1809
        %v1811 = vpop.xlane.xlu0 %1810
        %v1812 = vsel %vm619, %v1792, 0.0
        %1813 = vadd.xlane.f32.xlu0 %v1812
        %v1814 = vpop.xlane.xlu0 %1813
        %v1815 = vsel %vm619, %v1793, 0.0
        %1816 = vadd.xlane.f32.xlu0 %v1815
        %v1817 = vpop.xlane.xlu0 %1816
        %v1818 = vsel %vm619, %v1794, 0.0
        %1819 = vadd.xlane.f32.xlu0 %v1818
        %v1820 = vpop.xlane.xlu0 %1819
        %v1821 = vsel %vm619, %v1795, 0.0
        %1822 = vadd.xlane.f32.xlu0 %v1821
        %v1823 = vpop.xlane.xlu0 %1822
        %v1824 = vsel %vm619, %v1796, 0.0
        %1825 = vadd.xlane.f32.xlu0 %v1824
        %v1826 = vpop.xlane.xlu0 %1825
        %v1827 = vsel %vm619, %v1797, 0.0
        %1828 = vadd.xlane.f32.xlu0 %v1827
        %v1829 = vpop.xlane.xlu0 %1828
        %v1830 = vsel %vm619, %v1798, 0.0
        %1831 = vadd.xlane.f32.xlu0 %v1830
        %v1832 = vpop.xlane.xlu0 %1831
        %v1833 = vsel %vm619, %v1799, 0.0
        %1834 = vadd.xlane.f32.xlu0 %v1833
        %v1835 = vpop.xlane.xlu0 %1834
        %v1836 = vmax.f32 %v1802, 1e-12
        %v1837 = vmax.f32 %v1805, 1e-12
        %v1838 = vmax.f32 %v1808, 1e-12
        %v1839 = vmax.f32 %v1811, 1e-12
        %v1840 = vmax.f32 %v1814, 1e-12
        %v1841 = vmax.f32 %v1817, 1e-12
        %v1842 = vmax.f32 %v1820, 1e-12
        %v1843 = vmax.f32 %v1823, 1e-12
        %v1844 = vmax.f32 %v1826, 1e-12
        %v1845 = vmax.f32 %v1829, 1e-12
        %v1846 = vmax.f32 %v1832, 1e-12
        %v1847 = vmax.f32 %v1835, 1e-12
        %v1848 = vrsqrt.pop %v1836
        %v1849 = vrsqrt.pop %v1837
        %v1850 = vrsqrt.pop %v1838
        %v1851 = vrsqrt.pop %v1839
        %v1852 = vrsqrt.pop %v1840
        %v1853 = vrsqrt.pop %v1841
        %v1854 = vrsqrt.pop %v1842
        %v1855 = vrsqrt.pop %v1843
        %v1856 = vrsqrt.pop %v1844
        %v1857 = vrsqrt.pop %v1845
        %v1858 = vrsqrt.pop %v1846
        %v1859 = vrsqrt.pop %v1847
        %v1860 = vmul.f32 %v1776, %v1848
        %v1861 = vmul.f32 %v1777, %v1849
        %v1862 = vmul.f32 %v1778, %v1850
        %v1863 = vmul.f32 %v1779, %v1851
        %v1864 = vmul.f32 %v1780, %v1852
        %v1865 = vmul.f32 %v1781, %v1853
        %v1866 = vmul.f32 %v1782, %v1854
        %v1867 = vmul.f32 %v1783, %v1855
        %v1868 = vmul.f32 %v1784, %v1856
        %v1869 = vmul.f32 %v1785, %v1857
        %v1870 = vmul.f32 %v1786, %v1858
        %v1871 = vmul.f32 %v1787, %v1859
        %v1873 = vsel %vm619, %v1860, 0
        %v1876 = vsel %vm619, %v1861, 0
        %v1879 = vsel %vm619, %v1862, 0
        %v1882 = vsel %vm619, %v1863, 0
        %v1885 = vsel %vm619, %v1864, 0
        %v1888 = vsel %vm619, %v1865, 0
        %v1891 = vsel %vm619, %v1866, 0
        %v1894 = vsel %vm619, %v1867, 0
        %v1897 = vsel %vm619, %v1868, 0
        %v1900 = vsel %vm619, %v1869, 0
        %v1903 = vsel %vm619, %v1870, 0
        %v1906 = vsel %vm619, %v1871, 0
        %1908 = vmatprep.subr.mxu0 0.0
        %1909 = vmatpush1.xpose.msra.mxu0 %v1885
        %1910 = vmatprep.subr.mxu0 0.0
        %1911 = vmatpush1.xpose.msra.mxu0 %v1888
        %1912 = vmatprep.subr.mxu0 0.0
        %1913 = vmatpush1.xpose.msra.mxu0 %v1891
        %1914 = vmatprep.subr.mxu0 0.0
        %1915 = vmatpush1.xpose.msra.mxu0 %v1894
        %1916 = vmatprep.subr.mxu0 0.0
        %1917 = vmatpush1.xpose.msra.mxu0 %v1897
        %1918 = vmatprep.subr.mxu0 0.0
        %1919 = vmatpush1.xpose.msra.mxu0 %v1900
        %1920 = vmatprep.subr.mxu0 0.0
        %1921 = vmatpush1.xpose.msra.mxu0 %v1903
        %1922 = vmatprep.subr.mxu0 0.0
        %1923 = vmatpush1.xpose.msra.mxu0 %v1906
        %1924 = vmatprep.subr.mxu0 0.0
        %1925 = vmatpush1.xpose.msra.mxu0 0.0
        %1926 = vmatprep.subr.mxu0 0.0
        %1927 = vmatpush1.xpose.msra.mxu0 0.0
        %1928 = vmatprep.subr.mxu0 0.0
        %1929 = vmatpush1.xpose.msra.mxu0 0.0
        %1930 = vmatprep.subr.mxu0 0.0
        %1931 = vmatpush1.xpose.msra.mxu0 0.0
        %1932 = vmatprep.subr.mxu0 0.0
        %1933 = vmatpush1.xpose.msra.mxu0 0.0
        %1934 = vmatprep.subr.mxu0 0.0
        %1935 = vmatpush1.xpose.msra.mxu0 0.0
        %1936 = vmatprep.subr.mxu0 0.0
        %1937 = vmatpush1.xpose.msra.mxu0 0.0
        %1938 = vmatprep.subr.mxu0 0.0
        %1939 = vmatpush1.xpose.msra.mxu0 0.0
        %1940 = vmatprep.subr.mxu0 0.0
        %1941 = vmatpush1.xpose.msra.mxu0 0.0
        %1942 = vmatprep.subr.mxu0 0.0
        %1943 = vmatpush1.xpose.msra.mxu0 0.0
        %1944 = vmatprep.subr.mxu0 0.0
        %1945 = vmatpush1.xpose.msra.mxu0 0.0
        %1946 = vmatprep.subr.mxu0 0.0
        %1947 = vmatpush1.xpose.msra.mxu0 0.0
        %1948 = vmatprep.subr.mxu0 0.0
        %1949 = vmatpush1.xpose.msra.mxu0 0.0
        %1950 = vmatprep.subr.mxu0 0.0
        %1951 = vmatpush1.xpose.msra.mxu0 0.0
        %1952 = vmatprep.subr.mxu0 0.0
        %1953 = vmatpush1.xpose.msra.mxu0 0.0
        %1954 = vmatprep.subr.mxu0 0.0
        %1955 = vmatpush1.xpose.msra.mxu0 0.0
        %1956 = vmatprep.subr.mxu0 0.0
        %1957 = vmatpush1.xpose.msra.mxu0 0.0
        %1958 = vmatprep.subr.mxu0 0.0
        %1959 = vmatpush1.xpose.msra.mxu0 0.0
        %1960 = vmatprep.subr.mxu0 0.0
        %1961 = vmatpush1.xpose.msra.mxu0 0.0
        %1962 = vmatprep.subr.mxu0 0.0
        %1963 = vmatpush1.xpose.msra.mxu0 0.0
        %1964 = vmatprep.subr.mxu0 0.0
        %1965 = vmatpush1.xpose.msra.mxu0 0.0
        %1966 = vmatprep.subr.mxu0 0.0
        %1967 = vmatpush1.xpose.msra.mxu0 0.0
        %1968 = vmatprep.subr.mxu0 0.0
        %1969 = vmatpush1.xpose.msra.mxu0 0.0
        %1970 = vmatprep.subr.mxu0 0.0
        %1971 = vmatpush1.xpose.msra.mxu0 0.0
        %1972 = vmatprep.mubr.f32.mxu0 0.0
        %1973 = vmatmul.mubr.f32.gmra.mrb[0].mxu0 %v1873
        %v1974 = vpop.f32.mrb[0].mxu0
        %v1975 = vadd.f32 0.0, %v1974
        %v1976 = vpop.f32.mrb[0].mxu0
        %1977 = vmatprep.mubr.f32.mxu0 0.0
        %1978 = vmatmul.mubr.f32.gmra.mrb[0].mxu0 %v1876
        %v1979 = vpop.f32.mrb[0].mxu0
        %v1980 = vadd.f32 0.0, %v1979
        %v1981 = vpop.f32.mrb[0].mxu0
        %1982 = vmatprep.mubr.f32.mxu0 0.0
        %1983 = vmatmul.mubr.f32.gmra.mrb[0].mxu0 %v1879
        %v1984 = vpop.f32.mrb[0].mxu0
        %v1985 = vadd.f32 0.0, %v1984
        %v1986 = vpop.f32.mrb[0].mxu0
        %1987 = vmatprep.mubr.f32.mxu0 0.0
        %1988 = vmatmul.mubr.f32.gmra.mrb[0].mxu0 %v1882
        %v1989 = vpop.f32.mrb[0].mxu0
        %v1990 = vadd.f32 0.0, %v1989
        %v1991 = vpop.f32.mrb[0].mxu0
        %1992 = vdwg.mxu0
        %1993 = vmatprep.subr.mxu0 0.0
        %1994 = vmatpush1.xpose.msra.mxu0 %v1873
        %1995 = vmatprep.subr.mxu0 0.0
        %1996 = vmatpush1.xpose.msra.mxu0 %v1876
        %1997 = vmatprep.subr.mxu0 0.0
        %1998 = vmatpush1.xpose.msra.mxu0 %v1879
        %1999 = vmatprep.subr.mxu0 0.0
        %2000 = vmatpush1.xpose.msra.mxu0 %v1882
        %2001 = vmatprep.subr.mxu0 0.0
        %2002 = vmatpush1.xpose.msra.mxu0 0.0
        %2003 = vmatprep.subr.mxu0 0.0
        %2004 = vmatpush1.xpose.msra.mxu0 0.0
        %2005 = vmatprep.subr.mxu0 0.0
        %2006 = vmatpush1.xpose.msra.mxu0 0.0
        %2007 = vmatprep.subr.mxu0 0.0
        %2008 = vmatpush1.xpose.msra.mxu0 0.0
        %2009 = vmatprep.subr.mxu0 0.0
        %2010 = vmatpush1.xpose.msra.mxu0 0.0
        %2011 = vmatprep.subr.mxu0 0.0
        %2012 = vmatpush1.xpose.msra.mxu0 0.0
        %2013 = vmatprep.subr.mxu0 0.0
        %2014 = vmatpush1.xpose.msra.mxu0 0.0
        %2015 = vmatprep.subr.mxu0 0.0
        %2016 = vmatpush1.xpose.msra.mxu0 0.0
        %2017 = vmatprep.subr.mxu0 0.0
        %2018 = vmatpush1.xpose.msra.mxu0 0.0
        %2019 = vmatprep.subr.mxu0 0.0
        %2020 = vmatpush1.xpose.msra.mxu0 0.0
        %2021 = vmatprep.subr.mxu0 0.0
        %2022 = vmatpush1.xpose.msra.mxu0 0.0
        %2023 = vmatprep.subr.mxu0 0.0
        %2024 = vmatpush1.xpose.msra.mxu0 0.0
        %2025 = vmatprep.subr.mxu0 0.0
        %2026 = vmatpush1.xpose.msra.mxu0 0.0
        %2027 = vmatprep.subr.mxu0 0.0
        %2028 = vmatpush1.xpose.msra.mxu0 0.0
        %2029 = vmatprep.subr.mxu0 0.0
        %2030 = vmatpush1.xpose.msra.mxu0 0.0
        %2031 = vmatprep.subr.mxu0 0.0
        %2032 = vmatpush1.xpose.msra.mxu0 0.0
        %2033 = vmatprep.subr.mxu0 0.0
        %2034 = vmatpush1.xpose.msra.mxu0 0.0
        %2035 = vmatprep.subr.mxu0 0.0
        %2036 = vmatpush1.xpose.msra.mxu0 0.0
        %2037 = vmatprep.subr.mxu0 0.0
        %2038 = vmatpush1.xpose.msra.mxu0 0.0
        %2039 = vmatprep.subr.mxu0 0.0
        %2040 = vmatpush1.xpose.msra.mxu0 0.0
        %2041 = vmatprep.subr.mxu0 0.0
        %2042 = vmatpush1.xpose.msra.mxu0 0.0
        %2043 = vmatprep.subr.mxu0 0.0
        %2044 = vmatpush1.xpose.msra.mxu0 0.0
        %2045 = vmatprep.subr.mxu0 0.0
        %2046 = vmatpush1.xpose.msra.mxu0 0.0
        %2047 = vmatprep.subr.mxu0 0.0
        %2048 = vmatpush1.xpose.msra.mxu0 0.0
        %2049 = vmatprep.subr.mxu0 0.0
        %2050 = vmatpush1.xpose.msra.mxu0 0.0
        %2051 = vmatprep.subr.mxu0 0.0
        %2052 = vmatpush1.xpose.msra.mxu0 0.0
        %2053 = vmatprep.subr.mxu0 0.0
        %2054 = vmatpush1.xpose.msra.mxu0 0.0
        %2055 = vmatprep.subr.mxu0 0.0
        %2056 = vmatpush1.xpose.msra.mxu0 0.0
        %2057 = vmatprep.mubr.f32.mxu0 0.0
        %2058 = vmatmul.mubr.f32.gmra.mrb[0].mxu0 %v1885
        %v2059 = vpop.f32.mrb[0].mxu0
        %v2060 = vadd.f32 0.0, %v2059
        %v2061 = vpop.f32.mrb[0].mxu0
        %2062 = vmatprep.mubr.f32.mxu0 0.0
        %2063 = vmatmul.mubr.f32.gmra.mrb[0].mxu0 %v1888
        %v2064 = vpop.f32.mrb[0].mxu0
        %v2065 = vadd.f32 0.0, %v2064
        %v2066 = vpop.f32.mrb[0].mxu0
        %2067 = vmatprep.mubr.f32.mxu0 0.0
        %2068 = vmatmul.mubr.f32.gmra.mrb[0].mxu0 %v1891
        %v2069 = vpop.f32.mrb[0].mxu0
        %v2070 = vadd.f32 0.0, %v2069
        %v2071 = vpop.f32.mrb[0].mxu0
        %2072 = vmatprep.mubr.f32.mxu0 0.0
        %2073 = vmatmul.mubr.f32.gmra.mrb[0].mxu0 %v1894
        %v2074 = vpop.f32.mrb[0].mxu0
        %v2075 = vadd.f32 0.0, %v2074
        %v2076 = vpop.f32.mrb[0].mxu0
        %2077 = vmatprep.mubr.f32.mxu0 0.0
        %2078 = vmatmul.mubr.f32.gmra.mrb[0].mxu0 %v1897
        %v2079 = vpop.f32.mrb[0].mxu0
        %v2080 = vadd.f32 0.0, %v2079
        %v2081 = vpop.f32.mrb[0].mxu0
        %2082 = vmatprep.mubr.f32.mxu0 0.0
        %2083 = vmatmul.mubr.f32.gmra.mrb[0].mxu0 %v1900
        %v2084 = vpop.f32.mrb[0].mxu0
        %v2085 = vadd.f32 0.0, %v2084
        %v2086 = vpop.f32.mrb[0].mxu0
        %2087 = vmatprep.mubr.f32.mxu0 0.0
        %2088 = vmatmul.mubr.f32.gmra.mrb[0].mxu0 %v1903
        %v2089 = vpop.f32.mrb[0].mxu0
        %v2090 = vadd.f32 0.0, %v2089
        %v2091 = vpop.f32.mrb[0].mxu0
        %2092 = vmatprep.mubr.f32.mxu0 0.0
        %2093 = vmatmul.mubr.f32.gmra.mrb[0].mxu0 %v1906
        %v2094 = vpop.f32.mrb[0].mxu0
        %v2095 = vadd.f32 0.0, %v2094
        %v2096 = vpop.f32.mrb[0].mxu0
        %2097 = vdwg.mxu0
        %v2098 = vmul.f32 %v1975, 1.442695
        %v2099 = vpow.pop %v2098
        %v2100 = vmul.f32 %v1980, 1.442695
        %v2101 = vpow.pop %v2100
        %v2102 = vmul.f32 %v1985, 1.442695
        %v2103 = vpow.pop %v2102
        %v2104 = vmul.f32 %v1990, 1.442695
        %v2105 = vpow.pop %v2104
        %v2106 = vmul.f32 %v2099, %v594
        %v2107 = vmul.f32 %v2101, %v595
        %v2108 = vmul.f32 %v2103, %v596
        %v2109 = vmul.f32 %v2105, %v597
        %v2110 = vmul.f32 %v2060, 1.442695
        %v2111 = vpow.pop %v2110
        %v2112 = vmul.f32 %v2065, 1.442695
        %v2113 = vpow.pop %v2112
        %v2114 = vmul.f32 %v2070, 1.442695
        %v2115 = vpow.pop %v2114
        %v2116 = vmul.f32 %v2075, 1.442695
        %v2117 = vpow.pop %v2116
        %v2118 = vmul.f32 %v2080, 1.442695
        %v2119 = vpow.pop %v2118
        %v2120 = vmul.f32 %v2085, 1.442695
        %v2121 = vpow.pop %v2120
        %v2122 = vmul.f32 %v2090, 1.442695
        %v2123 = vpow.pop %v2122
        %v2124 = vmul.f32 %v2095, 1.442695
        %v2125 = vpow.pop %v2124
        %v2126 = vmul.f32 %v2111, %v598
        %v2127 = vmul.f32 %v2113, %v599
        %v2128 = vmul.f32 %v2115, %v600
        %v2129 = vmul.f32 %v2117, %v601
        %v2130 = vmul.f32 %v2119, %v602
        %v2131 = vmul.f32 %v2121, %v603
        %v2132 = vmul.f32 %v2123, %v604
        %v2133 = vmul.f32 %v2125, %v605
        %v2134 = vsel %vm954, %v2106, 0.0
        %v2135 = vsel %vm954, %v2107, 0.0
        %v2136 = vadd.f32 %v2134, %v2135
        %v2137 = vsel %vm954, %v2108, 0.0
        %v2138 = vadd.f32 %v2136, %v2137
        %v2139 = vsel %vm954, %v2109, 0.0
        %v2140 = vadd.f32 %v2138, %v2139
        %v2141 = vrot.slane %v2140, 4
        %v2142 = vadd.f32 %v2140, %v2141
        %v2143 = vrot.slane %v2142, 2
        %v2144 = vadd.f32 %v2142, %v2143
        %v2145 = vrot.slane %v2144, 1
        %v2146 = vadd.f32 %v2144, %v2145
        %v2147 = vrcp.pop %v2146
        %v2148 = vmul.f32 %v2106, %v2147
        %v2149 = vmul.f32 %v2107, %v2147
        %v2150 = vmul.f32 %v2108, %v2147
        %v2151 = vmul.f32 %v2109, %v2147
        %v2152 = vsel %vm619, %v2126, 0.0
        %v2153 = vsel %vm619, %v2127, 0.0
        %v2154 = vadd.f32 %v2152, %v2153
        %v2155 = vsel %vm619, %v2128, 0.0
        %v2156 = vadd.f32 %v2154, %v2155
        %v2157 = vsel %vm619, %v2129, 0.0
        %v2158 = vadd.f32 %v2156, %v2157
        %v2159 = vsel %vm619, %v2130, 0.0
        %v2160 = vadd.f32 %v2158, %v2159
        %v2161 = vsel %vm619, %v2131, 0.0
        %v2162 = vadd.f32 %v2160, %v2161
        %v2163 = vsel %vm619, %v2132, 0.0
        %v2164 = vadd.f32 %v2162, %v2163
        %v2165 = vsel %vm619, %v2133, 0.0
        %v2166 = vadd.f32 %v2164, %v2165
        %v2167 = vrot.slane %v2166, 4
        %v2168 = vadd.f32 %v2166, %v2167
        %v2169 = vrot.slane %v2168, 2
        %v2170 = vadd.f32 %v2168, %v2169
        %v2171 = vrot.slane %v2170, 1
        %v2172 = vadd.f32 %v2170, %v2171
        %v2173 = vrcp.pop %v2172
        %v2174 = vmul.f32 %v2126, %v2173
        %v2175 = vmul.f32 %v2127, %v2173
        %v2176 = vmul.f32 %v2128, %v2173
        %v2177 = vmul.f32 %v2129, %v2173
        %v2178 = vmul.f32 %v2130, %v2173
        %v2179 = vmul.f32 %v2131, %v2173
        %v2180 = vmul.f32 %v2132, %v2173
        %v2181 = vmul.f32 %v2133, %v2173
        %v2183 = vsel %vm954, %v2148, 0
        %v2186 = vsel %vm954, %v2149, 0
        %v2189 = vsel %vm954, %v2150, 0
        %v2192 = vsel %vm954, %v2151, 0
        %2194 = vmatprep.subr.mxu0 0.0
        %2195 = vmatpush1.msra.mxu0 %v1864
        %2196 = vmatprep.subr.mxu0 0.0
        %2197 = vmatpush1.msra.mxu0 %v1865
        %2198 = vmatprep.subr.mxu0 0.0
        %2199 = vmatpush1.msra.mxu0 %v1866
        %2200 = vmatprep.subr.mxu0 0.0
        %2201 = vmatpush1.msra.mxu0 %v1867
        %2202 = vmatprep.subr.mxu0 0.0
        %2203 = vmatpush1.msra.mxu0 %v1868
        %2204 = vmatprep.subr.mxu0 0.0
        %2205 = vmatpush1.msra.mxu0 %v1869
        %2206 = vmatprep.subr.mxu0 0.0
        %2207 = vmatpush1.msra.mxu0 %v1870
        %2208 = vmatprep.subr.mxu0 0.0
        %2209 = vmatpush1.msra.mxu0 %v1871
        %2210 = vmatprep.subr.mxu0 0.0
        %2211 = vmatpush1.msra.mxu0 0.0
        %2212 = vmatprep.subr.mxu0 0.0
        %2213 = vmatpush1.msra.mxu0 0.0
        %2214 = vmatprep.subr.mxu0 0.0
        %2215 = vmatpush1.msra.mxu0 0.0
        %2216 = vmatprep.subr.mxu0 0.0
        %2217 = vmatpush1.msra.mxu0 0.0
        %2218 = vmatprep.subr.mxu0 0.0
        %2219 = vmatpush1.msra.mxu0 0.0
        %2220 = vmatprep.subr.mxu0 0.0
        %2221 = vmatpush1.msra.mxu0 0.0
        %2222 = vmatprep.subr.mxu0 0.0
        %2223 = vmatpush1.msra.mxu0 0.0
        %2224 = vmatprep.subr.mxu0 0.0
        %2225 = vmatpush1.msra.mxu0 0.0
        %2226 = vmatprep.subr.mxu0 0.0
        %2227 = vmatpush1.msra.mxu0 0.0
        %2228 = vmatprep.subr.mxu0 0.0
        %2229 = vmatpush1.msra.mxu0 0.0
        %2230 = vmatprep.subr.mxu0 0.0
        %2231 = vmatpush1.msra.mxu0 0.0
        %2232 = vmatprep.subr.mxu0 0.0
        %2233 = vmatpush1.msra.mxu0 0.0
        %2234 = vmatprep.subr.mxu0 0.0
        %2235 = vmatpush1.msra.mxu0 0.0
        %2236 = vmatprep.subr.mxu0 0.0
        %2237 = vmatpush1.msra.mxu0 0.0
        %2238 = vmatprep.subr.mxu0 0.0
        %2239 = vmatpush1.msra.mxu0 0.0
        %2240 = vmatprep.subr.mxu0 0.0
        %2241 = vmatpush1.msra.mxu0 0.0
        %2242 = vmatprep.subr.mxu0 0.0
        %2243 = vmatpush1.msra.mxu0 0.0
        %2244 = vmatprep.subr.mxu0 0.0
        %2245 = vmatpush1.msra.mxu0 0.0
        %2246 = vmatprep.subr.mxu0 0.0
        %2247 = vmatpush1.msra.mxu0 0.0
        %2248 = vmatprep.subr.mxu0 0.0
        %2249 = vmatpush1.msra.mxu0 0.0
        %2250 = vmatprep.subr.mxu0 0.0
        %2251 = vmatpush1.msra.mxu0 0.0
        %2252 = vmatprep.subr.mxu0 0.0
        %2253 = vmatpush1.msra.mxu0 0.0
        %2254 = vmatprep.subr.mxu0 0.0
        %2255 = vmatpush1.msra.mxu0 0.0
        %2256 = vmatprep.subr.mxu0 0.0
        %2257 = vmatpush1.msra.mxu0 0.0
        %2258 = vmatprep.mubr.f32.mxu0 0.0
        %2259 = vmatmul.mubr.f32.gmra.mrb[0].mxu0 %v2183
        %v2260 = vpop.f32.mrb[0].mxu0
        %v2261 = vadd.f32 0.0, %v2260
        %v2262 = vpop.f32.mrb[0].mxu0
        %2263 = vmatprep.mubr.f32.mxu0 0.0
        %2264 = vmatmul.mubr.f32.gmra.mrb[0].mxu0 %v2186
        %v2265 = vpop.f32.mrb[0].mxu0
        %v2266 = vadd.f32 0.0, %v2265
        %v2267 = vpop.f32.mrb[0].mxu0
        %2268 = vmatprep.mubr.f32.mxu0 0.0
        %2269 = vmatmul.mubr.f32.gmra.mrb[0].mxu0 %v2189
        %v2270 = vpop.f32.mrb[0].mxu0
        %v2271 = vadd.f32 0.0, %v2270
        %v2272 = vpop.f32.mrb[0].mxu0
        %2273 = vmatprep.mubr.f32.mxu0 0.0
        %2274 = vmatmul.mubr.f32.gmra.mrb[0].mxu0 %v2192
        %v2275 = vpop.f32.mrb[0].mxu0
        %v2276 = vadd.f32 0.0, %v2275
        %v2277 = vpop.f32.mrb[0].mxu0
        %2278 = vdwg.mxu0
        %v2279 = vsub.f32 %v1860, %v2261
        %v2280 = vsub.f32 %v1861, %v2266
        %v2281 = vsub.f32 %v1862, %v2271
        %v2282 = vsub.f32 %v1863, %v2276
        %2283 = vst.msk [vmem:[#allocation2] sm:$0xff] %vm619, %v2279
        %2284 = vst.msk [vmem:[#allocation2 + $0x8] sm:$0xff] %vm619, %v2280
        %2285 = vst.msk [vmem:[#allocation2 + $0x10] sm:$0xff] %vm619, %v2281
        %2286 = vst.msk [vmem:[#allocation2 + $0x18] sm:$0xff] %vm619, %v2282
        %v2288 = vsel %vm619, %v2174, 0
        %v2291 = vsel %vm619, %v2175, 0
        %v2294 = vsel %vm619, %v2176, 0
        %v2297 = vsel %vm619, %v2177, 0
        %v2300 = vsel %vm619, %v2178, 0
        %v2303 = vsel %vm619, %v2179, 0
        %v2306 = vsel %vm619, %v2180, 0
        %v2309 = vsel %vm619, %v2181, 0
        %2311 = vmatprep.subr.mxu0 0.0
        %2312 = vmatpush1.msra.mxu0 %v1860
        %2313 = vmatprep.subr.mxu0 0.0
        %2314 = vmatpush1.msra.mxu0 %v1861
        %2315 = vmatprep.subr.mxu0 0.0
        %2316 = vmatpush1.msra.mxu0 %v1862
        %2317 = vmatprep.subr.mxu0 0.0
        %2318 = vmatpush1.msra.mxu0 %v1863
        %2319 = vmatprep.subr.mxu0 0.0
        %2320 = vmatpush1.msra.mxu0 0.0
        %2321 = vmatprep.subr.mxu0 0.0
        %2322 = vmatpush1.msra.mxu0 0.0
        %2323 = vmatprep.subr.mxu0 0.0
        %2324 = vmatpush1.msra.mxu0 0.0
        %2325 = vmatprep.subr.mxu0 0.0
        %2326 = vmatpush1.msra.mxu0 0.0
        %2327 = vmatprep.subr.mxu0 0.0
        %2328 = vmatpush1.msra.mxu0 0.0
        %2329 = vmatprep.subr.mxu0 0.0
        %2330 = vmatpush1.msra.mxu0 0.0
        %2331 = vmatprep.subr.mxu0 0.0
        %2332 = vmatpush1.msra.mxu0 0.0
        %2333 = vmatprep.subr.mxu0 0.0
        %2334 = vmatpush1.msra.mxu0 0.0
        %2335 = vmatprep.subr.mxu0 0.0
        %2336 = vmatpush1.msra.mxu0 0.0
        %2337 = vmatprep.subr.mxu0 0.0
        %2338 = vmatpush1.msra.mxu0 0.0
        %2339 = vmatprep.subr.mxu0 0.0
        %2340 = vmatpush1.msra.mxu0 0.0
        %2341 = vmatprep.subr.mxu0 0.0
        %2342 = vmatpush1.msra.mxu0 0.0
        %2343 = vmatprep.subr.mxu0 0.0
        %2344 = vmatpush1.msra.mxu0 0.0
        %2345 = vmatprep.subr.mxu0 0.0
        %2346 = vmatpush1.msra.mxu0 0.0
        %2347 = vmatprep.subr.mxu0 0.0
        %2348 = vmatpush1.msra.mxu0 0.0
        %2349 = vmatprep.subr.mxu0 0.0
        %2350 = vmatpush1.msra.mxu0 0.0
        %2351 = vmatprep.subr.mxu0 0.0
        %2352 = vmatpush1.msra.mxu0 0.0
        %2353 = vmatprep.subr.mxu0 0.0
        %2354 = vmatpush1.msra.mxu0 0.0
        %2355 = vmatprep.subr.mxu0 0.0
        %2356 = vmatpush1.msra.mxu0 0.0
        %2357 = vmatprep.subr.mxu0 0.0
        %2358 = vmatpush1.msra.mxu0 0.0
        %2359 = vmatprep.subr.mxu0 0.0
        %2360 = vmatpush1.msra.mxu0 0.0
        %2361 = vmatprep.subr.mxu0 0.0
        %2362 = vmatpush1.msra.mxu0 0.0
        %2363 = vmatprep.subr.mxu0 0.0
        %2364 = vmatpush1.msra.mxu0 0.0
        %2365 = vmatprep.subr.mxu0 0.0
        %2366 = vmatpush1.msra.mxu0 0.0
        %2367 = vmatprep.subr.mxu0 0.0
        %2368 = vmatpush1.msra.mxu0 0.0
        %2369 = vmatprep.subr.mxu0 0.0
        %2370 = vmatpush1.msra.mxu0 0.0
        %2371 = vmatprep.subr.mxu0 0.0
        %2372 = vmatpush1.msra.mxu0 0.0
        %2373 = vmatprep.subr.mxu0 0.0
        %2374 = vmatpush1.msra.mxu0 0.0
        %2375 = vmatprep.mubr.f32.mxu0 0.0
        %2376 = vmatmul.mubr.f32.gmra.mrb[0].mxu0 %v2288
        %v2377 = vpop.f32.mrb[0].mxu0
        %v2378 = vadd.f32 0.0, %v2377
        %v2379 = vpop.f32.mrb[0].mxu0
        %2380 = vmatprep.mubr.f32.mxu0 0.0
        %2381 = vmatmul.mubr.f32.gmra.mrb[0].mxu0 %v2291
        %v2382 = vpop.f32.mrb[0].mxu0
        %v2383 = vadd.f32 0.0, %v2382
        %v2384 = vpop.f32.mrb[0].mxu0
        %2385 = vmatprep.mubr.f32.mxu0 0.0
        %2386 = vmatmul.mubr.f32.gmra.mrb[0].mxu0 %v2294
        %v2387 = vpop.f32.mrb[0].mxu0
        %v2388 = vadd.f32 0.0, %v2387
        %v2389 = vpop.f32.mrb[0].mxu0
        %2390 = vmatprep.mubr.f32.mxu0 0.0
        %2391 = vmatmul.mubr.f32.gmra.mrb[0].mxu0 %v2297
        %v2392 = vpop.f32.mrb[0].mxu0
        %v2393 = vadd.f32 0.0, %v2392
        %v2394 = vpop.f32.mrb[0].mxu0
        %2395 = vmatprep.mubr.f32.mxu0 0.0
        %2396 = vmatmul.mubr.f32.gmra.mrb[0].mxu0 %v2300
        %v2397 = vpop.f32.mrb[0].mxu0
        %v2398 = vadd.f32 0.0, %v2397
        %v2399 = vpop.f32.mrb[0].mxu0
        %2400 = vmatprep.mubr.f32.mxu0 0.0
        %2401 = vmatmul.mubr.f32.gmra.mrb[0].mxu0 %v2303
        %v2402 = vpop.f32.mrb[0].mxu0
        %v2403 = vadd.f32 0.0, %v2402
        %v2404 = vpop.f32.mrb[0].mxu0
        %2405 = vmatprep.mubr.f32.mxu0 0.0
        %2406 = vmatmul.mubr.f32.gmra.mrb[0].mxu0 %v2306
        %v2407 = vpop.f32.mrb[0].mxu0
        %v2408 = vadd.f32 0.0, %v2407
        %v2409 = vpop.f32.mrb[0].mxu0
        %2410 = vmatprep.mubr.f32.mxu0 0.0
        %2411 = vmatmul.mubr.f32.gmra.mrb[0].mxu0 %v2309
        %v2412 = vpop.f32.mrb[0].mxu0
        %v2413 = vadd.f32 0.0, %v2412
        %v2414 = vpop.f32.mrb[0].mxu0
        %2415 = vdwg.mxu0
        %v2416 = vsub.f32 %v1864, %v2378
        %v2417 = vsub.f32 %v1865, %v2383
        %v2418 = vsub.f32 %v1866, %v2388
        %v2419 = vsub.f32 %v1867, %v2393
        %v2420 = vsub.f32 %v1868, %v2398
        %v2421 = vsub.f32 %v1869, %v2403
        %v2422 = vsub.f32 %v1870, %v2408
        %v2423 = vsub.f32 %v1871, %v2413
        %2424 = vst.msk [vmem:[#allocation2 + $0x20] sm:$0xff] %vm619, %v2416
        %2425 = vst.msk [vmem:[#allocation2 + $0x28] sm:$0xff] %vm619, %v2417
        %2426 = vst.msk [vmem:[#allocation2 + $0x30] sm:$0xff] %vm619, %v2418
        %2427 = vst.msk [vmem:[#allocation2 + $0x38] sm:$0xff] %vm619, %v2419
        %2428 = vst.msk [vmem:[#allocation2 + $0x40] sm:$0xff] %vm619, %v2420
        %2429 = vst.msk [vmem:[#allocation2 + $0x48] sm:$0xff] %vm619, %v2421
        %2430 = vst.msk [vmem:[#allocation2 + $0x50] sm:$0xff] %vm619, %v2422
        %2431 = vst.msk [vmem:[#allocation2 + $0x58] sm:$0xff] %vm619, %v2423
        %2432 = vmatprep.subr.mxu0 0.0
        %2433 = vmatpush1.msra.mxu0 %v1776
        %2434 = vmatprep.subr.mxu0 0.0
        %2435 = vmatpush1.msra.mxu0 %v1777
        %2436 = vmatprep.subr.mxu0 0.0
        %2437 = vmatpush1.msra.mxu0 %v1778
        %2438 = vmatprep.subr.mxu0 0.0
        %2439 = vmatpush1.msra.mxu0 %v1779
        %2440 = vmatprep.subr.mxu0 0.0
        %2441 = vmatpush1.msra.mxu0 %v1780
        %2442 = vmatprep.subr.mxu0 0.0
        %2443 = vmatpush1.msra.mxu0 %v1781
        %2444 = vmatprep.subr.mxu0 0.0
        %2445 = vmatpush1.msra.mxu0 %v1782
        %2446 = vmatprep.subr.mxu0 0.0
        %2447 = vmatpush1.msra.mxu0 %v1783
        %2448 = vmatprep.subr.mxu0 0.0
        %2449 = vmatpush1.msra.mxu0 %v1784
        %2450 = vmatprep.subr.mxu0 0.0
        %2451 = vmatpush1.msra.mxu0 %v1785
        %2452 = vmatprep.subr.mxu0 0.0
        %2453 = vmatpush1.msra.mxu0 %v1786
        %2454 = vmatprep.subr.mxu0 0.0
        %2455 = vmatpush1.msra.mxu0 %v1787
        %2456 = vmatprep.subr.mxu0 0.0
        %2457 = vmatpush1.msra.mxu0 0.0
        %2458 = vmatprep.subr.mxu0 0.0
        %2459 = vmatpush1.msra.mxu0 0.0
        %2460 = vmatprep.subr.mxu0 0.0
        %2461 = vmatpush1.msra.mxu0 0.0
        %2462 = vmatprep.subr.mxu0 0.0
        %2463 = vmatpush1.msra.mxu0 0.0
        %2464 = vmatprep.subr.mxu0 0.0
        %2465 = vmatpush1.msra.mxu0 0.0
        %2466 = vmatprep.subr.mxu0 0.0
        %2467 = vmatpush1.msra.mxu0 0.0
        %2468 = vmatprep.subr.mxu0 0.0
        %2469 = vmatpush1.msra.mxu0 0.0
        %2470 = vmatprep.subr.mxu0 0.0
        %2471 = vmatpush1.msra.mxu0 0.0
        %2472 = vmatprep.subr.mxu0 0.0
        %2473 = vmatpush1.msra.mxu0 0.0
        %2474 = vmatprep.subr.mxu0 0.0
        %2475 = vmatpush1.msra.mxu0 0.0
        %2476 = vmatprep.subr.mxu0 0.0
        %2477 = vmatpush1.msra.mxu0 0.0
        %2478 = vmatprep.subr.mxu0 0.0
        %2479 = vmatpush1.msra.mxu0 0.0
        %2480 = vmatprep.subr.mxu0 0.0
        %2481 = vmatpush1.msra.mxu0 0.0
        %2482 = vmatprep.subr.mxu0 0.0
        %2483 = vmatpush1.msra.mxu0 0.0
        %2484 = vmatprep.subr.mxu0 0.0
        %2485 = vmatpush1.msra.mxu0 0.0
        %2486 = vmatprep.subr.mxu0 0.0
        %2487 = vmatpush1.msra.mxu0 0.0
        %2488 = vmatprep.subr.mxu0 0.0
        %2489 = vmatpush1.msra.mxu0 0.0
        %2490 = vmatprep.subr.mxu0 0.0
        %2491 = vmatpush1.msra.mxu0 0.0
        %2492 = vmatprep.subr.mxu0 0.0
        %2493 = vmatpush1.msra.mxu0 0.0
        %2494 = vmatprep.subr.mxu0 0.0
        %2495 = vmatpush1.msra.mxu0 0.0
        %2496 = vmatprep.mubr.f32.mxu0 0.0
        %2497 = vmatmul.mubr.f32.gmra.mrb[0].mxu0 %v1255
        %v2498 = vpop.f32.mrb[0].mxu0
        %v2499 = vadd.f32 0.0, %v2498
        %v2500 = vpop.f32.mrb[0].mxu0
        %2501 = vmatprep.mubr.f32.mxu0 0.0
        %2502 = vmatmul.mubr.f32.gmra.mrb[0].mxu0 %v1258
        %v2503 = vpop.f32.mrb[0].mxu0
        %v2504 = vadd.f32 0.0, %v2503
        %v2505 = vpop.f32.mrb[0].mxu0
        %2506 = vmatprep.mubr.f32.mxu0 0.0
        %2507 = vmatmul.mubr.f32.gmra.mrb[0].mxu0 %v1261
        %v2508 = vpop.f32.mrb[0].mxu0
        %v2509 = vadd.f32 0.0, %v2508
        %v2510 = vpop.f32.mrb[0].mxu0
        %2511 = vmatprep.mubr.f32.mxu0 0.0
        %2512 = vmatmul.mubr.f32.gmra.mrb[0].mxu0 %v1264
        %v2513 = vpop.f32.mrb[0].mxu0
        %v2514 = vadd.f32 0.0, %v2513
        %v2515 = vpop.f32.mrb[0].mxu0
        %2516 = vmatprep.mubr.f32.mxu0 0.0
        %2517 = vmatmul.mubr.f32.gmra.mrb[0].mxu0 %v1267
        %v2518 = vpop.f32.mrb[0].mxu0
        %v2519 = vadd.f32 0.0, %v2518
        %v2520 = vpop.f32.mrb[0].mxu0
        %2521 = vmatprep.mubr.f32.mxu0 0.0
        %2522 = vmatmul.mubr.f32.gmra.mrb[0].mxu0 %v1270
        %v2523 = vpop.f32.mrb[0].mxu0
        %v2524 = vadd.f32 0.0, %v2523
        %v2525 = vpop.f32.mrb[0].mxu0
        %2526 = vmatprep.mubr.f32.mxu0 0.0
        %2527 = vmatmul.mubr.f32.gmra.mrb[0].mxu0 %v1273
        %v2528 = vpop.f32.mrb[0].mxu0
        %v2529 = vadd.f32 0.0, %v2528
        %v2530 = vpop.f32.mrb[0].mxu0
        %2531 = vmatprep.mubr.f32.mxu0 0.0
        %2532 = vmatmul.mubr.f32.gmra.mrb[0].mxu0 %v1276
        %v2533 = vpop.f32.mrb[0].mxu0
        %v2534 = vadd.f32 0.0, %v2533
        %v2535 = vpop.f32.mrb[0].mxu0
        %2536 = vmatprep.mubr.f32.mxu0 0.0
        %2537 = vmatmul.mubr.f32.gmra.mrb[0].mxu0 %v1279
        %v2538 = vpop.f32.mrb[0].mxu0
        %v2539 = vadd.f32 0.0, %v2538
        %v2540 = vpop.f32.mrb[0].mxu0
        %2541 = vmatprep.mubr.f32.mxu0 0.0
        %2542 = vmatmul.mubr.f32.gmra.mrb[0].mxu0 %v1282
        %v2543 = vpop.f32.mrb[0].mxu0
        %v2544 = vadd.f32 0.0, %v2543
        %v2545 = vpop.f32.mrb[0].mxu0
        %2546 = vmatprep.mubr.f32.mxu0 0.0
        %2547 = vmatmul.mubr.f32.gmra.mrb[0].mxu0 %v1285
        %v2548 = vpop.f32.mrb[0].mxu0
        %v2549 = vadd.f32 0.0, %v2548
        %v2550 = vpop.f32.mrb[0].mxu0
        %2551 = vmatprep.mubr.f32.mxu0 0.0
        %2552 = vmatmul.mubr.f32.gmra.mrb[0].mxu0 %v1288
        %v2553 = vpop.f32.mrb[0].mxu0
        %v2554 = vadd.f32 0.0, %v2553
        %v2555 = vpop.f32.mrb[0].mxu0
        %2556 = vdwg.mxu0
        %v2557 = vld [vmem:[%s8] sm:$0xff]
        %v2558 = vld [vmem:[%s8 + $0x8] sm:$0xff]
        %v2559 = vld [vmem:[%s8 + $0x10] sm:$0xff]
        %v2560 = vld [vmem:[%s8 + $0x18] sm:$0xff]
        %v2561 = vld [vmem:[#allocation2] sm:$0xff]
        %v2562 = vld [vmem:[#allocation2 + $0x8] sm:$0xff]
        %v2563 = vld [vmem:[#allocation2 + $0x10] sm:$0xff]
        %v2564 = vld [vmem:[#allocation2 + $0x18] sm:$0xff]
        %v2565 = vld [vmem:[#allocation2 + $0x20] sm:$0xff]
        %v2566 = vld [vmem:[#allocation2 + $0x28] sm:$0xff]
        %v2567 = vld [vmem:[#allocation2 + $0x30] sm:$0xff]
        %v2568 = vld [vmem:[#allocation2 + $0x38] sm:$0xff]
        %v2569 = vld [vmem:[#allocation2 + $0x40] sm:$0xff]
        %v2570 = vld [vmem:[#allocation2 + $0x48] sm:$0xff]
        %v2571 = vld [vmem:[#allocation2 + $0x50] sm:$0xff]
        %v2572 = vld [vmem:[#allocation2 + $0x58] sm:$0xff]
        %v2573 = vld [vmem:[%s9] sm:$0xff]
        %v2574 = vld [vmem:[%s9 + $0x8] sm:$0xff]
        %v2575 = vld [vmem:[%s9 + $0x10] sm:$0xff]
        %v2576 = vld [vmem:[%s9 + $0x18] sm:$0xff]
        %v2578 = vsel %vm619, %v2561, 0
        %v2581 = vsel %vm619, %v2562, 0
        %v2584 = vsel %vm619, %v2563, 0
        %v2587 = vsel %vm619, %v2564, 0
        %v2590 = vsel %vm619, %v2565, 0
        %v2593 = vsel %vm619, %v2566, 0
        %v2596 = vsel %vm619, %v2567, 0
        %v2599 = vsel %vm619, %v2568, 0
        %v2602 = vsel %vm619, %v2569, 0
        %v2605 = vsel %vm619, %v2570, 0
        %v2608 = vsel %vm619, %v2571, 0
        %v2611 = vsel %vm619, %v2572, 0
        %2613 = vmatprep.subr.mxu0 0.0
        %2614 = vmatpush1.msra.mxu0 %v2573
        %2615 = vmatprep.subr.mxu0 0.0
        %2616 = vmatpush1.msra.mxu0 %v2574
        %2617 = vmatprep.subr.mxu0 0.0
        %2618 = vmatpush1.msra.mxu0 %v2575
        %2619 = vmatprep.subr.mxu0 0.0
        %2620 = vmatpush1.msra.mxu0 %v2576
        %2621 = vmatprep.subr.mxu0 0.0
        %2622 = vmatpush1.msra.mxu0 0.0
        %2623 = vmatprep.subr.mxu0 0.0
        %2624 = vmatpush1.msra.mxu0 0.0
        %2625 = vmatprep.subr.mxu0 0.0
        %2626 = vmatpush1.msra.mxu0 0.0
        %2627 = vmatprep.subr.mxu0 0.0
        %2628 = vmatpush1.msra.mxu0 0.0
        %2629 = vmatprep.subr.mxu0 0.0
        %2630 = vmatpush1.msra.mxu0 0.0
        %2631 = vmatprep.subr.mxu0 0.0
        %2632 = vmatpush1.msra.mxu0 0.0
        %2633 = vmatprep.subr.mxu0 0.0
        %2634 = vmatpush1.msra.mxu0 0.0
        %2635 = vmatprep.subr.mxu0 0.0
        %2636 = vmatpush1.msra.mxu0 0.0
        %2637 = vmatprep.subr.mxu0 0.0
        %2638 = vmatpush1.msra.mxu0 0.0
        %2639 = vmatprep.subr.mxu0 0.0
        %2640 = vmatpush1.msra.mxu0 0.0
        %2641 = vmatprep.subr.mxu0 0.0
        %2642 = vmatpush1.msra.mxu0 0.0
        %2643 = vmatprep.subr.mxu0 0.0
        %2644 = vmatpush1.msra.mxu0 0.0
        %2645 = vmatprep.subr.mxu0 0.0
        %2646 = vmatpush1.msra.mxu0 0.0
        %2647 = vmatprep.subr.mxu0 0.0
        %2648 = vmatpush1.msra.mxu0 0.0
        %2649 = vmatprep.subr.mxu0 0.0
        %2650 = vmatpush1.msra.mxu0 0.0
        %2651 = vmatprep.subr.mxu0 0.0
        %2652 = vmatpush1.msra.mxu0 0.0
        %2653 = vmatprep.subr.mxu0 0.0
        %2654 = vmatpush1.msra.mxu0 0.0
        %2655 = vmatprep.subr.mxu0 0.0
        %2656 = vmatpush1.msra.mxu0 0.0
        %2657 = vmatprep.subr.mxu0 0.0
        %2658 = vmatpush1.msra.mxu0 0.0
        %2659 = vmatprep.subr.mxu0 0.0
        %2660 = vmatpush1.msra.mxu0 0.0
        %2661 = vmatprep.subr.mxu0 0.0
        %2662 = vmatpush1.msra.mxu0 0.0
        %2663 = vmatprep.subr.mxu0 0.0
        %2664 = vmatpush1.msra.mxu0 0.0
        %2665 = vmatprep.subr.mxu0 0.0
        %2666 = vmatpush1.msra.mxu0 0.0
        %2667 = vmatprep.subr.mxu0 0.0
        %2668 = vmatpush1.msra.mxu0 0.0
        %2669 = vmatprep.subr.mxu0 0.0
        %2670 = vmatpush1.msra.mxu0 0.0
        %2671 = vmatprep.subr.mxu0 0.0
        %2672 = vmatpush1.msra.mxu0 0.0
        %2673 = vmatprep.subr.mxu0 0.0
        %2674 = vmatpush1.msra.mxu0 0.0
        %2675 = vmatprep.subr.mxu0 0.0
        %2676 = vmatpush1.msra.mxu0 0.0
        %2677 = vmatprep.mubr.f32.mxu0 0.0
        %2678 = vmatmul.mubr.f32.gmra.mrb[0].mxu0 %v2578
        %v2679 = vpop.f32.mrb[0].mxu0
        %v2680 = vadd.f32 0.0, %v2679
        %v2681 = vpop.f32.mrb[0].mxu0
        %2682 = vmatprep.mubr.f32.mxu0 0.0
        %2683 = vmatmul.mubr.f32.gmra.mrb[0].mxu0 %v2581
        %v2684 = vpop.f32.mrb[0].mxu0
        %v2685 = vadd.f32 0.0, %v2684
        %v2686 = vpop.f32.mrb[0].mxu0
        %2687 = vmatprep.mubr.f32.mxu0 0.0
        %2688 = vmatmul.mubr.f32.gmra.mrb[0].mxu0 %v2584
        %v2689 = vpop.f32.mrb[0].mxu0
        %v2690 = vadd.f32 0.0, %v2689
        %v2691 = vpop.f32.mrb[0].mxu0
        %2692 = vmatprep.mubr.f32.mxu0 0.0
        %2693 = vmatmul.mubr.f32.gmra.mrb[0].mxu0 %v2587
        %v2694 = vpop.f32.mrb[0].mxu0
        %v2695 = vadd.f32 0.0, %v2694
        %v2696 = vpop.f32.mrb[0].mxu0
        %2697 = vmatprep.mubr.f32.mxu0 0.0
        %2698 = vmatmul.mubr.f32.gmra.mrb[0].mxu0 %v2590
        %v2699 = vpop.f32.mrb[0].mxu0
        %v2700 = vadd.f32 0.0, %v2699
        %v2701 = vpop.f32.mrb[0].mxu0
        %2702 = vmatprep.mubr.f32.mxu0 0.0
        %2703 = vmatmul.mubr.f32.gmra.mrb[0].mxu0 %v2593
        %v2704 = vpop.f32.mrb[0].mxu0
        %v2705 = vadd.f32 0.0, %v2704
        %v2706 = vpop.f32.mrb[0].mxu0
        %2707 = vmatprep.mubr.f32.mxu0 0.0
        %2708 = vmatmul.mubr.f32.gmra.mrb[0].mxu0 %v2596
        %v2709 = vpop.f32.mrb[0].mxu0
        %v2710 = vadd.f32 0.0, %v2709
        %v2711 = vpop.f32.mrb[0].mxu0
        %2712 = vmatprep.mubr.f32.mxu0 0.0
        %2713 = vmatmul.mubr.f32.gmra.mrb[0].mxu0 %v2599
        %v2714 = vpop.f32.mrb[0].mxu0
        %v2715 = vadd.f32 0.0, %v2714
        %v2716 = vpop.f32.mrb[0].mxu0
        %2717 = vmatprep.mubr.f32.mxu0 0.0
        %2718 = vmatmul.mubr.f32.gmra.mrb[0].mxu0 %v2602
        %v2719 = vpop.f32.mrb[0].mxu0
        %v2720 = vadd.f32 0.0, %v2719
        %v2721 = vpop.f32.mrb[0].mxu0
        %2722 = vmatprep.mubr.f32.mxu0 0.0
        %2723 = vmatmul.mubr.f32.gmra.mrb[0].mxu0 %v2605
        %v2724 = vpop.f32.mrb[0].mxu0
        %v2725 = vadd.f32 0.0, %v2724
        %v2726 = vpop.f32.mrb[0].mxu0
        %2727 = vmatprep.mubr.f32.mxu0 0.0
        %2728 = vmatmul.mubr.f32.gmra.mrb[0].mxu0 %v2608
        %v2729 = vpop.f32.mrb[0].mxu0
        %v2730 = vadd.f32 0.0, %v2729
        %v2731 = vpop.f32.mrb[0].mxu0
        %2732 = vmatprep.mubr.f32.mxu0 0.0
        %2733 = vmatmul.mubr.f32.gmra.mrb[0].mxu0 %v2611
        %v2734 = vpop.f32.mrb[0].mxu0
        %v2735 = vadd.f32 0.0, %v2734
        %v2736 = vpop.f32.mrb[0].mxu0
        %2737 = vdwg.mxu0
        %v2739 = vsel %vm619, %v2499, 0
        %v2742 = vsel %vm619, %v2504, 0
        %v2745 = vsel %vm619, %v2509, 0
        %v2748 = vsel %vm619, %v2514, 0
        %v2751 = vsel %vm619, %v2519, 0
        %v2754 = vsel %vm619, %v2524, 0
        %v2757 = vsel %vm619, %v2529, 0
        %v2760 = vsel %vm619, %v2534, 0
        %v2763 = vsel %vm619, %v2539, 0
        %v2766 = vsel %vm619, %v2544, 0
        %v2769 = vsel %vm619, %v2549, 0
        %v2772 = vsel %vm619, %v2554, 0
        %2774 = vmatprep.subr.mxu0 0.0
        %2775 = vmatpush1.msra.mxu0 %v2557
        %2776 = vmatprep.subr.mxu0 0.0
        %2777 = vmatpush1.msra.mxu0 %v2558
        %2778 = vmatprep.subr.mxu0 0.0
        %2779 = vmatpush1.msra.mxu0 %v2559
        %2780 = vmatprep.subr.mxu0 0.0
        %2781 = vmatpush1.msra.mxu0 %v2560
        %2782 = vmatprep.subr.mxu0 0.0
        %2783 = vmatpush1.msra.mxu0 0.0
        %2784 = vmatprep.subr.mxu0 0.0
        %2785 = vmatpush1.msra.mxu0 0.0
        %2786 = vmatprep.subr.mxu0 0.0
        %2787 = vmatpush1.msra.mxu0 0.0
        %2788 = vmatprep.subr.mxu0 0.0
        %2789 = vmatpush1.msra.mxu0 0.0
        %2790 = vmatprep.subr.mxu0 0.0
        %2791 = vmatpush1.msra.mxu0 0.0
        %2792 = vmatprep.subr.mxu0 0.0
        %2793 = vmatpush1.msra.mxu0 0.0
        %2794 = vmatprep.subr.mxu0 0.0
        %2795 = vmatpush1.msra.mxu0 0.0
        %2796 = vmatprep.subr.mxu0 0.0
        %2797 = vmatpush1.msra.mxu0 0.0
        %2798 = vmatprep.subr.mxu0 0.0
        %2799 = vmatpush1.msra.mxu0 0.0
        %2800 = vmatprep.subr.mxu0 0.0
        %2801 = vmatpush1.msra.mxu0 0.0
        %2802 = vmatprep.subr.mxu0 0.0
        %2803 = vmatpush1.msra.mxu0 0.0
        %2804 = vmatprep.subr.mxu0 0.0
        %2805 = vmatpush1.msra.mxu0 0.0
        %2806 = vmatprep.subr.mxu0 0.0
        %2807 = vmatpush1.msra.mxu0 0.0
        %2808 = vmatprep.subr.mxu0 0.0
        %2809 = vmatpush1.msra.mxu0 0.0
        %2810 = vmatprep.subr.mxu0 0.0
        %2811 = vmatpush1.msra.mxu0 0.0
        %2812 = vmatprep.subr.mxu0 0.0
        %2813 = vmatpush1.msra.mxu0 0.0
        %2814 = vmatprep.subr.mxu0 0.0
        %2815 = vmatpush1.msra.mxu0 0.0
        %2816 = vmatprep.subr.mxu0 0.0
        %2817 = vmatpush1.msra.mxu0 0.0
        %2818 = vmatprep.subr.mxu0 0.0
        %2819 = vmatpush1.msra.mxu0 0.0
        %2820 = vmatprep.subr.mxu0 0.0
        %2821 = vmatpush1.msra.mxu0 0.0
        %2822 = vmatprep.subr.mxu0 0.0
        %2823 = vmatpush1.msra.mxu0 0.0
        %2824 = vmatprep.subr.mxu0 0.0
        %2825 = vmatpush1.msra.mxu0 0.0
        %2826 = vmatprep.subr.mxu0 0.0
        %2827 = vmatpush1.msra.mxu0 0.0
        %2828 = vmatprep.subr.mxu0 0.0
        %2829 = vmatpush1.msra.mxu0 0.0
        %2830 = vmatprep.subr.mxu0 0.0
        %2831 = vmatpush1.msra.mxu0 0.0
        %2832 = vmatprep.subr.mxu0 0.0
        %2833 = vmatpush1.msra.mxu0 0.0
        %2834 = vmatprep.subr.mxu0 0.0
        %2835 = vmatpush1.msra.mxu0 0.0
        %2836 = vmatprep.subr.mxu0 0.0
        %2837 = vmatpush1.msra.mxu0 0.0
        %2838 = vmatprep.mubr.f32.mxu0 0.0
        %2839 = vmatmul.mubr.f32.gmra.mrb[0].mxu0 %v2739
        %v2840 = vpop.f32.mrb[0].mxu0
        %v2841 = vadd.f32 %v2680, %v2840
        %v2842 = vpop.f32.mrb[0].mxu0
        %2843 = vmatprep.mubr.f32.mxu0 0.0
        %2844 = vmatmul.mubr.f32.gmra.mrb[0].mxu0 %v2742
        %v2845 = vpop.f32.mrb[0].mxu0
        %v2846 = vadd.f32 %v2685, %v2845
        %v2847 = vpop.f32.mrb[0].mxu0
        %2848 = vmatprep.mubr.f32.mxu0 0.0
        %2849 = vmatmul.mubr.f32.gmra.mrb[0].mxu0 %v2745
        %v2850 = vpop.f32.mrb[0].mxu0
        %v2851 = vadd.f32 %v2690, %v2850
        %v2852 = vpop.f32.mrb[0].mxu0
        %2853 = vmatprep.mubr.f32.mxu0 0.0
        %2854 = vmatmul.mubr.f32.gmra.mrb[0].mxu0 %v2748
        %v2855 = vpop.f32.mrb[0].mxu0
        %v2856 = vadd.f32 %v2695, %v2855
        %v2857 = vpop.f32.mrb[0].mxu0
        %2858 = vmatprep.mubr.f32.mxu0 0.0
        %2859 = vmatmul.mubr.f32.gmra.mrb[0].mxu0 %v2751
        %v2860 = vpop.f32.mrb[0].mxu0
        %v2861 = vadd.f32 %v2700, %v2860
        %v2862 = vpop.f32.mrb[0].mxu0
        %2863 = vmatprep.mubr.f32.mxu0 0.0
        %2864 = vmatmul.mubr.f32.gmra.mrb[0].mxu0 %v2754
        %v2865 = vpop.f32.mrb[0].mxu0
        %v2866 = vadd.f32 %v2705, %v2865
        %v2867 = vpop.f32.mrb[0].mxu0
        %2868 = vmatprep.mubr.f32.mxu0 0.0
        %2869 = vmatmul.mubr.f32.gmra.mrb[0].mxu0 %v2757
        %v2870 = vpop.f32.mrb[0].mxu0
        %v2871 = vadd.f32 %v2710, %v2870
        %v2872 = vpop.f32.mrb[0].mxu0
        %2873 = vmatprep.mubr.f32.mxu0 0.0
        %2874 = vmatmul.mubr.f32.gmra.mrb[0].mxu0 %v2760
        %v2875 = vpop.f32.mrb[0].mxu0
        %v2876 = vadd.f32 %v2715, %v2875
        %v2877 = vpop.f32.mrb[0].mxu0
        %2878 = vmatprep.mubr.f32.mxu0 0.0
        %2879 = vmatmul.mubr.f32.gmra.mrb[0].mxu0 %v2763
        %v2880 = vpop.f32.mrb[0].mxu0
        %v2881 = vadd.f32 %v2720, %v2880
        %v2882 = vpop.f32.mrb[0].mxu0
        %2883 = vmatprep.mubr.f32.mxu0 0.0
        %2884 = vmatmul.mubr.f32.gmra.mrb[0].mxu0 %v2766
        %v2885 = vpop.f32.mrb[0].mxu0
        %v2886 = vadd.f32 %v2725, %v2885
        %v2887 = vpop.f32.mrb[0].mxu0
        %2888 = vmatprep.mubr.f32.mxu0 0.0
        %2889 = vmatmul.mubr.f32.gmra.mrb[0].mxu0 %v2769
        %v2890 = vpop.f32.mrb[0].mxu0
        %v2891 = vadd.f32 %v2730, %v2890
        %v2892 = vpop.f32.mrb[0].mxu0
        %2893 = vmatprep.mubr.f32.mxu0 0.0
        %2894 = vmatmul.mubr.f32.gmra.mrb[0].mxu0 %v2772
        %v2895 = vpop.f32.mrb[0].mxu0
        %v2896 = vadd.f32 %v2735, %v2895
        %v2897 = vpop.f32.mrb[0].mxu0
        %2898 = vdwg.mxu0
        %v2899 = vld [vmem:[%s10] sm:$0x1]
        %v2901 = vlaneseq
        %v2902 = vshrl.u32 %v2901, 7
        %v2903 = vsub.s32 0, %v2902
        %v2904 = vrot.slane %v2899, %v2903
        %v2906 = vadd.f32 %v2841, %v2904
        %v2907 = vadd.f32 %v2846, %v2904
        %v2908 = vadd.f32 %v2851, %v2904
        %v2909 = vadd.f32 %v2856, %v2904
        %v2910 = vadd.f32 %v2861, %v2904
        %v2911 = vadd.f32 %v2866, %v2904
        %v2912 = vadd.f32 %v2871, %v2904
        %v2913 = vadd.f32 %v2876, %v2904
        %v2914 = vadd.f32 %v2881, %v2904
        %v2915 = vadd.f32 %v2886, %v2904
        %v2916 = vadd.f32 %v2891, %v2904
        %v2917 = vadd.f32 %v2896, %v2904
        %v2918 = vmax.f32 %v2906, 0.0
        %v2919 = vmax.f32 %v2907, 0.0
        %v2920 = vmax.f32 %v2908, 0.0
        %v2921 = vmax.f32 %v2909, 0.0
        %v2922 = vmax.f32 %v2910, 0.0
        %v2923 = vmax.f32 %v2911, 0.0
        %v2924 = vmax.f32 %v2912, 0.0
        %v2925 = vmax.f32 %v2913, 0.0
        %v2926 = vmax.f32 %v2914, 0.0
        %v2927 = vmax.f32 %v2915, 0.0
        %v2928 = vmax.f32 %v2916, 0.0
        %v2929 = vmax.f32 %v2917, 0.0
        %v2930 = vmul.f32 %v2918, %v2918
        %v2931 = vmul.f32 %v2919, %v2919
        %v2932 = vmul.f32 %v2920, %v2920
        %v2933 = vmul.f32 %v2921, %v2921
        %v2934 = vmul.f32 %v2922, %v2922
        %v2935 = vmul.f32 %v2923, %v2923
        %v2936 = vmul.f32 %v2924, %v2924
        %v2937 = vmul.f32 %v2925, %v2925
        %v2938 = vmul.f32 %v2926, %v2926
        %v2939 = vmul.f32 %v2927, %v2927
        %v2940 = vmul.f32 %v2928, %v2928
        %v2941 = vmul.f32 %v2929, %v2929
        %v2942 = vsel %vm619, %v2930, 0.0
        %2943 = vadd.xlane.f32.xlu0 %v2942
        %v2944 = vpop.xlane.xlu0 %2943
        %v2945 = vsel %vm619, %v2931, 0.0
        %2946 = vadd.xlane.f32.xlu0 %v2945
        %v2947 = vpop.xlane.xlu0 %2946
        %v2948 = vsel %vm619, %v2932, 0.0
        %2949 = vadd.xlane.f32.xlu0 %v2948
        %v2950 = vpop.xlane.xlu0 %2949
        %v2951 = vsel %vm619, %v2933, 0.0
        %2952 = vadd.xlane.f32.xlu0 %v2951
        %v2953 = vpop.xlane.xlu0 %2952
        %v2954 = vsel %vm619, %v2934, 0.0
        %2955 = vadd.xlane.f32.xlu0 %v2954
        %v2956 = vpop.xlane.xlu0 %2955
        %v2957 = vsel %vm619, %v2935, 0.0
        %2958 = vadd.xlane.f32.xlu0 %v2957
        %v2959 = vpop.xlane.xlu0 %2958
        %v2960 = vsel %vm619, %v2936, 0.0
        %2961 = vadd.xlane.f32.xlu0 %v2960
        %v2962 = vpop.xlane.xlu0 %2961
        %v2963 = vsel %vm619, %v2937, 0.0
        %2964 = vadd.xlane.f32.xlu0 %v2963
        %v2965 = vpop.xlane.xlu0 %2964
        %v2966 = vsel %vm619, %v2938, 0.0
        %2967 = vadd.xlane.f32.xlu0 %v2966
        %v2968 = vpop.xlane.xlu0 %2967
        %v2969 = vsel %vm619, %v2939, 0.0
        %2970 = vadd.xlane.f32.xlu0 %v2969
        %v2971 = vpop.xlane.xlu0 %2970
        %v2972 = vsel %vm619, %v2940, 0.0
        %2973 = vadd.xlane.f32.xlu0 %v2972
        %v2974 = vpop.xlane.xlu0 %2973
        %v2975 = vsel %vm619, %v2941, 0.0
        %2976 = vadd.xlane.f32.xlu0 %v2975
        %v2977 = vpop.xlane.xlu0 %2976
        %v2978 = vmax.f32 %v2944, 1e-12
        %v2979 = vmax.f32 %v2947, 1e-12
        %v2980 = vmax.f32 %v2950, 1e-12
        %v2981 = vmax.f32 %v2953, 1e-12
        %v2982 = vmax.f32 %v2956, 1e-12
        %v2983 = vmax.f32 %v2959, 1e-12
        %v2984 = vmax.f32 %v2962, 1e-12
        %v2985 = vmax.f32 %v2965, 1e-12
        %v2986 = vmax.f32 %v2968, 1e-12
        %v2987 = vmax.f32 %v2971, 1e-12
        %v2988 = vmax.f32 %v2974, 1e-12
        %v2989 = vmax.f32 %v2977, 1e-12
        %v2990 = vrsqrt.pop %v2978
        %v2991 = vrsqrt.pop %v2979
        %v2992 = vrsqrt.pop %v2980
        %v2993 = vrsqrt.pop %v2981
        %v2994 = vrsqrt.pop %v2982
        %v2995 = vrsqrt.pop %v2983
        %v2996 = vrsqrt.pop %v2984
        %v2997 = vrsqrt.pop %v2985
        %v2998 = vrsqrt.pop %v2986
        %v2999 = vrsqrt.pop %v2987
        %v3000 = vrsqrt.pop %v2988
        %v3001 = vrsqrt.pop %v2989
        %v3002 = vmul.f32 %v2918, %v2990
        %v3003 = vmul.f32 %v2919, %v2991
        %v3004 = vmul.f32 %v2920, %v2992
        %v3005 = vmul.f32 %v2921, %v2993
        %v3006 = vmul.f32 %v2922, %v2994
        %v3007 = vmul.f32 %v2923, %v2995
        %v3008 = vmul.f32 %v2924, %v2996
        %v3009 = vmul.f32 %v2925, %v2997
        %v3010 = vmul.f32 %v2926, %v2998
        %v3011 = vmul.f32 %v2927, %v2999
        %v3012 = vmul.f32 %v2928, %v3000
        %v3013 = vmul.f32 %v2929, %v3001
        %v3015 = vsel %vm619, %v3002, 0
        %v3018 = vsel %vm619, %v3003, 0
        %v3021 = vsel %vm619, %v3004, 0
        %v3024 = vsel %vm619, %v3005, 0
        %v3027 = vsel %vm619, %v3006, 0
        %v3030 = vsel %vm619, %v3007, 0
        %v3033 = vsel %vm619, %v3008, 0
        %v3036 = vsel %vm619, %v3009, 0
        %v3039 = vsel %vm619, %v3010, 0
        %v3042 = vsel %vm619, %v3011, 0
        %v3045 = vsel %vm619, %v3012, 0
        %v3048 = vsel %vm619, %v3013, 0
        %3050 = vmatprep.subr.mxu0 0.0
        %3051 = vmatpush1.xpose.msra.mxu0 %v3027
        %3052 = vmatprep.subr.mxu0 0.0
        %3053 = vmatpush1.xpose.msra.mxu0 %v3030
        %3054 = vmatprep.subr.mxu0 0.0
        %3055 = vmatpush1.xpose.msra.mxu0 %v3033
        %3056 = vmatprep.subr.mxu0 0.0
        %3057 = vmatpush1.xpose.msra.mxu0 %v3036
        %3058 = vmatprep.subr.mxu0 0.0
        %3059 = vmatpush1.xpose.msra.mxu0 %v3039
        %3060 = vmatprep.subr.mxu0 0.0
        %3061 = vmatpush1.xpose.msra.mxu0 %v3042
        %3062 = vmatprep.subr.mxu0 0.0
        %3063 = vmatpush1.xpose.msra.mxu0 %v3045
        %3064 = vmatprep.subr.mxu0 0.0
        %3065 = vmatpush1.xpose.msra.mxu0 %v3048
        %3066 = vmatprep.subr.mxu0 0.0
        %3067 = vmatpush1.xpose.msra.mxu0 0.0
        %3068 = vmatprep.subr.mxu0 0.0
        %3069 = vmatpush1.xpose.msra.mxu0 0.0
        %3070 = vmatprep.subr.mxu0 0.0
        %3071 = vmatpush1.xpose.msra.mxu0 0.0
        %3072 = vmatprep.subr.mxu0 0.0
        %3073 = vmatpush1.xpose.msra.mxu0 0.0
        %3074 = vmatprep.subr.mxu0 0.0
        %3075 = vmatpush1.xpose.msra.mxu0 0.0
        %3076 = vmatprep.subr.mxu0 0.0
        %3077 = vmatpush1.xpose.msra.mxu0 0.0
        %3078 = vmatprep.subr.mxu0 0.0
        %3079 = vmatpush1.xpose.msra.mxu0 0.0
        %3080 = vmatprep.subr.mxu0 0.0
        %3081 = vmatpush1.xpose.msra.mxu0 0.0
        %3082 = vmatprep.subr.mxu0 0.0
        %3083 = vmatpush1.xpose.msra.mxu0 0.0
        %3084 = vmatprep.subr.mxu0 0.0
        %3085 = vmatpush1.xpose.msra.mxu0 0.0
        %3086 = vmatprep.subr.mxu0 0.0
        %3087 = vmatpush1.xpose.msra.mxu0 0.0
        %3088 = vmatprep.subr.mxu0 0.0
        %3089 = vmatpush1.xpose.msra.mxu0 0.0
        %3090 = vmatprep.subr.mxu0 0.0
        %3091 = vmatpush1.xpose.msra.mxu0 0.0
        %3092 = vmatprep.subr.mxu0 0.0
        %3093 = vmatpush1.xpose.msra.mxu0 0.0
        %3094 = vmatprep.subr.mxu0 0.0
        %3095 = vmatpush1.xpose.msra.mxu0 0.0
        %3096 = vmatprep.subr.mxu0 0.0
        %3097 = vmatpush1.xpose.msra.mxu0 0.0
        %3098 = vmatprep.subr.mxu0 0.0
        %3099 = vmatpush1.xpose.msra.mxu0 0.0
        %3100 = vmatprep.subr.mxu0 0.0
        %3101 = vmatpush1.xpose.msra.mxu0 0.0
        %3102 = vmatprep.subr.mxu0 0.0
        %3103 = vmatpush1.xpose.msra.mxu0 0.0
        %3104 = vmatprep.subr.mxu0 0.0
        %3105 = vmatpush1.xpose.msra.mxu0 0.0
        %3106 = vmatprep.subr.mxu0 0.0
        %3107 = vmatpush1.xpose.msra.mxu0 0.0
        %3108 = vmatprep.subr.mxu0 0.0
        %3109 = vmatpush1.xpose.msra.mxu0 0.0
        %3110 = vmatprep.subr.mxu0 0.0
        %3111 = vmatpush1.xpose.msra.mxu0 0.0
        %3112 = vmatprep.subr.mxu0 0.0
        %3113 = vmatpush1.xpose.msra.mxu0 0.0
        %3114 = vmatprep.mubr.f32.mxu0 0.0
        %3115 = vmatmul.mubr.f32.gmra.mrb[0].mxu0 %v3015
        %v3116 = vpop.f32.mrb[0].mxu0
        %v3117 = vadd.f32 0.0, %v3116
        %v3118 = vpop.f32.mrb[0].mxu0
        %3119 = vmatprep.mubr.f32.mxu0 0.0
        %3120 = vmatmul.mubr.f32.gmra.mrb[0].mxu0 %v3018
        %v3121 = vpop.f32.mrb[0].mxu0
        %v3122 = vadd.f32 0.0, %v3121
        %v3123 = vpop.f32.mrb[0].mxu0
        %3124 = vmatprep.mubr.f32.mxu0 0.0
        %3125 = vmatmul.mubr.f32.gmra.mrb[0].mxu0 %v3021
        %v3126 = vpop.f32.mrb[0].mxu0
        %v3127 = vadd.f32 0.0, %v3126
        %v3128 = vpop.f32.mrb[0].mxu0
        %3129 = vmatprep.mubr.f32.mxu0 0.0
        %3130 = vmatmul.mubr.f32.gmra.mrb[0].mxu0 %v3024
        %v3131 = vpop.f32.mrb[0].mxu0
        %v3132 = vadd.f32 0.0, %v3131
        %v3133 = vpop.f32.mrb[0].mxu0
        %3134 = vdwg.mxu0
        %3135 = vmatprep.subr.mxu0 0.0
        %3136 = vmatpush1.xpose.msra.mxu0 %v3015
        %3137 = vmatprep.subr.mxu0 0.0
        %3138 = vmatpush1.xpose.msra.mxu0 %v3018
        %3139 = vmatprep.subr.mxu0 0.0
        %3140 = vmatpush1.xpose.msra.mxu0 %v3021
        %3141 = vmatprep.subr.mxu0 0.0
        %3142 = vmatpush1.xpose.msra.mxu0 %v3024
        %3143 = vmatprep.subr.mxu0 0.0
        %3144 = vmatpush1.xpose.msra.mxu0 0.0
        %3145 = vmatprep.subr.mxu0 0.0
        %3146 = vmatpush1.xpose.msra.mxu0 0.0
        %3147 = vmatprep.subr.mxu0 0.0
        %3148 = vmatpush1.xpose.msra.mxu0 0.0
        %3149 = vmatprep.subr.mxu0 0.0
        %3150 = vmatpush1.xpose.msra.mxu0 0.0
        %3151 = vmatprep.subr.mxu0 0.0
        %3152 = vmatpush1.xpose.msra.mxu0 0.0
        %3153 = vmatprep.subr.mxu0 0.0
        %3154 = vmatpush1.xpose.msra.mxu0 0.0
        %3155 = vmatprep.subr.mxu0 0.0
        %3156 = vmatpush1.xpose.msra.mxu0 0.0
        %3157 = vmatprep.subr.mxu0 0.0
        %3158 = vmatpush1.xpose.msra.mxu0 0.0
        %3159 = vmatprep.subr.mxu0 0.0
        %3160 = vmatpush1.xpose.msra.mxu0 0.0
        %3161 = vmatprep.subr.mxu0 0.0
        %3162 = vmatpush1.xpose.msra.mxu0 0.0
        %3163 = vmatprep.subr.mxu0 0.0
        %3164 = vmatpush1.xpose.msra.mxu0 0.0
        %3165 = vmatprep.subr.mxu0 0.0
        %3166 = vmatpush1.xpose.msra.mxu0 0.0
        %3167 = vmatprep.subr.mxu0 0.0
        %3168 = vmatpush1.xpose.msra.mxu0 0.0
        %3169 = vmatprep.subr.mxu0 0.0
        %3170 = vmatpush1.xpose.msra.mxu0 0.0
        %3171 = vmatprep.subr.mxu0 0.0
        %3172 = vmatpush1.xpose.msra.mxu0 0.0
        %3173 = vmatprep.subr.mxu0 0.0
        %3174 = vmatpush1.xpose.msra.mxu0 0.0
        %3175 = vmatprep.subr.mxu0 0.0
        %3176 = vmatpush1.xpose.msra.mxu0 0.0
        %3177 = vmatprep.subr.mxu0 0.0
        %3178 = vmatpush1.xpose.msra.mxu0 0.0
        %3179 = vmatprep.subr.mxu0 0.0
        %3180 = vmatpush1.xpose.msra.mxu0 0.0
        %3181 = vmatprep.subr.mxu0 0.0
        %3182 = vmatpush1.xpose.msra.mxu0 0.0
        %3183 = vmatprep.subr.mxu0 0.0
        %3184 = vmatpush1.xpose.msra.mxu0 0.0
        %3185 = vmatprep.subr.mxu0 0.0
        %3186 = vmatpush1.xpose.msra.mxu0 0.0
        %3187 = vmatprep.subr.mxu0 0.0
        %3188 = vmatpush1.xpose.msra.mxu0 0.0
        %3189 = vmatprep.subr.mxu0 0.0
        %3190 = vmatpush1.xpose.msra.mxu0 0.0
        %3191 = vmatprep.subr.mxu0 0.0
        %3192 = vmatpush1.xpose.msra.mxu0 0.0
        %3193 = vmatprep.subr.mxu0 0.0
        %3194 = vmatpush1.xpose.msra.mxu0 0.0
        %3195 = vmatprep.subr.mxu0 0.0
        %3196 = vmatpush1.xpose.msra.mxu0 0.0
        %3197 = vmatprep.subr.mxu0 0.0
        %3198 = vmatpush1.xpose.msra.mxu0 0.0
        %3199 = vmatprep.mubr.f32.mxu0 0.0
        %3200 = vmatmul.mubr.f32.gmra.mrb[0].mxu0 %v3027
        %v3201 = vpop.f32.mrb[0].mxu0
        %v3202 = vadd.f32 0.0, %v3201
        %v3203 = vpop.f32.mrb[0].mxu0
        %3204 = vmatprep.mubr.f32.mxu0 0.0
        %3205 = vmatmul.mubr.f32.gmra.mrb[0].mxu0 %v3030
        %v3206 = vpop.f32.mrb[0].mxu0
        %v3207 = vadd.f32 0.0, %v3206
        %v3208 = vpop.f32.mrb[0].mxu0
        %3209 = vmatprep.mubr.f32.mxu0 0.0
        %3210 = vmatmul.mubr.f32.gmra.mrb[0].mxu0 %v3033
        %v3211 = vpop.f32.mrb[0].mxu0
        %v3212 = vadd.f32 0.0, %v3211
        %v3213 = vpop.f32.mrb[0].mxu0
        %3214 = vmatprep.mubr.f32.mxu0 0.0
        %3215 = vmatmul.mubr.f32.gmra.mrb[0].mxu0 %v3036
        %v3216 = vpop.f32.mrb[0].mxu0
        %v3217 = vadd.f32 0.0, %v3216
        %v3218 = vpop.f32.mrb[0].mxu0
        %3219 = vmatprep.mubr.f32.mxu0 0.0
        %3220 = vmatmul.mubr.f32.gmra.mrb[0].mxu0 %v3039
        %v3221 = vpop.f32.mrb[0].mxu0
        %v3222 = vadd.f32 0.0, %v3221
        %v3223 = vpop.f32.mrb[0].mxu0
        %3224 = vmatprep.mubr.f32.mxu0 0.0
        %3225 = vmatmul.mubr.f32.gmra.mrb[0].mxu0 %v3042
        %v3226 = vpop.f32.mrb[0].mxu0
        %v3227 = vadd.f32 0.0, %v3226
        %v3228 = vpop.f32.mrb[0].mxu0
        %3229 = vmatprep.mubr.f32.mxu0 0.0
        %3230 = vmatmul.mubr.f32.gmra.mrb[0].mxu0 %v3045
        %v3231 = vpop.f32.mrb[0].mxu0
        %v3232 = vadd.f32 0.0, %v3231
        %v3233 = vpop.f32.mrb[0].mxu0
        %3234 = vmatprep.mubr.f32.mxu0 0.0
        %3235 = vmatmul.mubr.f32.gmra.mrb[0].mxu0 %v3048
        %v3236 = vpop.f32.mrb[0].mxu0
        %v3237 = vadd.f32 0.0, %v3236
        %v3238 = vpop.f32.mrb[0].mxu0
        %3239 = vdwg.mxu0
        %v3240 = vmul.f32 %v3117, 1.442695
        %v3241 = vpow.pop %v3240
        %v3242 = vmul.f32 %v3122, 1.442695
        %v3243 = vpow.pop %v3242
        %v3244 = vmul.f32 %v3127, 1.442695
        %v3245 = vpow.pop %v3244
        %v3246 = vmul.f32 %v3132, 1.442695
        %v3247 = vpow.pop %v3246
        %v3248 = vmul.f32 %v3241, %v594
        %v3249 = vmul.f32 %v3243, %v595
        %v3250 = vmul.f32 %v3245, %v596
        %v3251 = vmul.f32 %v3247, %v597
        %v3252 = vmul.f32 %v3202, 1.442695
        %v3253 = vpow.pop %v3252
        %v3254 = vmul.f32 %v3207, 1.442695
        %v3255 = vpow.pop %v3254
        %v3256 = vmul.f32 %v3212, 1.442695
        %v3257 = vpow.pop %v3256
        %v3258 = vmul.f32 %v3217, 1.442695
        %v3259 = vpow.pop %v3258
        %v3260 = vmul.f32 %v3222, 1.442695
        %v3261 = vpow.pop %v3260
        %v3262 = vmul.f32 %v3227, 1.442695
        %v3263 = vpow.pop %v3262
        %v3264 = vmul.f32 %v3232, 1.442695
        %v3265 = vpow.pop %v3264
        %v3266 = vmul.f32 %v3237, 1.442695
        %v3267 = vpow.pop %v3266
        %v3268 = vmul.f32 %v3253, %v598
        %v3269 = vmul.f32 %v3255, %v599
        %v3270 = vmul.f32 %v3257, %v600
        %v3271 = vmul.f32 %v3259, %v601
        %v3272 = vmul.f32 %v3261, %v602
        %v3273 = vmul.f32 %v3263, %v603
        %v3274 = vmul.f32 %v3265, %v604
        %v3275 = vmul.f32 %v3267, %v605
        %v3276 = vsel %vm954, %v3248, 0.0
        %v3277 = vsel %vm954, %v3249, 0.0
        %v3278 = vadd.f32 %v3276, %v3277
        %v3279 = vsel %vm954, %v3250, 0.0
        %v3280 = vadd.f32 %v3278, %v3279
        %v3281 = vsel %vm954, %v3251, 0.0
        %v3282 = vadd.f32 %v3280, %v3281
        %v3283 = vrot.slane %v3282, 4
        %v3284 = vadd.f32 %v3282, %v3283
        %v3285 = vrot.slane %v3284, 2
        %v3286 = vadd.f32 %v3284, %v3285
        %v3287 = vrot.slane %v3286, 1
        %v3288 = vadd.f32 %v3286, %v3287
        %v3289 = vrcp.pop %v3288
        %v3290 = vmul.f32 %v3248, %v3289
        %v3291 = vmul.f32 %v3249, %v3289
        %v3292 = vmul.f32 %v3250, %v3289
        %v3293 = vmul.f32 %v3251, %v3289
        %v3294 = vsel %vm619, %v3268, 0.0
        %v3295 = vsel %vm619, %v3269, 0.0
        %v3296 = vadd.f32 %v3294, %v3295
        %v3297 = vsel %vm619, %v3270, 0.0
        %v3298 = vadd.f32 %v3296, %v3297
        %v3299 = vsel %vm619, %v3271, 0.0
        %v3300 = vadd.f32 %v3298, %v3299
        %v3301 = vsel %vm619, %v3272, 0.0
        %v3302 = vadd.f32 %v3300, %v3301
        %v3303 = vsel %vm619, %v3273, 0.0
        %v3304 = vadd.f32 %v3302, %v3303
        %v3305 = vsel %vm619, %v3274, 0.0
        %v3306 = vadd.f32 %v3304, %v3305
        %v3307 = vsel %vm619, %v3275, 0.0
        %v3308 = vadd.f32 %v3306, %v3307
        %v3309 = vrot.slane %v3308, 4
        %v3310 = vadd.f32 %v3308, %v3309
        %v3311 = vrot.slane %v3310, 2
        %v3312 = vadd.f32 %v3310, %v3311
        %v3313 = vrot.slane %v3312, 1
        %v3314 = vadd.f32 %v3312, %v3313
        %v3315 = vrcp.pop %v3314
        %v3316 = vmul.f32 %v3268, %v3315
        %v3317 = vmul.f32 %v3269, %v3315
        %v3318 = vmul.f32 %v3270, %v3315
        %v3319 = vmul.f32 %v3271, %v3315
        %v3320 = vmul.f32 %v3272, %v3315
        %v3321 = vmul.f32 %v3273, %v3315
        %v3322 = vmul.f32 %v3274, %v3315
        %v3323 = vmul.f32 %v3275, %v3315
        %v3325 = vsel %vm954, %v3290, 0
        %v3328 = vsel %vm954, %v3291, 0
        %v3331 = vsel %vm954, %v3292, 0
        %v3334 = vsel %vm954, %v3293, 0
        %3336 = vmatprep.subr.mxu0 0.0
        %3337 = vmatpush1.msra.mxu0 %v3006
        %3338 = vmatprep.subr.mxu0 0.0
        %3339 = vmatpush1.msra.mxu0 %v3007
        %3340 = vmatprep.subr.mxu0 0.0
        %3341 = vmatpush1.msra.mxu0 %v3008
        %3342 = vmatprep.subr.mxu0 0.0
        %3343 = vmatpush1.msra.mxu0 %v3009
        %3344 = vmatprep.subr.mxu0 0.0
        %3345 = vmatpush1.msra.mxu0 %v3010
        %3346 = vmatprep.subr.mxu0 0.0
        %3347 = vmatpush1.msra.mxu0 %v3011
        %3348 = vmatprep.subr.mxu0 0.0
        %3349 = vmatpush1.msra.mxu0 %v3012
        %3350 = vmatprep.subr.mxu0 0.0
        %3351 = vmatpush1.msra.mxu0 %v3013
        %3352 = vmatprep.subr.mxu0 0.0
        %3353 = vmatpush1.msra.mxu0 0.0
        %3354 = vmatprep.subr.mxu0 0.0
        %3355 = vmatpush1.msra.mxu0 0.0
        %3356 = vmatprep.subr.mxu0 0.0
        %3357 = vmatpush1.msra.mxu0 0.0
        %3358 = vmatprep.subr.mxu0 0.0
        %3359 = vmatpush1.msra.mxu0 0.0
        %3360 = vmatprep.subr.mxu0 0.0
        %3361 = vmatpush1.msra.mxu0 0.0
        %3362 = vmatprep.subr.mxu0 0.0
        %3363 = vmatpush1.msra.mxu0 0.0
        %3364 = vmatprep.subr.mxu0 0.0
        %3365 = vmatpush1.msra.mxu0 0.0
        %3366 = vmatprep.subr.mxu0 0.0
        %3367 = vmatpush1.msra.mxu0 0.0
        %3368 = vmatprep.subr.mxu0 0.0
        %3369 = vmatpush1.msra.mxu0 0.0
        %3370 = vmatprep.subr.mxu0 0.0
        %3371 = vmatpush1.msra.mxu0 0.0
        %3372 = vmatprep.subr.mxu0 0.0
        %3373 = vmatpush1.msra.mxu0 0.0
        %3374 = vmatprep.subr.mxu0 0.0
        %3375 = vmatpush1.msra.mxu0 0.0
        %3376 = vmatprep.subr.mxu0 0.0
        %3377 = vmatpush1.msra.mxu0 0.0
        %3378 = vmatprep.subr.mxu0 0.0
        %3379 = vmatpush1.msra.mxu0 0.0
        %3380 = vmatprep.subr.mxu0 0.0
        %3381 = vmatpush1.msra.mxu0 0.0
        %3382 = vmatprep.subr.mxu0 0.0
        %3383 = vmatpush1.msra.mxu0 0.0
        %3384 = vmatprep.subr.mxu0 0.0
        %3385 = vmatpush1.msra.mxu0 0.0
        %3386 = vmatprep.subr.mxu0 0.0
        %3387 = vmatpush1.msra.mxu0 0.0
        %3388 = vmatprep.subr.mxu0 0.0
        %3389 = vmatpush1.msra.mxu0 0.0
        %3390 = vmatprep.subr.mxu0 0.0
        %3391 = vmatpush1.msra.mxu0 0.0
        %3392 = vmatprep.subr.mxu0 0.0
        %3393 = vmatpush1.msra.mxu0 0.0
        %3394 = vmatprep.subr.mxu0 0.0
        %3395 = vmatpush1.msra.mxu0 0.0
        %3396 = vmatprep.subr.mxu0 0.0
        %3397 = vmatpush1.msra.mxu0 0.0
        %3398 = vmatprep.subr.mxu0 0.0
        %3399 = vmatpush1.msra.mxu0 0.0
        %3400 = vmatprep.mubr.f32.mxu0 0.0
        %3401 = vmatmul.mubr.f32.gmra.mrb[0].mxu0 %v3325
        %v3402 = vpop.f32.mrb[0].mxu0
        %v3403 = vadd.f32 0.0, %v3402
        %v3404 = vpop.f32.mrb[0].mxu0
        %3405 = vmatprep.mubr.f32.mxu0 0.0
        %3406 = vmatmul.mubr.f32.gmra.mrb[0].mxu0 %v3328
        %v3407 = vpop.f32.mrb[0].mxu0
        %v3408 = vadd.f32 0.0, %v3407
        %v3409 = vpop.f32.mrb[0].mxu0
        %3410 = vmatprep.mubr.f32.mxu0 0.0
        %3411 = vmatmul.mubr.f32.gmra.mrb[0].mxu0 %v3331
        %v3412 = vpop.f32.mrb[0].mxu0
        %v3413 = vadd.f32 0.0, %v3412
        %v3414 = vpop.f32.mrb[0].mxu0
        %3415 = vmatprep.mubr.f32.mxu0 0.0
        %3416 = vmatmul.mubr.f32.gmra.mrb[0].mxu0 %v3334
        %v3417 = vpop.f32.mrb[0].mxu0
        %v3418 = vadd.f32 0.0, %v3417
        %v3419 = vpop.f32.mrb[0].mxu0
        %3420 = vdwg.mxu0
        %v3421 = vsub.f32 %v3002, %v3403
        %v3422 = vsub.f32 %v3003, %v3408
        %v3423 = vsub.f32 %v3004, %v3413
        %v3424 = vsub.f32 %v3005, %v3418
        %3425 = vst.msk [vmem:[#allocation2] sm:$0xff] %vm619, %v3421
        %3426 = vst.msk [vmem:[#allocation2 + $0x8] sm:$0xff] %vm619, %v3422
        %3427 = vst.msk [vmem:[#allocation2 + $0x10] sm:$0xff] %vm619, %v3423
        %3428 = vst.msk [vmem:[#allocation2 + $0x18] sm:$0xff] %vm619, %v3424
        %v3430 = vsel %vm619, %v3316, 0
        %v3433 = vsel %vm619, %v3317, 0
        %v3436 = vsel %vm619, %v3318, 0
        %v3439 = vsel %vm619, %v3319, 0
        %v3442 = vsel %vm619, %v3320, 0
        %v3445 = vsel %vm619, %v3321, 0
        %v3448 = vsel %vm619, %v3322, 0
        %v3451 = vsel %vm619, %v3323, 0
        %3453 = vmatprep.subr.mxu0 0.0
        %3454 = vmatpush1.msra.mxu0 %v3002
        %3455 = vmatprep.subr.mxu0 0.0
        %3456 = vmatpush1.msra.mxu0 %v3003
        %3457 = vmatprep.subr.mxu0 0.0
        %3458 = vmatpush1.msra.mxu0 %v3004
        %3459 = vmatprep.subr.mxu0 0.0
        %3460 = vmatpush1.msra.mxu0 %v3005
        %3461 = vmatprep.subr.mxu0 0.0
        %3462 = vmatpush1.msra.mxu0 0.0
        %3463 = vmatprep.subr.mxu0 0.0
        %3464 = vmatpush1.msra.mxu0 0.0
        %3465 = vmatprep.subr.mxu0 0.0
        %3466 = vmatpush1.msra.mxu0 0.0
        %3467 = vmatprep.subr.mxu0 0.0
        %3468 = vmatpush1.msra.mxu0 0.0
        %3469 = vmatprep.subr.mxu0 0.0
        %3470 = vmatpush1.msra.mxu0 0.0
        %3471 = vmatprep.subr.mxu0 0.0
        %3472 = vmatpush1.msra.mxu0 0.0
        %3473 = vmatprep.subr.mxu0 0.0
        %3474 = vmatpush1.msra.mxu0 0.0
        %3475 = vmatprep.subr.mxu0 0.0
        %3476 = vmatpush1.msra.mxu0 0.0
        %3477 = vmatprep.subr.mxu0 0.0
        %3478 = vmatpush1.msra.mxu0 0.0
        %3479 = vmatprep.subr.mxu0 0.0
        %3480 = vmatpush1.msra.mxu0 0.0
        %3481 = vmatprep.subr.mxu0 0.0
        %3482 = vmatpush1.msra.mxu0 0.0
        %3483 = vmatprep.subr.mxu0 0.0
        %3484 = vmatpush1.msra.mxu0 0.0
        %3485 = vmatprep.subr.mxu0 0.0
        %3486 = vmatpush1.msra.mxu0 0.0
        %3487 = vmatprep.subr.mxu0 0.0
        %3488 = vmatpush1.msra.mxu0 0.0
        %3489 = vmatprep.subr.mxu0 0.0
        %3490 = vmatpush1.msra.mxu0 0.0
        %3491 = vmatprep.subr.mxu0 0.0
        %3492 = vmatpush1.msra.mxu0 0.0
        %3493 = vmatprep.subr.mxu0 0.0
        %3494 = vmatpush1.msra.mxu0 0.0
        %3495 = vmatprep.subr.mxu0 0.0
        %3496 = vmatpush1.msra.mxu0 0.0
        %3497 = vmatprep.subr.mxu0 0.0
        %3498 = vmatpush1.msra.mxu0 0.0
        %3499 = vmatprep.subr.mxu0 0.0
        %3500 = vmatpush1.msra.mxu0 0.0
        %3501 = vmatprep.subr.mxu0 0.0
        %3502 = vmatpush1.msra.mxu0 0.0
        %3503 = vmatprep.subr.mxu0 0.0
        %3504 = vmatpush1.msra.mxu0 0.0
        %3505 = vmatprep.subr.mxu0 0.0
        %3506 = vmatpush1.msra.mxu0 0.0
        %3507 = vmatprep.subr.mxu0 0.0
        %3508 = vmatpush1.msra.mxu0 0.0
        %3509 = vmatprep.subr.mxu0 0.0
        %3510 = vmatpush1.msra.mxu0 0.0
        %3511 = vmatprep.subr.mxu0 0.0
        %3512 = vmatpush1.msra.mxu0 0.0
        %3513 = vmatprep.subr.mxu0 0.0
        %3514 = vmatpush1.msra.mxu0 0.0
        %3515 = vmatprep.subr.mxu0 0.0
        %3516 = vmatpush1.msra.mxu0 0.0
        %3517 = vmatprep.mubr.f32.mxu0 0.0
        %3518 = vmatmul.mubr.f32.gmra.mrb[0].mxu0 %v3430
        %v3519 = vpop.f32.mrb[0].mxu0
        %v3520 = vadd.f32 0.0, %v3519
        %v3521 = vpop.f32.mrb[0].mxu0
        %3522 = vmatprep.mubr.f32.mxu0 0.0
        %3523 = vmatmul.mubr.f32.gmra.mrb[0].mxu0 %v3433
        %v3524 = vpop.f32.mrb[0].mxu0
        %v3525 = vadd.f32 0.0, %v3524
        %v3526 = vpop.f32.mrb[0].mxu0
        %3527 = vmatprep.mubr.f32.mxu0 0.0
        %3528 = vmatmul.mubr.f32.gmra.mrb[0].mxu0 %v3436
        %v3529 = vpop.f32.mrb[0].mxu0
        %v3530 = vadd.f32 0.0, %v3529
        %v3531 = vpop.f32.mrb[0].mxu0
        %3532 = vmatprep.mubr.f32.mxu0 0.0
        %3533 = vmatmul.mubr.f32.gmra.mrb[0].mxu0 %v3439
        %v3534 = vpop.f32.mrb[0].mxu0
        %v3535 = vadd.f32 0.0, %v3534
        %v3536 = vpop.f32.mrb[0].mxu0
        %3537 = vmatprep.mubr.f32.mxu0 0.0
        %3538 = vmatmul.mubr.f32.gmra.mrb[0].mxu0 %v3442
        %v3539 = vpop.f32.mrb[0].mxu0
        %v3540 = vadd.f32 0.0, %v3539
        %v3541 = vpop.f32.mrb[0].mxu0
        %3542 = vmatprep.mubr.f32.mxu0 0.0
        %3543 = vmatmul.mubr.f32.gmra.mrb[0].mxu0 %v3445
        %v3544 = vpop.f32.mrb[0].mxu0
        %v3545 = vadd.f32 0.0, %v3544
        %v3546 = vpop.f32.mrb[0].mxu0
        %3547 = vmatprep.mubr.f32.mxu0 0.0
        %3548 = vmatmul.mubr.f32.gmra.mrb[0].mxu0 %v3448
        %v3549 = vpop.f32.mrb[0].mxu0
        %v3550 = vadd.f32 0.0, %v3549
        %v3551 = vpop.f32.mrb[0].mxu0
        %3552 = vmatprep.mubr.f32.mxu0 0.0
        %3553 = vmatmul.mubr.f32.gmra.mrb[0].mxu0 %v3451
        %v3554 = vpop.f32.mrb[0].mxu0
        %v3555 = vadd.f32 0.0, %v3554
        %v3556 = vpop.f32.mrb[0].mxu0
        %3557 = vdwg.mxu0
        %v3558 = vsub.f32 %v3006, %v3520
        %v3559 = vsub.f32 %v3007, %v3525
        %v3560 = vsub.f32 %v3008, %v3530
        %v3561 = vsub.f32 %v3009, %v3535
        %v3562 = vsub.f32 %v3010, %v3540
        %v3563 = vsub.f32 %v3011, %v3545
        %v3564 = vsub.f32 %v3012, %v3550
        %v3565 = vsub.f32 %v3013, %v3555
        %3566 = vst.msk [vmem:[#allocation2 + $0x20] sm:$0xff] %vm619, %v3558
        %3567 = vst.msk [vmem:[#allocation2 + $0x28] sm:$0xff] %vm619, %v3559
        %3568 = vst.msk [vmem:[#allocation2 + $0x30] sm:$0xff] %vm619, %v3560
        %3569 = vst.msk [vmem:[#allocation2 + $0x38] sm:$0xff] %vm619, %v3561
        %3570 = vst.msk [vmem:[#allocation2 + $0x40] sm:$0xff] %vm619, %v3562
        %3571 = vst.msk [vmem:[#allocation2 + $0x48] sm:$0xff] %vm619, %v3563
        %3572 = vst.msk [vmem:[#allocation2 + $0x50] sm:$0xff] %vm619, %v3564
        %3573 = vst.msk [vmem:[#allocation2 + $0x58] sm:$0xff] %vm619, %v3565
        %3574 = vmatprep.subr.mxu0 0.0
        %3575 = vmatpush1.msra.mxu0 %v2918
        %3576 = vmatprep.subr.mxu0 0.0
        %3577 = vmatpush1.msra.mxu0 %v2919
        %3578 = vmatprep.subr.mxu0 0.0
        %3579 = vmatpush1.msra.mxu0 %v2920
        %3580 = vmatprep.subr.mxu0 0.0
        %3581 = vmatpush1.msra.mxu0 %v2921
        %3582 = vmatprep.subr.mxu0 0.0
        %3583 = vmatpush1.msra.mxu0 %v2922
        %3584 = vmatprep.subr.mxu0 0.0
        %3585 = vmatpush1.msra.mxu0 %v2923
        %3586 = vmatprep.subr.mxu0 0.0
        %3587 = vmatpush1.msra.mxu0 %v2924
        %3588 = vmatprep.subr.mxu0 0.0
        %3589 = vmatpush1.msra.mxu0 %v2925
        %3590 = vmatprep.subr.mxu0 0.0
        %3591 = vmatpush1.msra.mxu0 %v2926
        %3592 = vmatprep.subr.mxu0 0.0
        %3593 = vmatpush1.msra.mxu0 %v2927
        %3594 = vmatprep.subr.mxu0 0.0
        %3595 = vmatpush1.msra.mxu0 %v2928
        %3596 = vmatprep.subr.mxu0 0.0
        %3597 = vmatpush1.msra.mxu0 %v2929
        %3598 = vmatprep.subr.mxu0 0.0
        %3599 = vmatpush1.msra.mxu0 0.0
        %3600 = vmatprep.subr.mxu0 0.0
        %3601 = vmatpush1.msra.mxu0 0.0
        %3602 = vmatprep.subr.mxu0 0.0
        %3603 = vmatpush1.msra.mxu0 0.0
        %3604 = vmatprep.subr.mxu0 0.0
        %3605 = vmatpush1.msra.mxu0 0.0
        %3606 = vmatprep.subr.mxu0 0.0
        %3607 = vmatpush1.msra.mxu0 0.0
        %3608 = vmatprep.subr.mxu0 0.0
        %3609 = vmatpush1.msra.mxu0 0.0
        %3610 = vmatprep.subr.mxu0 0.0
        %3611 = vmatpush1.msra.mxu0 0.0
        %3612 = vmatprep.subr.mxu0 0.0
        %3613 = vmatpush1.msra.mxu0 0.0
        %3614 = vmatprep.subr.mxu0 0.0
        %3615 = vmatpush1.msra.mxu0 0.0
        %3616 = vmatprep.subr.mxu0 0.0
        %3617 = vmatpush1.msra.mxu0 0.0
        %3618 = vmatprep.subr.mxu0 0.0
        %3619 = vmatpush1.msra.mxu0 0.0
        %3620 = vmatprep.subr.mxu0 0.0
        %3621 = vmatpush1.msra.mxu0 0.0
        %3622 = vmatprep.subr.mxu0 0.0
        %3623 = vmatpush1.msra.mxu0 0.0
        %3624 = vmatprep.subr.mxu0 0.0
        %3625 = vmatpush1.msra.mxu0 0.0
        %3626 = vmatprep.subr.mxu0 0.0
        %3627 = vmatpush1.msra.mxu0 0.0
        %3628 = vmatprep.subr.mxu0 0.0
        %3629 = vmatpush1.msra.mxu0 0.0
        %3630 = vmatprep.subr.mxu0 0.0
        %3631 = vmatpush1.msra.mxu0 0.0
        %3632 = vmatprep.subr.mxu0 0.0
        %3633 = vmatpush1.msra.mxu0 0.0
        %3634 = vmatprep.subr.mxu0 0.0
        %3635 = vmatpush1.msra.mxu0 0.0
        %3636 = vmatprep.subr.mxu0 0.0
        %3637 = vmatpush1.msra.mxu0 0.0
        %3638 = vmatprep.mubr.f32.mxu0 0.0
        %3639 = vmatmul.mubr.f32.gmra.mrb[0].mxu0 %v1255
        %v3640 = vpop.f32.mrb[0].mxu0
        %v3641 = vadd.f32 0.0, %v3640
        %v3642 = vpop.f32.mrb[0].mxu0
        %3643 = vmatprep.mubr.f32.mxu0 0.0
        %3644 = vmatmul.mubr.f32.gmra.mrb[0].mxu0 %v1258
        %v3645 = vpop.f32.mrb[0].mxu0
        %v3646 = vadd.f32 0.0, %v3645
        %v3647 = vpop.f32.mrb[0].mxu0
        %3648 = vmatprep.mubr.f32.mxu0 0.0
        %3649 = vmatmul.mubr.f32.gmra.mrb[0].mxu0 %v1261
        %v3650 = vpop.f32.mrb[0].mxu0
        %v3651 = vadd.f32 0.0, %v3650
        %v3652 = vpop.f32.mrb[0].mxu0
        %3653 = vmatprep.mubr.f32.mxu0 0.0
        %3654 = vmatmul.mubr.f32.gmra.mrb[0].mxu0 %v1264
        %v3655 = vpop.f32.mrb[0].mxu0
        %v3656 = vadd.f32 0.0, %v3655
        %v3657 = vpop.f32.mrb[0].mxu0
        %3658 = vmatprep.mubr.f32.mxu0 0.0
        %3659 = vmatmul.mubr.f32.gmra.mrb[0].mxu0 %v1267
        %v3660 = vpop.f32.mrb[0].mxu0
        %v3661 = vadd.f32 0.0, %v3660
        %v3662 = vpop.f32.mrb[0].mxu0
        %3663 = vmatprep.mubr.f32.mxu0 0.0
        %3664 = vmatmul.mubr.f32.gmra.mrb[0].mxu0 %v1270
        %v3665 = vpop.f32.mrb[0].mxu0
        %v3666 = vadd.f32 0.0, %v3665
        %v3667 = vpop.f32.mrb[0].mxu0
        %3668 = vmatprep.mubr.f32.mxu0 0.0
        %3669 = vmatmul.mubr.f32.gmra.mrb[0].mxu0 %v1273
        %v3670 = vpop.f32.mrb[0].mxu0
        %v3671 = vadd.f32 0.0, %v3670
        %v3672 = vpop.f32.mrb[0].mxu0
        %3673 = vmatprep.mubr.f32.mxu0 0.0
        %3674 = vmatmul.mubr.f32.gmra.mrb[0].mxu0 %v1276
        %v3675 = vpop.f32.mrb[0].mxu0
        %v3676 = vadd.f32 0.0, %v3675
        %v3677 = vpop.f32.mrb[0].mxu0
        %3678 = vmatprep.mubr.f32.mxu0 0.0
        %3679 = vmatmul.mubr.f32.gmra.mrb[0].mxu0 %v1279
        %v3680 = vpop.f32.mrb[0].mxu0
        %v3681 = vadd.f32 0.0, %v3680
        %v3682 = vpop.f32.mrb[0].mxu0
        %3683 = vmatprep.mubr.f32.mxu0 0.0
        %3684 = vmatmul.mubr.f32.gmra.mrb[0].mxu0 %v1282
        %v3685 = vpop.f32.mrb[0].mxu0
        %v3686 = vadd.f32 0.0, %v3685
        %v3687 = vpop.f32.mrb[0].mxu0
        %3688 = vmatprep.mubr.f32.mxu0 0.0
        %3689 = vmatmul.mubr.f32.gmra.mrb[0].mxu0 %v1285
        %v3690 = vpop.f32.mrb[0].mxu0
        %v3691 = vadd.f32 0.0, %v3690
        %v3692 = vpop.f32.mrb[0].mxu0
        %3693 = vmatprep.mubr.f32.mxu0 0.0
        %3694 = vmatmul.mubr.f32.gmra.mrb[0].mxu0 %v1288
        %v3695 = vpop.f32.mrb[0].mxu0
        %v3696 = vadd.f32 0.0, %v3695
        %v3697 = vpop.f32.mrb[0].mxu0
        %3698 = vdwg.mxu0
        %v3699 = vld [vmem:[%s11] sm:$0xff]
        %v3700 = vld [vmem:[%s11 + $0x8] sm:$0xff]
        %v3701 = vld [vmem:[%s11 + $0x10] sm:$0xff]
        %v3702 = vld [vmem:[%s11 + $0x18] sm:$0xff]
        %v3703 = vld [vmem:[#allocation2] sm:$0xff]
        %v3704 = vld [vmem:[#allocation2 + $0x8] sm:$0xff]
        %v3705 = vld [vmem:[#allocation2 + $0x10] sm:$0xff]
        %v3706 = vld [vmem:[#allocation2 + $0x18] sm:$0xff]
        %v3707 = vld [vmem:[#allocation2 + $0x20] sm:$0xff]
        %v3708 = vld [vmem:[#allocation2 + $0x28] sm:$0xff]
        %v3709 = vld [vmem:[#allocation2 + $0x30] sm:$0xff]
        %v3710 = vld [vmem:[#allocation2 + $0x38] sm:$0xff]
        %v3711 = vld [vmem:[#allocation2 + $0x40] sm:$0xff]
        %v3712 = vld [vmem:[#allocation2 + $0x48] sm:$0xff]
        %v3713 = vld [vmem:[#allocation2 + $0x50] sm:$0xff]
        %v3714 = vld [vmem:[#allocation2 + $0x58] sm:$0xff]
        %v3715 = vld [vmem:[#allocation3] sm:$0xff]
        %v3716 = vld [vmem:[#allocation3 + $0x8] sm:$0xff]
        %v3717 = vld [vmem:[#allocation3 + $0x10] sm:$0xff]
        %v3718 = vld [vmem:[#allocation3 + $0x18] sm:$0xff]
        %v3720 = vsel %vm619, %v3703, 0
        %v3723 = vsel %vm619, %v3704, 0
        %v3726 = vsel %vm619, %v3705, 0
        %v3729 = vsel %vm619, %v3706, 0
        %v3732 = vsel %vm619, %v3707, 0
        %v3735 = vsel %vm619, %v3708, 0
        %v3738 = vsel %vm619, %v3709, 0
        %v3741 = vsel %vm619, %v3710, 0
        %v3744 = vsel %vm619, %v3711, 0
        %v3747 = vsel %vm619, %v3712, 0
        %v3750 = vsel %vm619, %v3713, 0
        %v3753 = vsel %vm619, %v3714, 0
        %3755 = vmatprep.subr.mxu0 0.0
        %3756 = vmatpush1.msra.mxu0 %v3715
        %3757 = vmatprep.subr.mxu0 0.0
        %3758 = vmatpush1.msra.mxu0 %v3716
        %3759 = vmatprep.subr.mxu0 0.0
        %3760 = vmatpush1.msra.mxu0 %v3717
        %3761 = vmatprep.subr.mxu0 0.0
        %3762 = vmatpush1.msra.mxu0 %v3718
        %3763 = vmatprep.subr.mxu0 0.0
        %3764 = vmatpush1.msra.mxu0 0.0
        %3765 = vmatprep.subr.mxu0 0.0
        %3766 = vmatpush1.msra.mxu0 0.0
        %3767 = vmatprep.subr.mxu0 0.0
        %3768 = vmatpush1.msra.mxu0 0.0
        %3769 = vmatprep.subr.mxu0 0.0
        %3770 = vmatpush1.msra.mxu0 0.0
        %3771 = vmatprep.subr.mxu0 0.0
        %3772 = vmatpush1.msra.mxu0 0.0
        %3773 = vmatprep.subr.mxu0 0.0
        %3774 = vmatpush1.msra.mxu0 0.0
        %3775 = vmatprep.subr.mxu0 0.0
        %3776 = vmatpush1.msra.mxu0 0.0
        %3777 = vmatprep.subr.mxu0 0.0
        %3778 = vmatpush1.msra.mxu0 0.0
        %3779 = vmatprep.subr.mxu0 0.0
        %3780 = vmatpush1.msra.mxu0 0.0
        %3781 = vmatprep.subr.mxu0 0.0
        %3782 = vmatpush1.msra.mxu0 0.0
        %3783 = vmatprep.subr.mxu0 0.0
        %3784 = vmatpush1.msra.mxu0 0.0
        %3785 = vmatprep.subr.mxu0 0.0
        %3786 = vmatpush1.msra.mxu0 0.0
        %3787 = vmatprep.subr.mxu0 0.0
        %3788 = vmatpush1.msra.mxu0 0.0
        %3789 = vmatprep.subr.mxu0 0.0
        %3790 = vmatpush1.msra.mxu0 0.0
        %3791 = vmatprep.subr.mxu0 0.0
        %3792 = vmatpush1.msra.mxu0 0.0
        %3793 = vmatprep.subr.mxu0 0.0
        %3794 = vmatpush1.msra.mxu0 0.0
        %3795 = vmatprep.subr.mxu0 0.0
        %3796 = vmatpush1.msra.mxu0 0.0
        %3797 = vmatprep.subr.mxu0 0.0
        %3798 = vmatpush1.msra.mxu0 0.0
        %3799 = vmatprep.subr.mxu0 0.0
        %3800 = vmatpush1.msra.mxu0 0.0
        %3801 = vmatprep.subr.mxu0 0.0
        %3802 = vmatpush1.msra.mxu0 0.0
        %3803 = vmatprep.subr.mxu0 0.0
        %3804 = vmatpush1.msra.mxu0 0.0
        %3805 = vmatprep.subr.mxu0 0.0
        %3806 = vmatpush1.msra.mxu0 0.0
        %3807 = vmatprep.subr.mxu0 0.0
        %3808 = vmatpush1.msra.mxu0 0.0
        %3809 = vmatprep.subr.mxu0 0.0
        %3810 = vmatpush1.msra.mxu0 0.0
        %3811 = vmatprep.subr.mxu0 0.0
        %3812 = vmatpush1.msra.mxu0 0.0
        %3813 = vmatprep.subr.mxu0 0.0
        %3814 = vmatpush1.msra.mxu0 0.0
        %3815 = vmatprep.subr.mxu0 0.0
        %3816 = vmatpush1.msra.mxu0 0.0
        %3817 = vmatprep.subr.mxu0 0.0
        %3818 = vmatpush1.msra.mxu0 0.0
        %3819 = vmatprep.mubr.f32.mxu0 0.0
        %3820 = vmatmul.mubr.f32.gmra.mrb[0].mxu0 %v3720
        %v3821 = vpop.f32.mrb[0].mxu0
        %v3822 = vadd.f32 0.0, %v3821
        %v3823 = vpop.f32.mrb[0].mxu0
        %3824 = vmatprep.mubr.f32.mxu0 0.0
        %3825 = vmatmul.mubr.f32.gmra.mrb[0].mxu0 %v3723
        %v3826 = vpop.f32.mrb[0].mxu0
        %v3827 = vadd.f32 0.0, %v3826
        %v3828 = vpop.f32.mrb[0].mxu0
        %3829 = vmatprep.mubr.f32.mxu0 0.0
        %3830 = vmatmul.mubr.f32.gmra.mrb[0].mxu0 %v3726
        %v3831 = vpop.f32.mrb[0].mxu0
        %v3832 = vadd.f32 0.0, %v3831
        %v3833 = vpop.f32.mrb[0].mxu0
        %3834 = vmatprep.mubr.f32.mxu0 0.0
        %3835 = vmatmul.mubr.f32.gmra.mrb[0].mxu0 %v3729
        %v3836 = vpop.f32.mrb[0].mxu0
        %v3837 = vadd.f32 0.0, %v3836
        %v3838 = vpop.f32.mrb[0].mxu0
        %3839 = vmatprep.mubr.f32.mxu0 0.0
        %3840 = vmatmul.mubr.f32.gmra.mrb[0].mxu0 %v3732
        %v3841 = vpop.f32.mrb[0].mxu0
        %v3842 = vadd.f32 0.0, %v3841
        %v3843 = vpop.f32.mrb[0].mxu0
        %3844 = vmatprep.mubr.f32.mxu0 0.0
        %3845 = vmatmul.mubr.f32.gmra.mrb[0].mxu0 %v3735
        %v3846 = vpop.f32.mrb[0].mxu0
        %v3847 = vadd.f32 0.0, %v3846
        %v3848 = vpop.f32.mrb[0].mxu0
        %3849 = vmatprep.mubr.f32.mxu0 0.0
        %3850 = vmatmul.mubr.f32.gmra.mrb[0].mxu0 %v3738
        %v3851 = vpop.f32.mrb[0].mxu0
        %v3852 = vadd.f32 0.0, %v3851
        %v3853 = vpop.f32.mrb[0].mxu0
        %3854 = vmatprep.mubr.f32.mxu0 0.0
        %3855 = vmatmul.mubr.f32.gmra.mrb[0].mxu0 %v3741
        %v3856 = vpop.f32.mrb[0].mxu0
        %v3857 = vadd.f32 0.0, %v3856
        %v3858 = vpop.f32.mrb[0].mxu0
        %3859 = vmatprep.mubr.f32.mxu0 0.0
        %3860 = vmatmul.mubr.f32.gmra.mrb[0].mxu0 %v3744
        %v3861 = vpop.f32.mrb[0].mxu0
        %v3862 = vadd.f32 0.0, %v3861
        %v3863 = vpop.f32.mrb[0].mxu0
        %3864 = vmatprep.mubr.f32.mxu0 0.0
        %3865 = vmatmul.mubr.f32.gmra.mrb[0].mxu0 %v3747
        %v3866 = vpop.f32.mrb[0].mxu0
        %v3867 = vadd.f32 0.0, %v3866
        %v3868 = vpop.f32.mrb[0].mxu0
        %3869 = vmatprep.mubr.f32.mxu0 0.0
        %3870 = vmatmul.mubr.f32.gmra.mrb[0].mxu0 %v3750
        %v3871 = vpop.f32.mrb[0].mxu0
        %v3872 = vadd.f32 0.0, %v3871
        %v3873 = vpop.f32.mrb[0].mxu0
        %3874 = vmatprep.mubr.f32.mxu0 0.0
        %3875 = vmatmul.mubr.f32.gmra.mrb[0].mxu0 %v3753
        %v3876 = vpop.f32.mrb[0].mxu0
        %v3877 = vadd.f32 0.0, %v3876
        %v3878 = vpop.f32.mrb[0].mxu0
        %3879 = vdwg.mxu0
        %v3881 = vsel %vm619, %v3641, 0
        %v3884 = vsel %vm619, %v3646, 0
        %v3887 = vsel %vm619, %v3651, 0
        %v3890 = vsel %vm619, %v3656, 0
        %v3893 = vsel %vm619, %v3661, 0
        %v3896 = vsel %vm619, %v3666, 0
        %v3899 = vsel %vm619, %v3671, 0
        %v3902 = vsel %vm619, %v3676, 0
        %v3905 = vsel %vm619, %v3681, 0
        %v3908 = vsel %vm619, %v3686, 0
        %v3911 = vsel %vm619, %v3691, 0
        %v3914 = vsel %vm619, %v3696, 0
        %3916 = vmatprep.subr.mxu0 0.0
        %3917 = vmatpush1.msra.mxu0 %v3699
        %3918 = vmatprep.subr.mxu0 0.0
        %3919 = vmatpush1.msra.mxu0 %v3700
        %3920 = vmatprep.subr.mxu0 0.0
        %3921 = vmatpush1.msra.mxu0 %v3701
        %3922 = vmatprep.subr.mxu0 0.0
        %3923 = vmatpush1.msra.mxu0 %v3702
        %3924 = vmatprep.subr.mxu0 0.0
        %3925 = vmatpush1.msra.mxu0 0.0
        %3926 = vmatprep.subr.mxu0 0.0
        %3927 = vmatpush1.msra.mxu0 0.0
        %3928 = vmatprep.subr.mxu0 0.0
        %3929 = vmatpush1.msra.mxu0 0.0
        %3930 = vmatprep.subr.mxu0 0.0
        %3931 = vmatpush1.msra.mxu0 0.0
        %3932 = vmatprep.subr.mxu0 0.0
        %3933 = vmatpush1.msra.mxu0 0.0
        %3934 = vmatprep.subr.mxu0 0.0
        %3935 = vmatpush1.msra.mxu0 0.0
        %3936 = vmatprep.subr.mxu0 0.0
        %3937 = vmatpush1.msra.mxu0 0.0
        %3938 = vmatprep.subr.mxu0 0.0
        %3939 = vmatpush1.msra.mxu0 0.0
        %3940 = vmatprep.subr.mxu0 0.0
        %3941 = vmatpush1.msra.mxu0 0.0
        %3942 = vmatprep.subr.mxu0 0.0
        %3943 = vmatpush1.msra.mxu0 0.0
        %3944 = vmatprep.subr.mxu0 0.0
        %3945 = vmatpush1.msra.mxu0 0.0
        %3946 = vmatprep.subr.mxu0 0.0
        %3947 = vmatpush1.msra.mxu0 0.0
        %3948 = vmatprep.subr.mxu0 0.0
        %3949 = vmatpush1.msra.mxu0 0.0
        %3950 = vmatprep.subr.mxu0 0.0
        %3951 = vmatpush1.msra.mxu0 0.0
        %3952 = vmatprep.subr.mxu0 0.0
        %3953 = vmatpush1.msra.mxu0 0.0
        %3954 = vmatprep.subr.mxu0 0.0
        %3955 = vmatpush1.msra.mxu0 0.0
        %3956 = vmatprep.subr.mxu0 0.0
        %3957 = vmatpush1.msra.mxu0 0.0
        %3958 = vmatprep.subr.mxu0 0.0
        %3959 = vmatpush1.msra.mxu0 0.0
        %3960 = vmatprep.subr.mxu0 0.0
        %3961 = vmatpush1.msra.mxu0 0.0
        %3962 = vmatprep.subr.mxu0 0.0
        %3963 = vmatpush1.msra.mxu0 0.0
        %3964 = vmatprep.subr.mxu0 0.0
        %3965 = vmatpush1.msra.mxu0 0.0
        %3966 = vmatprep.subr.mxu0 0.0
        %3967 = vmatpush1.msra.mxu0 0.0
        %3968 = vmatprep.subr.mxu0 0.0
        %3969 = vmatpush1.msra.mxu0 0.0
        %3970 = vmatprep.subr.mxu0 0.0
        %3971 = vmatpush1.msra.mxu0 0.0
        %3972 = vmatprep.subr.mxu0 0.0
        %3973 = vmatpush1.msra.mxu0 0.0
        %3974 = vmatprep.subr.mxu0 0.0
        %3975 = vmatpush1.msra.mxu0 0.0
        %3976 = vmatprep.subr.mxu0 0.0
        %3977 = vmatpush1.msra.mxu0 0.0
        %3978 = vmatprep.subr.mxu0 0.0
        %3979 = vmatpush1.msra.mxu0 0.0
        %3980 = vmatprep.mubr.f32.mxu0 0.0
        %3981 = vmatmul.mubr.f32.gmra.mrb[0].mxu0 %v3881
        %v3982 = vpop.f32.mrb[0].mxu0
        %v3983 = vadd.f32 %v3822, %v3982
        %v3984 = vpop.f32.mrb[0].mxu0
        %3985 = vmatprep.mubr.f32.mxu0 0.0
        %3986 = vmatmul.mubr.f32.gmra.mrb[0].mxu0 %v3884
        %v3987 = vpop.f32.mrb[0].mxu0
        %v3988 = vadd.f32 %v3827, %v3987
        %v3989 = vpop.f32.mrb[0].mxu0
        %3990 = vmatprep.mubr.f32.mxu0 0.0
        %3991 = vmatmul.mubr.f32.gmra.mrb[0].mxu0 %v3887
        %v3992 = vpop.f32.mrb[0].mxu0
        %v3993 = vadd.f32 %v3832, %v3992
        %v3994 = vpop.f32.mrb[0].mxu0
        %3995 = vmatprep.mubr.f32.mxu0 0.0
        %3996 = vmatmul.mubr.f32.gmra.mrb[0].mxu0 %v3890
        %v3997 = vpop.f32.mrb[0].mxu0
        %v3998 = vadd.f32 %v3837, %v3997
        %v3999 = vpop.f32.mrb[0].mxu0
        %4000 = vmatprep.mubr.f32.mxu0 0.0
        %4001 = vmatmul.mubr.f32.gmra.mrb[0].mxu0 %v3893
        %v4002 = vpop.f32.mrb[0].mxu0
        %v4003 = vadd.f32 %v3842, %v4002
        %v4004 = vpop.f32.mrb[0].mxu0
        %4005 = vmatprep.mubr.f32.mxu0 0.0
        %4006 = vmatmul.mubr.f32.gmra.mrb[0].mxu0 %v3896
        %v4007 = vpop.f32.mrb[0].mxu0
        %v4008 = vadd.f32 %v3847, %v4007
        %v4009 = vpop.f32.mrb[0].mxu0
        %4010 = vmatprep.mubr.f32.mxu0 0.0
        %4011 = vmatmul.mubr.f32.gmra.mrb[0].mxu0 %v3899
        %v4012 = vpop.f32.mrb[0].mxu0
        %v4013 = vadd.f32 %v3852, %v4012
        %v4014 = vpop.f32.mrb[0].mxu0
        %4015 = vmatprep.mubr.f32.mxu0 0.0
        %4016 = vmatmul.mubr.f32.gmra.mrb[0].mxu0 %v3902
        %v4017 = vpop.f32.mrb[0].mxu0
        %v4018 = vadd.f32 %v3857, %v4017
        %v4019 = vpop.f32.mrb[0].mxu0
        %4020 = vmatprep.mubr.f32.mxu0 0.0
        %4021 = vmatmul.mubr.f32.gmra.mrb[0].mxu0 %v3905
        %v4022 = vpop.f32.mrb[0].mxu0
        %v4023 = vadd.f32 %v3862, %v4022
        %v4024 = vpop.f32.mrb[0].mxu0
        %4025 = vmatprep.mubr.f32.mxu0 0.0
        %4026 = vmatmul.mubr.f32.gmra.mrb[0].mxu0 %v3908
        %v4027 = vpop.f32.mrb[0].mxu0
        %v4028 = vadd.f32 %v3867, %v4027
        %v4029 = vpop.f32.mrb[0].mxu0
        %4030 = vmatprep.mubr.f32.mxu0 0.0
        %4031 = vmatmul.mubr.f32.gmra.mrb[0].mxu0 %v3911
        %v4032 = vpop.f32.mrb[0].mxu0
        %v4033 = vadd.f32 %v3872, %v4032
        %v4034 = vpop.f32.mrb[0].mxu0
        %4035 = vmatprep.mubr.f32.mxu0 0.0
        %4036 = vmatmul.mubr.f32.gmra.mrb[0].mxu0 %v3914
        %v4037 = vpop.f32.mrb[0].mxu0
        %v4038 = vadd.f32 %v3877, %v4037
        %v4039 = vpop.f32.mrb[0].mxu0
        %4040 = vdwg.mxu0
        %v4041 = vld [vmem:[%s13] sm:$0x1]
        %v4043 = vlaneseq
        %v4044 = vshrl.u32 %v4043, 7
        %v4045 = vsub.s32 0, %v4044
        %v4046 = vrot.slane %v4041, %v4045
        %v4048 = vadd.f32 %v3983, %v4046
        %v4049 = vadd.f32 %v3988, %v4046
        %v4050 = vadd.f32 %v3993, %v4046
        %v4051 = vadd.f32 %v3998, %v4046
        %v4052 = vadd.f32 %v4003, %v4046
        %v4053 = vadd.f32 %v4008, %v4046
        %v4054 = vadd.f32 %v4013, %v4046
        %v4055 = vadd.f32 %v4018, %v4046
        %v4056 = vadd.f32 %v4023, %v4046
        %v4057 = vadd.f32 %v4028, %v4046
        %v4058 = vadd.f32 %v4033, %v4046
        %v4059 = vadd.f32 %v4038, %v4046
        %v4060 = vmax.f32 %v4048, 0.0
        %v4061 = vmax.f32 %v4049, 0.0
        %v4062 = vmax.f32 %v4050, 0.0
        %v4063 = vmax.f32 %v4051, 0.0
        %v4064 = vmax.f32 %v4052, 0.0
        %v4065 = vmax.f32 %v4053, 0.0
        %v4066 = vmax.f32 %v4054, 0.0
        %v4067 = vmax.f32 %v4055, 0.0
        %v4068 = vmax.f32 %v4056, 0.0
        %v4069 = vmax.f32 %v4057, 0.0
        %v4070 = vmax.f32 %v4058, 0.0
        %v4071 = vmax.f32 %v4059, 0.0
        %v4073 = vsel %vm1253, %v606, 0
        %4075 = vmatprep.subr.mxu0 0.0
        %4076 = vmatpush1.msra.mxu0 %v4060
        %4077 = vmatprep.subr.mxu0 0.0
        %4078 = vmatpush1.msra.mxu0 %v4061
        %4079 = vmatprep.subr.mxu0 0.0
        %4080 = vmatpush1.msra.mxu0 %v4062
        %4081 = vmatprep.subr.mxu0 0.0
        %4082 = vmatpush1.msra.mxu0 %v4063
        %4083 = vmatprep.subr.mxu0 0.0
        %4084 = vmatpush1.msra.mxu0 %v4064
        %4085 = vmatprep.subr.mxu0 0.0
        %4086 = vmatpush1.msra.mxu0 %v4065
        %4087 = vmatprep.subr.mxu0 0.0
        %4088 = vmatpush1.msra.mxu0 %v4066
        %4089 = vmatprep.subr.mxu0 0.0
        %4090 = vmatpush1.msra.mxu0 %v4067
        %4091 = vmatprep.subr.mxu0 0.0
        %4092 = vmatpush1.msra.mxu0 %v4068
        %4093 = vmatprep.subr.mxu0 0.0
        %4094 = vmatpush1.msra.mxu0 %v4069
        %4095 = vmatprep.subr.mxu0 0.0
        %4096 = vmatpush1.msra.mxu0 %v4070
        %4097 = vmatprep.subr.mxu0 0.0
        %4098 = vmatpush1.msra.mxu0 %v4071
        %4099 = vmatprep.subr.mxu0 0.0
        %4100 = vmatpush1.msra.mxu0 0.0
        %4101 = vmatprep.subr.mxu0 0.0
        %4102 = vmatpush1.msra.mxu0 0.0
        %4103 = vmatprep.subr.mxu0 0.0
        %4104 = vmatpush1.msra.mxu0 0.0
        %4105 = vmatprep.subr.mxu0 0.0
        %4106 = vmatpush1.msra.mxu0 0.0
        %4107 = vmatprep.subr.mxu0 0.0
        %4108 = vmatpush1.msra.mxu0 0.0
        %4109 = vmatprep.subr.mxu0 0.0
        %4110 = vmatpush1.msra.mxu0 0.0
        %4111 = vmatprep.subr.mxu0 0.0
        %4112 = vmatpush1.msra.mxu0 0.0
        %4113 = vmatprep.subr.mxu0 0.0
        %4114 = vmatpush1.msra.mxu0 0.0
        %4115 = vmatprep.subr.mxu0 0.0
        %4116 = vmatpush1.msra.mxu0 0.0
        %4117 = vmatprep.subr.mxu0 0.0
        %4118 = vmatpush1.msra.mxu0 0.0
        %4119 = vmatprep.subr.mxu0 0.0
        %4120 = vmatpush1.msra.mxu0 0.0
        %4121 = vmatprep.subr.mxu0 0.0
        %4122 = vmatpush1.msra.mxu0 0.0
        %4123 = vmatprep.subr.mxu0 0.0
        %4124 = vmatpush1.msra.mxu0 0.0
        %4125 = vmatprep.subr.mxu0 0.0
        %4126 = vmatpush1.msra.mxu0 0.0
        %4127 = vmatprep.subr.mxu0 0.0
        %4128 = vmatpush1.msra.mxu0 0.0
        %4129 = vmatprep.subr.mxu0 0.0
        %4130 = vmatpush1.msra.mxu0 0.0
        %4131 = vmatprep.subr.mxu0 0.0
        %4132 = vmatpush1.msra.mxu0 0.0
        %4133 = vmatprep.subr.mxu0 0.0
        %4134 = vmatpush1.msra.mxu0 0.0
        %4135 = vmatprep.subr.mxu0 0.0
        %4136 = vmatpush1.msra.mxu0 0.0
        %4137 = vmatprep.subr.mxu0 0.0
        %4138 = vmatpush1.msra.mxu0 0.0
        %4139 = vmatprep.mubr.f32.mxu0 0.0
        %4140 = vmatmul.mubr.f32.gmra.mrb[0].mxu0 %v4073
        %v4141 = vpop.f32.mrb[0].mxu0
        %v4142 = vadd.f32 0.0, %v4141
        %v4143 = vpop.f32.mrb[0].mxu0
        %4144 = vdwg.mxu0
        %v4145 = vld [vmem:[#allocation5] sm:$0xff]
        %v4146 = vld [vmem:[#allocation5 + $0x8] sm:$0xff]
        %v4147 = vld [vmem:[#allocation5 + $0x10] sm:$0xff]
        %v4148 = vld [vmem:[#allocation5 + $0x18] sm:$0xff]
        %v4150 = vsel %vm619, %v4142, 0
        %4152 = vmatprep.subr.mxu0 0.0
        %4153 = vmatpush1.msra.mxu0 %v4145
        %4154 = vmatprep.subr.mxu0 0.0
        %4155 = vmatpush1.msra.mxu0 %v4146
        %4156 = vmatprep.subr.mxu0 0.0
        %4157 = vmatpush1.msra.mxu0 %v4147
        %4158 = vmatprep.subr.mxu0 0.0
        %4159 = vmatpush1.msra.mxu0 %v4148
        %4160 = vmatprep.subr.mxu0 0.0
        %4161 = vmatpush1.msra.mxu0 0.0
        %4162 = vmatprep.subr.mxu0 0.0
        %4163 = vmatpush1.msra.mxu0 0.0
        %4164 = vmatprep.subr.mxu0 0.0
        %4165 = vmatpush1.msra.mxu0 0.0
        %4166 = vmatprep.subr.mxu0 0.0
        %4167 = vmatpush1.msra.mxu0 0.0
        %4168 = vmatprep.subr.mxu0 0.0
        %4169 = vmatpush1.msra.mxu0 0.0
        %4170 = vmatprep.subr.mxu0 0.0
        %4171 = vmatpush1.msra.mxu0 0.0
        %4172 = vmatprep.subr.mxu0 0.0
        %4173 = vmatpush1.msra.mxu0 0.0
        %4174 = vmatprep.subr.mxu0 0.0
        %4175 = vmatpush1.msra.mxu0 0.0
        %4176 = vmatprep.subr.mxu0 0.0
        %4177 = vmatpush1.msra.mxu0 0.0
        %4178 = vmatprep.subr.mxu0 0.0
        %4179 = vmatpush1.msra.mxu0 0.0
        %4180 = vmatprep.subr.mxu0 0.0
        %4181 = vmatpush1.msra.mxu0 0.0
        %4182 = vmatprep.subr.mxu0 0.0
        %4183 = vmatpush1.msra.mxu0 0.0
        %4184 = vmatprep.subr.mxu0 0.0
        %4185 = vmatpush1.msra.mxu0 0.0
        %4186 = vmatprep.subr.mxu0 0.0
        %4187 = vmatpush1.msra.mxu0 0.0
        %4188 = vmatprep.subr.mxu0 0.0
        %4189 = vmatpush1.msra.mxu0 0.0
        %4190 = vmatprep.subr.mxu0 0.0
        %4191 = vmatpush1.msra.mxu0 0.0
        %4192 = vmatprep.subr.mxu0 0.0
        %4193 = vmatpush1.msra.mxu0 0.0
        %4194 = vmatprep.subr.mxu0 0.0
        %4195 = vmatpush1.msra.mxu0 0.0
        %4196 = vmatprep.subr.mxu0 0.0
        %4197 = vmatpush1.msra.mxu0 0.0
        %4198 = vmatprep.subr.mxu0 0.0
        %4199 = vmatpush1.msra.mxu0 0.0
        %4200 = vmatprep.subr.mxu0 0.0
        %4201 = vmatpush1.msra.mxu0 0.0
        %4202 = vmatprep.subr.mxu0 0.0
        %4203 = vmatpush1.msra.mxu0 0.0
        %4204 = vmatprep.subr.mxu0 0.0
        %4205 = vmatpush1.msra.mxu0 0.0
        %4206 = vmatprep.subr.mxu0 0.0
        %4207 = vmatpush1.msra.mxu0 0.0
        %4208 = vmatprep.subr.mxu0 0.0
        %4209 = vmatpush1.msra.mxu0 0.0
        %4210 = vmatprep.subr.mxu0 0.0
        %4211 = vmatpush1.msra.mxu0 0.0
        %4212 = vmatprep.subr.mxu0 0.0
        %4213 = vmatpush1.msra.mxu0 0.0
        %4214 = vmatprep.subr.mxu0 0.0
        %4215 = vmatpush1.msra.mxu0 0.0
        %4216 = vmatprep.mubr.f32.mxu0 0.0
        %4217 = vmatmul.mubr.f32.gmra.mrb[0].mxu0 %v4150
        %v4218 = vpop.f32.mrb[0].mxu0
        %v4219 = vadd.f32 0.0, %v4218
        %v4220 = vpop.f32.mrb[0].mxu0
        %4221 = vdwg.mxu0
        %v4222 = vtanh.pop %v4219
        %v4223 = vld [vmem:[%s15] sm:$0xff]
        %v4224 = vld [vmem:[%s15 + $0x8] sm:$0xff]
        %v4225 = vld [vmem:[%s15 + $0x10] sm:$0xff]
        %v4226 = vld [vmem:[%s15 + $0x18] sm:$0xff]
        %v4228 = vsel %vm619, %v4222, 0
        %4230 = vmatprep.subr.mxu0 0.0
        %4231 = vmatpush1.msra.mxu0 %v4223
        %4232 = vmatprep.subr.mxu0 0.0
        %4233 = vmatpush1.msra.mxu0 %v4224
        %4234 = vmatprep.subr.mxu0 0.0
        %4235 = vmatpush1.msra.mxu0 %v4225
        %4236 = vmatprep.subr.mxu0 0.0
        %4237 = vmatpush1.msra.mxu0 %v4226
        %4238 = vmatprep.subr.mxu0 0.0
        %4239 = vmatpush1.msra.mxu0 0.0
        %4240 = vmatprep.subr.mxu0 0.0
        %4241 = vmatpush1.msra.mxu0 0.0
        %4242 = vmatprep.subr.mxu0 0.0
        %4243 = vmatpush1.msra.mxu0 0.0
        %4244 = vmatprep.subr.mxu0 0.0
        %4245 = vmatpush1.msra.mxu0 0.0
        %4246 = vmatprep.subr.mxu0 0.0
        %4247 = vmatpush1.msra.mxu0 0.0
        %4248 = vmatprep.subr.mxu0 0.0
        %4249 = vmatpush1.msra.mxu0 0.0
        %4250 = vmatprep.subr.mxu0 0.0
        %4251 = vmatpush1.msra.mxu0 0.0
        %4252 = vmatprep.subr.mxu0 0.0
        %4253 = vmatpush1.msra.mxu0 0.0
        %4254 = vmatprep.subr.mxu0 0.0
        %4255 = vmatpush1.msra.mxu0 0.0
        %4256 = vmatprep.subr.mxu0 0.0
        %4257 = vmatpush1.msra.mxu0 0.0
        %4258 = vmatprep.subr.mxu0 0.0
        %4259 = vmatpush1.msra.mxu0 0.0
        %4260 = vmatprep.subr.mxu0 0.0
        %4261 = vmatpush1.msra.mxu0 0.0
        %4262 = vmatprep.subr.mxu0 0.0
        %4263 = vmatpush1.msra.mxu0 0.0
        %4264 = vmatprep.subr.mxu0 0.0
        %4265 = vmatpush1.msra.mxu0 0.0
        %4266 = vmatprep.subr.mxu0 0.0
        %4267 = vmatpush1.msra.mxu0 0.0
        %4268 = vmatprep.subr.mxu0 0.0
        %4269 = vmatpush1.msra.mxu0 0.0
        %4270 = vmatprep.subr.mxu0 0.0
        %4271 = vmatpush1.msra.mxu0 0.0
        %4272 = vmatprep.subr.mxu0 0.0
        %4273 = vmatpush1.msra.mxu0 0.0
        %4274 = vmatprep.subr.mxu0 0.0
        %4275 = vmatpush1.msra.mxu0 0.0
        %4276 = vmatprep.subr.mxu0 0.0
        %4277 = vmatpush1.msra.mxu0 0.0
        %4278 = vmatprep.subr.mxu0 0.0
        %4279 = vmatpush1.msra.mxu0 0.0
        %4280 = vmatprep.subr.mxu0 0.0
        %4281 = vmatpush1.msra.mxu0 0.0
        %4282 = vmatprep.subr.mxu0 0.0
        %4283 = vmatpush1.msra.mxu0 0.0
        %4284 = vmatprep.subr.mxu0 0.0
        %4285 = vmatpush1.msra.mxu0 0.0
        %4286 = vmatprep.subr.mxu0 0.0
        %4287 = vmatpush1.msra.mxu0 0.0
        %4288 = vmatprep.subr.mxu0 0.0
        %4289 = vmatpush1.msra.mxu0 0.0
        %4290 = vmatprep.subr.mxu0 0.0
        %4291 = vmatpush1.msra.mxu0 0.0
        %4292 = vmatprep.subr.mxu0 0.0
        %4293 = vmatpush1.msra.mxu0 0.0
        %4294 = vmatprep.mubr.f32.mxu0 0.0
        %4295 = vmatmul.mubr.f32.gmra.mrb[0].mxu0 %v4228
        %v4296 = vpop.f32.mrb[0].mxu0
        %v4297 = vadd.f32 0.0, %v4296
        %v4298 = vpop.f32.mrb[0].mxu0
        %4299 = vdwg.mxu0
        %vm4300 = vcmask 3072
        %4301 = vst.msk [vmem:[%s569] sm:$0xf] %vm4300, %v4297
        %p4302 = scmp.lt.s32.totalorder %s29, 1
        %s4303 = scalar_select %p4302, %s29, 1
        %s4304 = smul.addr %s4303, 4
        %s4305 = scalar_lea.vmem %s16, %s4304
        // Predicated region
        $region93: #{tpu_custom_call.1} parent=83 // pred_check
          %p4306 = pneg %p393
        $region94: #{tpu_custom_call.1} parent=83 // pred_check_branch
          %4308 = sbr.rel (%p4306) target = $region96
        $region95: #{tpu_custom_call.1} parent=83 // pred_region
          _
        $region96: #{tpu_custom_call.1} parent=83 // pred_fallthru
          _
      $region84: #{tpu_custom_call.1} parent=5 // pred_fallthru
        _
      %p4309 = scmp.le.s32.totalorder 2, %s24
      // Predicated region
      $region97: #{tpu_custom_call.1} parent=5 // pred_check
        %p4310 = pneg %p4309
      $region98: #{tpu_custom_call.1} parent=5 // pred_check_branch
        %4312 = sbr.rel (%p4310) target = $region100
      $region99: #{tpu_custom_call.1} parent=5 // pred_region
        %s4313 = ssub.s32 %s24, 2
        // Predicated region
        $region101: #{tpu_custom_call.1} parent=99 // pred_check
          %p4314 = pneg %p399
        $region102: #{tpu_custom_call.1} parent=99 // pred_check_branch
          %4316 = sbr.rel (%p4314) target = $region104
        $region103: #{tpu_custom_call.1} parent=99 // pred_region
          %p4317 = scmp.lt.s32.totalorder %s30, 1
          %s4318 = scalar_select %p4317, %s30, 1
          %s4319 = smul.addr %s4318, 4
          %s4320 = scalar_lea.vmem %s16, %s4319
        $region104: #{tpu_custom_call.1} parent=99 // pred_fallthru
          _
      $region100: #{tpu_custom_call.1} parent=5 // pred_fallthru
        _
    $region6: #{tpu_custom_call.1} parent=1 // loop_footer
      %s28 = sadd.s32 1, %s24
    $region7: #{tpu_custom_call.1} parent=1 // loop_footer_branch
      %23 = sbr.rel target = $region3
    $region8: #{tpu_custom_call.1} parent=1 // loop_exit
      _
    %4321 = vsyncpa [#allocation4], 1
    %s4322 = scalar_lea.sflag [#allocation4], 1
    %4323 = vsyncpa %s4322, 1
    %4324 = vsyncpa [#allocation6], 1

</llo_original>
